<compile_context>
chip_gen: v7x
topology: tpu7x:2x2x1
jax: 0.10.0
libtpu: 0.0.40
codegen_flags: <defaults>
</compile_context>

<pallas_src>
import jax
import jax.numpy as jnp
from jax.experimental import pallas as pl
from jax.experimental.pallas import tpu as pltpu

CIN = 3            # input channels per branch (RGB-like, as in the module)
FEAT = 16          # backbone output channels == feat_dim per branch
HIDDEN = 256       # fc hidden width (matches nn.Linear(feat_dim*2, 256))
NUM_CLASSES = 2
KH = KW = 3        # conv kernel
K_RAW = KH * KW * 2 * CIN      # 54 : fused im2col reduction dim (both branches)
K_PAD = 64                     # pad K to a multiple of 32 for cleaner layout


def dual_branch_kernel(svd_ref, ent_ref, wc_ref, bc_ref,
                       w1_ref, b1_ref, w2_ref, b2_ref,
                       out_ref, xpad_ref, col_ref):
    nb, H, W, cin = svd_ref.shape
    c2 = 2 * cin
    M = nb * H * W

    # ---- halo pad (pad=1) + channel-concat both branches into VMEM scratch ----
    # Zero every step so the kernel stays correct under megacore grid sharding.
    xpad_ref[...] = jnp.zeros_like(xpad_ref)
    xpad_ref[:, 1:H + 1, 1:W + 1, 0:cin] = svd_ref[...]
    xpad_ref[:, 1:H + 1, 1:W + 1, cin:c2] = ent_ref[...]

    # ---- im2col: 9 shifted taps packed into one (M, K_PAD) slab ----
    col_ref[...] = jnp.zeros_like(col_ref)          # keeps K-pad columns zero
    for kh in range(KH):
        for kw in range(KW):
            t = kh * KW + kw
            tap = xpad_ref[:, kh:kh + H, kw:kw + W, :]      # (nb, H, W, 2*cin)
            col_ref[:, t * c2:(t + 1) * c2] = tap.reshape(M, c2)

    # ---- both branches' conv in ONE MXU matmul (block-diagonal weight) ----
    acc = jnp.dot(col_ref[...].astype(jnp.bfloat16), wc_ref[...],
                  preferred_element_type=jnp.float32)        # (M, 2*FEAT) f32
    acc = jnp.maximum(acc + bc_ref[...], 0.0)                # bias + ReLU (f32 VPU)
    # global average pool -> (nb, 2*FEAT) == concat(svd_feat, ent_feat)
    feat = acc.reshape(nb, H * W, acc.shape[-1]).mean(axis=1)
    # backbone_drop is nn.Identity (dropout_backbone=0.0).

    # ---- fc head: Linear -> ReLU -> Dropout(eval: identity) -> Linear ----
    h = jnp.dot(feat.astype(jnp.bfloat16), w1_ref[...],
                preferred_element_type=jnp.float32) + b1_ref[...]
    h = jnp.maximum(h, 0.0)
    # TODO(synk): training-mode Dropout(0.5) (pltpu.prng_* masking) not implemented.
    out_ref[...] = jnp.dot(h.astype(jnp.bfloat16), w2_ref[...],
                           preferred_element_type=jnp.float32) + b2_ref[...]


def _default_block_n(n, h, w):
    """Pick a batch tile that stays well inside scoped VMEM on all chips (v7x=64MiB)."""
    LANE = 128   # channel-minor blocks get lane-padded to 128; be conservative
    per_sample = 4 * LANE * (4 * h * w            # 2 inputs x 2 pipeline buffers
                             + (h + 2) * (w + 2)  # padded-input scratch
                             + h * w)             # im2col scratch
    budget = 12 * 1024 * 1024
    nb = max(1, budget // max(per_sample, 1))
    if nb >= n:
        return n
    return max(1, (nb // 8) * 8) if nb >= 8 else nb


def dual_branch_forward(svd_img, ent_img, params, *, data_format="NHWC",
                        block_n=None):
    """svd_img / ent_img: (N, H, W, 3) NHWC float32 (pass data_format="NCHW" for
    PyTorch-layout inputs; that adds one transpose copy outside the kernel)."""
    if data_format == "NCHW":
        svd_img = jnp.transpose(svd_img, (0, 2, 3, 1))
        ent_img = jnp.transpose(ent_img, (0, 2, 3, 1))
    svd_img = svd_img.astype(jnp.float32)
    ent_img = ent_img.astype(jnp.float32)
    assert svd_img.shape == ent_img.shape and svd_img.shape[-1] == CIN
    N, H, W, _ = svd_img.shape

    # Pack the two branch conv weights into one block-diagonal im2col weight:
    # rows = (kh, kw, [svd c0..2 | ent c0..2]); cols = [svd FEAT | ent FEAT].
    w_pair = jnp.zeros((KH, KW, 2 * CIN, 2 * FEAT), jnp.float32)
    w_pair = w_pair.at[:, :, :CIN, :FEAT].set(params["w_svd"])
    w_pair = w_pair.at[:, :, CIN:, FEAT:].set(params["w_ent"])
    wc = w_pair.reshape(K_RAW, 2 * FEAT)
    wc = jnp.pad(wc, ((0, K_PAD - K_RAW), (0, 0))).astype(jnp.bfloat16)
    bc = jnp.concatenate([params["b_svd"], params["b_ent"]], axis=1)   # (1, 32) f32
    w1 = params["w1"].astype(jnp.bfloat16)
    w2 = params["w2"].astype(jnp.bfloat16)
    b1, b2 = params["b1"], params["b2"]

    nb = int(block_n) if block_n is not None else _default_block_n(N, H, W)
    grid = (pl.cdiv(N, nb),)

    img_spec = pl.BlockSpec((nb, H, W, CIN), lambda i: (i, 0, 0, 0))
    def const2d(shape):
        return pl.BlockSpec(shape, lambda i: (0, 0))

    grid_spec = pltpu.PrefetchScalarGridSpec(
        num_scalar_prefetch=0,
        grid=grid,
        in_specs=[img_spec, img_spec,
                  const2d((K_PAD, 2 * FEAT)), const2d((1, 2 * FEAT)),
                  const2d((2 * FEAT, HIDDEN)), const2d((1, HIDDEN)),
                  const2d((HIDDEN, NUM_CLASSES)), const2d((1, NUM_CLASSES))],
        out_specs=pl.BlockSpec((nb, NUM_CLASSES), lambda i: (i, 0)),
        scratch_shapes=[pltpu.VMEM((nb, H + 2, W + 2, 2 * CIN), jnp.float32),
                        pltpu.VMEM((nb * H * W, K_PAD), jnp.float32)],
    )

    return pl.pallas_call(
        dual_branch_kernel,
        out_shape=jax.ShapeDtypeStruct((N, NUM_CLASSES), jnp.float32),
        grid_spec=grid_spec,
        compiler_params=pltpu.CompilerParams(
            dimension_semantics=("parallel",),        # v7x: shard batch over 2 TCs
            vmem_limit_bytes=32 * 1024 * 1024),       # safe on v5e/v6e/v7x
    )(svd_img, ent_img, wc, bc, w1, b1, w2, b2)


def init_params(key):
    # NOTE: conv weight layout is (KH, KW, Cin, Cout); transposing would be
    # required to load real PyTorch (Cout, Cin, KH, KW) Conv2d weights.
    ks = jax.random.split(key, 6)
    scale = 0.1
    return {
        "w_svd": scale * jax.random.normal(ks[0], (KH, KW, CIN, FEAT), jnp.float32),
        "b_svd": jnp.zeros((1, FEAT), jnp.float32),
        "w_ent": scale * jax.random.normal(ks[1], (KH, KW, CIN, FEAT), jnp.float32),
        "b_ent": jnp.zeros((1, FEAT), jnp.float32),
        "w1":    scale * jax.random.normal(ks[2], (2 * FEAT, HIDDEN), jnp.float32),
        "b1":    0.01 * jax.random.normal(ks[3], (1, HIDDEN), jnp.float32),
        "w2":    scale * jax.random.normal(ks[4], (HIDDEN, NUM_CLASSES), jnp.float32),
        "b2":    0.01 * jax.random.normal(ks[5], (1, NUM_CLASSES), jnp.float32),
    }


if __name__ == "__main__":
    key = jax.random.PRNGKey(0)
    k_params, k_svd, k_ent = jax.random.split(key, 3)

    params = init_params(k_params)
    # Small NHWC (channels-last) 3-channel images, consistent with the module's forward.
    svd_img = jax.random.normal(k_svd, (2, 16, 16, 3), jnp.float32)
    ent_img = jax.random.normal(k_ent, (2, 16, 16, 3), jnp.float32)

    out = dual_branch_forward(svd_img, ent_img, params)
    out = jax.block_until_ready(out)
    assert out.shape == (2, NUM_CLASSES), out.shape
    print("KERNEL_OK")
</pallas_src>

<mosaic_0001>
module attributes {stable_mosaic.version = 11 : i64} {
  func.func @dual_branch_kernel(%arg0: i32, %arg1: memref<2x16x16x3xf32, #tpu.memory_space<vmem>>, %arg2: memref<2x16x16x3xf32, #tpu.memory_space<vmem>>, %arg3: memref<64x32xbf16, #tpu.memory_space<vmem>>, %arg4: memref<1x32xf32, #tpu.memory_space<vmem>>, %arg5: memref<32x256xbf16, #tpu.memory_space<vmem>>, %arg6: memref<1x256xf32, #tpu.memory_space<vmem>>, %arg7: memref<256x2xbf16, #tpu.memory_space<vmem>>, %arg8: memref<1x2xf32, #tpu.memory_space<vmem>>, %arg9: memref<2x2xf32, #tpu.memory_space<vmem>>, %arg10: memref<2x18x18x6xf32, #tpu.memory_space<vmem>>, %arg11: memref<512x64xf32, #tpu.memory_space<vmem>>) attributes {dimension_semantics = [#tpu.dimension_semantics<parallel>], iteration_bounds = array<i64: 1>, scalar_prefetch = 0 : i64, scratch_operands = 2 : i64, tpu.core_type = #tpu.core_type<tc>, window_params = [{transform_indices = @transform_0, window_bounds = array<i64: 2, 16, 16, 3>}, {transform_indices = @transform_1, window_bounds = array<i64: 2, 16, 16, 3>}, {pipeline_mode = #tpu.pipeline_mode<synchronous>, transform_indices = @transform_2, window_bounds = array<i64: 64, 32>}, {pipeline_mode = #tpu.pipeline_mode<synchronous>, transform_indices = @transform_3, window_bounds = array<i64: 1, 32>}, {pipeline_mode = #tpu.pipeline_mode<synchronous>, transform_indices = @transform_4, window_bounds = array<i64: 32, 256>}, {pipeline_mode = #tpu.pipeline_mode<synchronous>, transform_indices = @transform_5, window_bounds = array<i64: 1, 256>}, {pipeline_mode = #tpu.pipeline_mode<synchronous>, transform_indices = @transform_6, window_bounds = array<i64: 256, 2>}, {pipeline_mode = #tpu.pipeline_mode<synchronous>, transform_indices = @transform_7, window_bounds = array<i64: 1, 2>}, {transform_indices = @transform_8, window_bounds = array<i64: 2, 2>}]} {
    %cst = arith.constant 0.000000e+00 : f32
    %0 = vector.broadcast %cst : f32 to vector<2x18x18x6xf32>
    %c0 = arith.constant 0 : index
    %c0_0 = arith.constant 0 : index
    %c0_1 = arith.constant 0 : index
    %c0_2 = arith.constant 0 : index
    %1 = vector.load %arg10[%c0, %c0_0, %c0_1, %c0_2] : memref<2x18x18x6xf32, #tpu.memory_space<vmem>>, vector<2x18x18x6xf32>
    tpu.vector_store %arg10[%c0, %c0_0, %c0_1, %c0_2], %0 {strides = array<i32>} : memref<2x18x18x6xf32, #tpu.memory_space<vmem>>, vector<2x18x18x6xf32>,
    %c0_3 = arith.constant 0 : index
    %c0_4 = arith.constant 0 : index
    %c0_5 = arith.constant 0 : index
    %c0_6 = arith.constant 0 : index
    %2 = vector.load %arg1[%c0_3, %c0_4, %c0_5, %c0_6] : memref<2x16x16x3xf32, #tpu.memory_space<vmem>>, vector<2x16x16x3xf32>
    %c0_7 = arith.constant 0 : index
    %c1 = arith.constant 1 : index
    %c1_8 = arith.constant 1 : index
    %c0_9 = arith.constant 0 : index
    %3 = vector.load %arg10[%c0_7, %c1, %c1_8, %c0_9] : memref<2x18x18x6xf32, #tpu.memory_space<vmem>>, vector<2x16x16x3xf32>
    tpu.vector_store %arg10[%c0_7, %c1, %c1_8, %c0_9], %2 {strides = array<i32>} : memref<2x18x18x6xf32, #tpu.memory_space<vmem>>, vector<2x16x16x3xf32>,
    %c0_10 = arith.constant 0 : index
    %c0_11 = arith.constant 0 : index
    %c0_12 = arith.constant 0 : index
    %c0_13 = arith.constant 0 : index
    %4 = vector.load %arg2[%c0_10, %c0_11, %c0_12, %c0_13] : memref<2x16x16x3xf32, #tpu.memory_space<vmem>>, vector<2x16x16x3xf32>
    %c0_14 = arith.constant 0 : index
    %c1_15 = arith.constant 1 : index
    %c1_16 = arith.constant 1 : index
    %c3 = arith.constant 3 : index
    %5 = vector.load %arg10[%c0_14, %c1_15, %c1_16, %c3] : memref<2x18x18x6xf32, #tpu.memory_space<vmem>>, vector<2x16x16x3xf32>
    tpu.vector_store %arg10[%c0_14, %c1_15, %c1_16, %c3], %4 {strides = array<i32>} : memref<2x18x18x6xf32, #tpu.memory_space<vmem>>, vector<2x16x16x3xf32>,
    %cst_17 = arith.constant 0.000000e+00 : f32
    %6 = vector.broadcast %cst_17 : f32 to vector<512x64xf32>
    %c0_18 = arith.constant 0 : index
    %c0_19 = arith.constant 0 : index
    %7 = vector.load %arg11[%c0_18, %c0_19] : memref<512x64xf32, #tpu.memory_space<vmem>>, vector<512x64xf32>
    tpu.vector_store %arg11[%c0_18, %c0_19], %6 {strides = array<i32>} : memref<512x64xf32, #tpu.memory_space<vmem>>, vector<512x64xf32>,
    %c0_20 = arith.constant 0 : index
    %c0_21 = arith.constant 0 : index
    %c0_22 = arith.constant 0 : index
    %c0_23 = arith.constant 0 : index
    %8 = vector.load %arg10[%c0_20, %c0_21, %c0_22, %c0_23] : memref<2x18x18x6xf32, #tpu.memory_space<vmem>>, vector<2x16x16x6xf32>
    %9 = vector.shape_cast %8 : vector<2x16x16x6xf32> to vector<512x6xf32>
    %c0_24 = arith.constant 0 : index
    %c0_25 = arith.constant 0 : index
    %10 = vector.load %arg11[%c0_24, %c0_25] : memref<512x64xf32, #tpu.memory_space<vmem>>, vector<512x6xf32>
    tpu.vector_store %arg11[%c0_24, %c0_25], %9 {strides = array<i32>} : memref<512x64xf32, #tpu.memory_space<vmem>>, vector<512x6xf32>,
    %c0_26 = arith.constant 0 : index
    %c0_27 = arith.constant 0 : index
    %c1_28 = arith.constant 1 : index
    %c0_29 = arith.constant 0 : index
    %11 = vector.load %arg10[%c0_26, %c0_27, %c1_28, %c0_29] : memref<2x18x18x6xf32, #tpu.memory_space<vmem>>, vector<2x16x16x6xf32>
    %12 = vector.shape_cast %11 : vector<2x16x16x6xf32> to vector<512x6xf32>
    %c0_30 = arith.constant 0 : index
    %c6 = arith.constant 6 : index
    %13 = vector.load %arg11[%c0_30, %c6] : memref<512x64xf32, #tpu.memory_space<vmem>>, vector<512x6xf32>
    tpu.vector_store %arg11[%c0_30, %c6], %12 {strides = array<i32>} : memref<512x64xf32, #tpu.memory_space<vmem>>, vector<512x6xf32>,
    %c0_31 = arith.constant 0 : index
    %c0_32 = arith.constant 0 : index
    %c2 = arith.constant 2 : index
    %c0_33 = arith.constant 0 : index
    %14 = vector.load %arg10[%c0_31, %c0_32, %c2, %c0_33] : memref<2x18x18x6xf32, #tpu.memory_space<vmem>>, vector<2x16x16x6xf32>
    %15 = vector.shape_cast %14 : vector<2x16x16x6xf32> to vector<512x6xf32>
    %c0_34 = arith.constant 0 : index
    %c12 = arith.constant 12 : index
    %16 = vector.load %arg11[%c0_34, %c12] : memref<512x64xf32, #tpu.memory_space<vmem>>, vector<512x6xf32>
    tpu.vector_store %arg11[%c0_34, %c12], %15 {strides = array<i32>} : memref<512x64xf32, #tpu.memory_space<vmem>>, vector<512x6xf32>,
    %c0_35 = arith.constant 0 : index
    %c1_36 = arith.constant 1 : index
    %c0_37 = arith.constant 0 : index
    %c0_38 = arith.constant 0 : index
    %17 = vector.load %arg10[%c0_35, %c1_36, %c0_37, %c0_38] : memref<2x18x18x6xf32, #tpu.memory_space<vmem>>, vector<2x16x16x6xf32>
    %18 = vector.shape_cast %17 : vector<2x16x16x6xf32> to vector<512x6xf32>
    %c0_39 = arith.constant 0 : index
    %c18 = arith.constant 18 : index
    %19 = vector.load %arg11[%c0_39, %c18] : memref<512x64xf32, #tpu.memory_space<vmem>>, vector<512x6xf32>
    tpu.vector_store %arg11[%c0_39, %c18], %18 {strides = array<i32>} : memref<512x64xf32, #tpu.memory_space<vmem>>, vector<512x6xf32>,
    %c0_40 = arith.constant 0 : index
    %c1_41 = arith.constant 1 : index
    %c1_42 = arith.constant 1 : index
    %c0_43 = arith.constant 0 : index
    %20 = vector.load %arg10[%c0_40, %c1_41, %c1_42, %c0_43] : memref<2x18x18x6xf32, #tpu.memory_space<vmem>>, vector<2x16x16x6xf32>
    %21 = vector.shape_cast %20 : vector<2x16x16x6xf32> to vector<512x6xf32>
    %c0_44 = arith.constant 0 : index
    %c24 = arith.constant 24 : index
    %22 = vector.load %arg11[%c0_44, %c24] : memref<512x64xf32, #tpu.memory_space<vmem>>, vector<512x6xf32>
    tpu.vector_store %arg11[%c0_44, %c24], %21 {strides = array<i32>} : memref<512x64xf32, #tpu.memory_space<vmem>>, vector<512x6xf32>,
    %c0_45 = arith.constant 0 : index
    %c1_46 = arith.constant 1 : index
    %c2_47 = arith.constant 2 : index
    %c0_48 = arith.constant 0 : index
    %23 = vector.load %arg10[%c0_45, %c1_46, %c2_47, %c0_48] : memref<2x18x18x6xf32, #tpu.memory_space<vmem>>, vector<2x16x16x6xf32>
    %24 = vector.shape_cast %23 : vector<2x16x16x6xf32> to vector<512x6xf32>
    %c0_49 = arith.constant 0 : index
    %c30 = arith.constant 30 : index
    %25 = vector.load %arg11[%c0_49, %c30] : memref<512x64xf32, #tpu.memory_space<vmem>>, vector<512x6xf32>
    tpu.vector_store %arg11[%c0_49, %c30], %24 {strides = array<i32>} : memref<512x64xf32, #tpu.memory_space<vmem>>, vector<512x6xf32>,
    %c0_50 = arith.constant 0 : index
    %c2_51 = arith.constant 2 : index
    %c0_52 = arith.constant 0 : index
    %c0_53 = arith.constant 0 : index
    %26 = vector.load %arg10[%c0_50, %c2_51, %c0_52, %c0_53] : memref<2x18x18x6xf32, #tpu.memory_space<vmem>>, vector<2x16x16x6xf32>
    %27 = vector.shape_cast %26 : vector<2x16x16x6xf32> to vector<512x6xf32>
    %c0_54 = arith.constant 0 : index
    %c36 = arith.constant 36 : index
    %28 = vector.load %arg11[%c0_54, %c36] : memref<512x64xf32, #tpu.memory_space<vmem>>, vector<512x6xf32>
    tpu.vector_store %arg11[%c0_54, %c36], %27 {strides = array<i32>} : memref<512x64xf32, #tpu.memory_space<vmem>>, vector<512x6xf32>,
    %c0_55 = arith.constant 0 : index
    %c2_56 = arith.constant 2 : index
    %c1_57 = arith.constant 1 : index
    %c0_58 = arith.constant 0 : index
    %29 = vector.load %arg10[%c0_55, %c2_56, %c1_57, %c0_58] : memref<2x18x18x6xf32, #tpu.memory_space<vmem>>, vector<2x16x16x6xf32>
    %30 = vector.shape_cast %29 : vector<2x16x16x6xf32> to vector<512x6xf32>
    %c0_59 = arith.constant 0 : index
    %c42 = arith.constant 42 : index
    %31 = vector.load %arg11[%c0_59, %c42] : memref<512x64xf32, #tpu.memory_space<vmem>>, vector<512x6xf32>
    tpu.vector_store %arg11[%c0_59, %c42], %30 {strides = array<i32>} : memref<512x64xf32, #tpu.memory_space<vmem>>, vector<512x6xf32>,
    %c0_60 = arith.constant 0 : index
    %c2_61 = arith.constant 2 : index
    %c2_62 = arith.constant 2 : index
    %c0_63 = arith.constant 0 : index
    %32 = vector.load %arg10[%c0_60, %c2_61, %c2_62, %c0_63] : memref<2x18x18x6xf32, #tpu.memory_space<vmem>>, vector<2x16x16x6xf32>
    %33 = vector.shape_cast %32 : vector<2x16x16x6xf32> to vector<512x6xf32>
    %c0_64 = arith.constant 0 : index
    %c48 = arith.constant 48 : index
    %34 = vector.load %arg11[%c0_64, %c48] : memref<512x64xf32, #tpu.memory_space<vmem>>, vector<512x6xf32>
    tpu.vector_store %arg11[%c0_64, %c48], %33 {strides = array<i32>} : memref<512x64xf32, #tpu.memory_space<vmem>>, vector<512x6xf32>,
    %c0_65 = arith.constant 0 : index
    %c0_66 = arith.constant 0 : index
    %35 = vector.load %arg11[%c0_65, %c0_66] : memref<512x64xf32, #tpu.memory_space<vmem>>, vector<512x64xf32>
    %36 = arith.truncf %35 : vector<512x64xf32> to vector<512x64xbf16>
    %c0_67 = arith.constant 0 : index
    %c0_68 = arith.constant 0 : index
    %37 = vector.load %arg3[%c0_67, %c0_68] : memref<64x32xbf16, #tpu.memory_space<vmem>>, vector<64x32xbf16>
    %cst_69 = arith.constant dense<0.000000e+00> : vector<512x32xf32>
    %38 = tpu.matmul %36, %37, %cst_69 {dimension_numbers = #tpu.dot_dimension_numbers<[1], [0], [0], [1], [0, 0, 1, 1], [], []>} : vector<512x64xbf16>, vector<64x32xbf16>, vector<512x32xf32> -> vector<512x32xf32>
    %c0_70 = arith.constant 0 : index
    %c0_71 = arith.constant 0 : index
    %39 = vector.load %arg4[%c0_70, %c0_71] : memref<1x32xf32, #tpu.memory_space<vmem>>, vector<1x32xf32>
    %40 = vector.broadcast %39 : vector<1x32xf32> to vector<512x32xf32>
    %41 = arith.addf %38, %40 : vector<512x32xf32>
    %cst_72 = arith.constant 0.000000e+00 : f32
    %42 = vector.broadcast %cst_72 : f32 to vector<512x32xf32>
    %43 = arith.maximumf %41, %42 : vector<512x32xf32>
    %44 = vector.shape_cast %43 : vector<512x32xf32> to vector<2x256x32xf32>
    %cst_73 = arith.constant dense<0.000000e+00> : vector<2x32xf32>
    %45 = vector.multi_reduction <add>, %44, %cst_73 [1] : vector<2x256x32xf32> to vector<2x32xf32>
    %cst_74 = arith.constant 2.560000e+02 : f32
    %46 = vector.broadcast %cst_74 : f32 to vector<2x32xf32>
    %47 = arith.divf %45, %46 : vector<2x32xf32>
    %48 = arith.truncf %47 : vector<2x32xf32> to vector<2x32xbf16>
    %c0_75 = arith.constant 0 : index
    %c0_76 = arith.constant 0 : index
    %49 = vector.load %arg5[%c0_75, %c0_76] : memref<32x256xbf16, #tpu.memory_space<vmem>>, vector<32x256xbf16>
    %cst_77 = arith.constant dense<0.000000e+00> : vector<2x256xf32>
    %50 = tpu.matmul %48, %49, %cst_77 {dimension_numbers = #tpu.dot_dimension_numbers<[1], [0], [0], [1], [0, 0, 1, 1], [], []>} : vector<2x32xbf16>, vector<32x256xbf16>, vector<2x256xf32> -> vector<2x256xf32>
    %c0_78 = arith.constant 0 : index
    %c0_79 = arith.constant 0 : index
    %51 = vector.load %arg6[%c0_78, %c0_79] : memref<1x256xf32, #tpu.memory_space<vmem>>, vector<1x256xf32>
    %52 = vector.broadcast %51 : vector<1x256xf32> to vector<2x256xf32>
    %53 = arith.addf %50, %52 : vector<2x256xf32>
    %cst_80 = arith.constant 0.000000e+00 : f32
    %54 = vector.broadcast %cst_80 : f32 to vector<2x256xf32>
    %55 = arith.maximumf %53, %54 : vector<2x256xf32>
    %56 = arith.truncf %55 : vector<2x256xf32> to vector<2x256xbf16>
    %c0_81 = arith.constant 0 : index
    %c0_82 = arith.constant 0 : index
    %57 = vector.load %arg7[%c0_81, %c0_82] : memref<256x2xbf16, #tpu.memory_space<vmem>>, vector<256x2xbf16>
    %cst_83 = arith.constant dense<0.000000e+00> : vector<2x2xf32>
    %58 = tpu.matmul %56, %57, %cst_83 {dimension_numbers = #tpu.dot_dimension_numbers<[1], [0], [0], [1], [0, 0, 1, 1], [], []>} : vector<2x256xbf16>, vector<256x2xbf16>, vector<2x2xf32> -> vector<2x2xf32>
    %c0_84 = arith.constant 0 : index
    %c0_85 = arith.constant 0 : index
    %59 = vector.load %arg8[%c0_84, %c0_85] : memref<1x2xf32, #tpu.memory_space<vmem>>, vector<1x2xf32>
    %60 = vector.broadcast %59 : vector<1x2xf32> to vector<2x2xf32>
    %61 = arith.addf %58, %60 : vector<2x2xf32>
    %c0_86 = arith.constant 0 : index
    %c0_87 = arith.constant 0 : index
    %62 = vector.load %arg9[%c0_86, %c0_87] : memref<2x2xf32, #tpu.memory_space<vmem>>, vector<2x2xf32>
    tpu.vector_store %arg9[%c0_86, %c0_87], %61 {strides = array<i32>} : memref<2x2xf32, #tpu.memory_space<vmem>>, vector<2x2xf32>,
    return
  }
  func.func @transform_0(%arg0: i32) -> (i32, i32, i32, i32) {
    %c0_i32 = arith.constant 0 : i32
    %c0_i32_0 = arith.constant 0 : i32
    %c0_i32_1 = arith.constant 0 : i32
    %c0_i32_2 = arith.constant 0 : i32
    return %arg0, %c0_i32, %c0_i32_0, %c0_i32_1 : i32, i32, i32, i32
  }
  func.func @transform_1(%arg0: i32) -> (i32, i32, i32, i32) {
    %c0_i32 = arith.constant 0 : i32
    %c0_i32_0 = arith.constant 0 : i32
    %c0_i32_1 = arith.constant 0 : i32
    %c0_i32_2 = arith.constant 0 : i32
    return %arg0, %c0_i32, %c0_i32_0, %c0_i32_1 : i32, i32, i32, i32
  }
  func.func @transform_2(%arg0: i32) -> (i32, i32) {
    %c0_i32 = arith.constant 0 : i32
    %c0_i32_0 = arith.constant 0 : i32
    %c0_i32_1 = arith.constant 0 : i32
    return %c0_i32, %c0_i32_0 : i32, i32
  }
  func.func @transform_3(%arg0: i32) -> (i32, i32) {
    %c0_i32 = arith.constant 0 : i32
    %c0_i32_0 = arith.constant 0 : i32
    %c0_i32_1 = arith.constant 0 : i32
    return %c0_i32, %c0_i32_0 : i32, i32
  }
  func.func @transform_4(%arg0: i32) -> (i32, i32) {
    %c0_i32 = arith.constant 0 : i32
    %c0_i32_0 = arith.constant 0 : i32
    %c0_i32_1 = arith.constant 0 : i32
    return %c0_i32, %c0_i32_0 : i32, i32
  }
  func.func @transform_5(%arg0: i32) -> (i32, i32) {
    %c0_i32 = arith.constant 0 : i32
    %c0_i32_0 = arith.constant 0 : i32
    %c0_i32_1 = arith.constant 0 : i32
    return %c0_i32, %c0_i32_0 : i32, i32
  }
  func.func @transform_6(%arg0: i32) -> (i32, i32) {
    %c0_i32 = arith.constant 0 : i32
    %c0_i32_0 = arith.constant 0 : i32
    %c0_i32_1 = arith.constant 0 : i32
    return %c0_i32, %c0_i32_0 : i32, i32
  }
  func.func @transform_7(%arg0: i32) -> (i32, i32) {
    %c0_i32 = arith.constant 0 : i32
    %c0_i32_0 = arith.constant 0 : i32
    %c0_i32_1 = arith.constant 0 : i32
    return %c0_i32, %c0_i32_0 : i32, i32
  }
  func.func @transform_8(%arg0: i32) -> (i32, i32) {
    %c0_i32 = arith.constant 0 : i32
    %c0_i32_0 = arith.constant 0 : i32
    return %arg0, %c0_i32 : i32, i32
  }
}

</mosaic_0001>

<llo_original>
// kernel: tpu_custom_call.1
$region0: #{tpu_custom_call.1}
  #allocation0 [shape = 'u32[]', space=smem, size = 0x4, offset = 0x4, fixed_abs, tag = 'smem constant byte address 0x4 - core index']
  #allocation1 [shape = 'u32[144,128]{1,0:T(1,128)}', space=vmem, size = 0x12000, scoped, tag = 'internal scratch']
  #allocation2 [shape = 'f32[2,18,18,6]{3,2,1,0:T(8,128)}', space=vmem, size = 0x6c000, scoped, tag = 'scratch operand']
  #allocation3 [shape = 'f32[512,64]{1,0:T(8,128)}', space=vmem, size = 0x40000, scoped, tag = 'scratch operand']
  %s0 = inlined_call_operand.vmem [shape: f32[2,16,16,3], index: 0, kind: input, shape index: {}]
  %s1 = inlined_call_operand.vmem [shape: f32[2,16,16,3], index: 1, kind: input, shape index: {}]
  %s2 = inlined_call_operand.vmem [shape: bf16[64,32], index: 2, kind: input, shape index: {}]
  %s3 = inlined_call_operand.vmem [shape: f32[1,32], index: 3, kind: input, shape index: {}]
  %s4 = inlined_call_operand.vmem [shape: bf16[32,256], index: 4, kind: input, shape index: {}]
  %s5 = inlined_call_operand.vmem [shape: f32[1,256], index: 5, kind: input, shape index: {}]
  %s6 = inlined_call_operand.vmem [shape: bf16[256,2], index: 6, kind: input, shape index: {}]
  %s7 = inlined_call_operand.vmem [shape: f32[1,2], index: 7, kind: input, shape index: {}]
  %s8 = inlined_call_operand.hbm [shape: f32[2,2], index: 8, kind: output, shape index: {}]
  %s9 = sld [smem:[#allocation0]]
  $region42: #{tpu_custom_call.1} parent=0
    _
  %s11 = ssub.s32 1, %s9
  %s12 = scalar_select 0, %s11, %s9
  $region1: #{tpu_custom_call.1} parent=0
    #allocation4 [shape = 'u8[1024]{0}', space=vmem, size = 0x400, scoped, tag = 'output window, operand 0, single buffered']
    #allocation5 [shape = 's32[1]{0}', space=sflag, size = 0x4, scoped, tag = 'scoped memory for tpu_custom_call.1']
    %13 = vsyncpa [#allocation5], 0
    // Predicated region
    $region2: #{tpu_custom_call.1} parent=1 // pred_check
      _
    $region3: #{tpu_custom_call.1} parent=1 // pred_check_branch
      %15 = sbr.rel (0) target = $region5
    $region4: #{tpu_custom_call.1} parent=1 // pred_region
      _
    $region5: #{tpu_custom_call.1} parent=1 // pred_fallthru
      _
    // Predicated region
    $region6: #{tpu_custom_call.1} parent=1 // pred_check
      _
    $region7: #{tpu_custom_call.1} parent=1 // pred_check_branch
      %17 = sbr.rel (0) target = $region9
    $region8: #{tpu_custom_call.1} parent=1 // pred_region
      _
    $region9: #{tpu_custom_call.1} parent=1 // pred_fallthru
      _
    // Predicated region
    $region10: #{tpu_custom_call.1} parent=1 // pred_check
      _
    $region11: #{tpu_custom_call.1} parent=1 // pred_check_branch
      %19 = sbr.rel (0) target = $region13
    $region12: #{tpu_custom_call.1} parent=1 // pred_region
      _
    $region13: #{tpu_custom_call.1} parent=1 // pred_fallthru
      _
    // Predicated region
    $region14: #{tpu_custom_call.1} parent=1 // pred_check
      _
    $region15: #{tpu_custom_call.1} parent=1 // pred_check_branch
      %21 = sbr.rel (0) target = $region17
    $region16: #{tpu_custom_call.1} parent=1 // pred_region
      _
    $region17: #{tpu_custom_call.1} parent=1 // pred_fallthru
      _
    // Predicated region
    $region18: #{tpu_custom_call.1} parent=1 // pred_check
      _
    $region19: #{tpu_custom_call.1} parent=1 // pred_check_branch
      %23 = sbr.rel (0) target = $region21
    $region20: #{tpu_custom_call.1} parent=1 // pred_region
      _
    $region21: #{tpu_custom_call.1} parent=1 // pred_fallthru
      _
    // Predicated region
    $region22: #{tpu_custom_call.1} parent=1 // pred_check
      _
    $region23: #{tpu_custom_call.1} parent=1 // pred_check_branch
      %25 = sbr.rel (0) target = $region25
    $region24: #{tpu_custom_call.1} parent=1 // pred_region
      _
    $region25: #{tpu_custom_call.1} parent=1 // pred_fallthru
      _
    // Predicated region
    $region26: #{tpu_custom_call.1} parent=1 // pred_check
      _
    $region27: #{tpu_custom_call.1} parent=1 // pred_check_branch
      %27 = sbr.rel (0) target = $region29
    $region28: #{tpu_custom_call.1} parent=1 // pred_region
      _
    $region29: #{tpu_custom_call.1} parent=1 // pred_fallthru
      _
    // Predicated region
    $region30: #{tpu_custom_call.1} parent=1 // pred_check
      _
    $region31: #{tpu_custom_call.1} parent=1 // pred_check_branch
      %29 = sbr.rel (0) target = $region33
    $region32: #{tpu_custom_call.1} parent=1 // pred_region
      _
    $region33: #{tpu_custom_call.1} parent=1 // pred_fallthru
      _
    %vm31 = vcmask 48128
    %32 = vst.msk [vmem:[#allocation2] sm:$0xff] %vm31, 0.0
    %33 = vst.msk [vmem:[#allocation2 + $0x8] sm:$0xff] %vm31, 0.0
    %vm34 = vcmask 41984
    %35 = vst.msk [vmem:[#allocation2 + $0x10] sm:$0x3] %vm34, 0.0
    %36 = vst.msk [vmem:[#allocation2 + $0x18] sm:$0xff] %vm31, 0.0
    %37 = vst.msk [vmem:[#allocation2 + $0x20] sm:$0xff] %vm31, 0.0
    %38 = vst.msk [vmem:[#allocation2 + $0x28] sm:$0x3] %vm34, 0.0
    %39 = vst.msk [vmem:[#allocation2 + $0x30] sm:$0xff] %vm31, 0.0
    %40 = vst.msk [vmem:[#allocation2 + $0x38] sm:$0xff] %vm31, 0.0
    %41 = vst.msk [vmem:[#allocation2 + $0x40] sm:$0x3] %vm34, 0.0
    %42 = vst.msk [vmem:[#allocation2 + $0x48] sm:$0xff] %vm31, 0.0
    %43 = vst.msk [vmem:[#allocation2 + $0x50] sm:$0xff] %vm31, 0.0
    %44 = vst.msk [vmem:[#allocation2 + $0x58] sm:$0x3] %vm34, 0.0
    %45 = vst.msk [vmem:[#allocation2 + $0x60] sm:$0xff] %vm31, 0.0
    %46 = vst.msk [vmem:[#allocation2 + $0x68] sm:$0xff] %vm31, 0.0
    %47 = vst.msk [vmem:[#allocation2 + $0x70] sm:$0x3] %vm34, 0.0
    %48 = vst.msk [vmem:[#allocation2 + $0x78] sm:$0xff] %vm31, 0.0
    %49 = vst.msk [vmem:[#allocation2 + $0x80] sm:$0xff] %vm31, 0.0
    %50 = vst.msk [vmem:[#allocation2 + $0x88] sm:$0x3] %vm34, 0.0
    %51 = vst.msk [vmem:[#allocation2 + $0x90] sm:$0xff] %vm31, 0.0
    %52 = vst.msk [vmem:[#allocation2 + $0x98] sm:$0xff] %vm31, 0.0
    %53 = vst.msk [vmem:[#allocation2 + $0xa0] sm:$0x3] %vm34, 0.0
    %54 = vst.msk [vmem:[#allocation2 + $0xa8] sm:$0xff] %vm31, 0.0
    %55 = vst.msk [vmem:[#allocation2 + $0xb0] sm:$0xff] %vm31, 0.0
    %56 = vst.msk [vmem:[#allocation2 + $0xb8] sm:$0x3] %vm34, 0.0
    %57 = vst.msk [vmem:[#allocation2 + $0xc0] sm:$0xff] %vm31, 0.0
    %58 = vst.msk [vmem:[#allocation2 + $0xc8] sm:$0xff] %vm31, 0.0
    %59 = vst.msk [vmem:[#allocation2 + $0xd0] sm:$0x3] %vm34, 0.0
    %60 = vst.msk [vmem:[#allocation2 + $0xd8] sm:$0xff] %vm31, 0.0
    %61 = vst.msk [vmem:[#allocation2 + $0xe0] sm:$0xff] %vm31, 0.0
    %62 = vst.msk [vmem:[#allocation2 + $0xe8] sm:$0x3] %vm34, 0.0
    %63 = vst.msk [vmem:[#allocation2 + $0xf0] sm:$0xff] %vm31, 0.0
    %64 = vst.msk [vmem:[#allocation2 + $0xf8] sm:$0xff] %vm31, 0.0
    %65 = vst.msk [vmem:[#allocation2 + $0x100] sm:$0x3] %vm34, 0.0
    %66 = vst.msk [vmem:[#allocation2 + $0x108] sm:$0xff] %vm31, 0.0
    %67 = vst.msk [vmem:[#allocation2 + $0x110] sm:$0xff] %vm31, 0.0
    %68 = vst.msk [vmem:[#allocation2 + $0x118] sm:$0x3] %vm34, 0.0
    %69 = vst.msk [vmem:[#allocation2 + $0x120] sm:$0xff] %vm31, 0.0
    %70 = vst.msk [vmem:[#allocation2 + $0x128] sm:$0xff] %vm31, 0.0
    %71 = vst.msk [vmem:[#allocation2 + $0x130] sm:$0x3] %vm34, 0.0
    %72 = vst.msk [vmem:[#allocation2 + $0x138] sm:$0xff] %vm31, 0.0
    %73 = vst.msk [vmem:[#allocation2 + $0x140] sm:$0xff] %vm31, 0.0
    %74 = vst.msk [vmem:[#allocation2 + $0x148] sm:$0x3] %vm34, 0.0
    %75 = vst.msk [vmem:[#allocation2 + $0x150] sm:$0xff] %vm31, 0.0
    %76 = vst.msk [vmem:[#allocation2 + $0x158] sm:$0xff] %vm31, 0.0
    %77 = vst.msk [vmem:[#allocation2 + $0x160] sm:$0x3] %vm34, 0.0
    %78 = vst.msk [vmem:[#allocation2 + $0x168] sm:$0xff] %vm31, 0.0
    %79 = vst.msk [vmem:[#allocation2 + $0x170] sm:$0xff] %vm31, 0.0
    %80 = vst.msk [vmem:[#allocation2 + $0x178] sm:$0x3] %vm34, 0.0
    %81 = vst.msk [vmem:[#allocation2 + $0x180] sm:$0xff] %vm31, 0.0
    %82 = vst.msk [vmem:[#allocation2 + $0x188] sm:$0xff] %vm31, 0.0
    %83 = vst.msk [vmem:[#allocation2 + $0x190] sm:$0x3] %vm34, 0.0
    %84 = vst.msk [vmem:[#allocation2 + $0x198] sm:$0xff] %vm31, 0.0
    %85 = vst.msk [vmem:[#allocation2 + $0x1a0] sm:$0xff] %vm31, 0.0
    %86 = vst.msk [vmem:[#allocation2 + $0x1a8] sm:$0x3] %vm34, 0.0
    %87 = vst.msk [vmem:[#allocation2 + $0x1b0] sm:$0xff] %vm31, 0.0
    %88 = vst.msk [vmem:[#allocation2 + $0x1b8] sm:$0xff] %vm31, 0.0
    %89 = vst.msk [vmem:[#allocation2 + $0x1c0] sm:$0x3] %vm34, 0.0
    %90 = vst.msk [vmem:[#allocation2 + $0x1c8] sm:$0xff] %vm31, 0.0
    %91 = vst.msk [vmem:[#allocation2 + $0x1d0] sm:$0xff] %vm31, 0.0
    %92 = vst.msk [vmem:[#allocation2 + $0x1d8] sm:$0x3] %vm34, 0.0
    %93 = vst.msk [vmem:[#allocation2 + $0x1e0] sm:$0xff] %vm31, 0.0
    %94 = vst.msk [vmem:[#allocation2 + $0x1e8] sm:$0xff] %vm31, 0.0
    %95 = vst.msk [vmem:[#allocation2 + $0x1f0] sm:$0x3] %vm34, 0.0
    %96 = vst.msk [vmem:[#allocation2 + $0x1f8] sm:$0xff] %vm31, 0.0
    %97 = vst.msk [vmem:[#allocation2 + $0x200] sm:$0xff] %vm31, 0.0
    %98 = vst.msk [vmem:[#allocation2 + $0x208] sm:$0x3] %vm34, 0.0
    %99 = vst.msk [vmem:[#allocation2 + $0x210] sm:$0xff] %vm31, 0.0
    %100 = vst.msk [vmem:[#allocation2 + $0x218] sm:$0xff] %vm31, 0.0
    %101 = vst.msk [vmem:[#allocation2 + $0x220] sm:$0x3] %vm34, 0.0
    %102 = vst.msk [vmem:[#allocation2 + $0x228] sm:$0xff] %vm31, 0.0
    %103 = vst.msk [vmem:[#allocation2 + $0x230] sm:$0xff] %vm31, 0.0
    %104 = vst.msk [vmem:[#allocation2 + $0x238] sm:$0x3] %vm34, 0.0
    %105 = vst.msk [vmem:[#allocation2 + $0x240] sm:$0xff] %vm31, 0.0
    %106 = vst.msk [vmem:[#allocation2 + $0x248] sm:$0xff] %vm31, 0.0
    %107 = vst.msk [vmem:[#allocation2 + $0x250] sm:$0x3] %vm34, 0.0
    %108 = vst.msk [vmem:[#allocation2 + $0x258] sm:$0xff] %vm31, 0.0
    %109 = vst.msk [vmem:[#allocation2 + $0x260] sm:$0xff] %vm31, 0.0
    %110 = vst.msk [vmem:[#allocation2 + $0x268] sm:$0x3] %vm34, 0.0
    %111 = vst.msk [vmem:[#allocation2 + $0x270] sm:$0xff] %vm31, 0.0
    %112 = vst.msk [vmem:[#allocation2 + $0x278] sm:$0xff] %vm31, 0.0
    %113 = vst.msk [vmem:[#allocation2 + $0x280] sm:$0x3] %vm34, 0.0
    %114 = vst.msk [vmem:[#allocation2 + $0x288] sm:$0xff] %vm31, 0.0
    %115 = vst.msk [vmem:[#allocation2 + $0x290] sm:$0xff] %vm31, 0.0
    %116 = vst.msk [vmem:[#allocation2 + $0x298] sm:$0x3] %vm34, 0.0
    %117 = vst.msk [vmem:[#allocation2 + $0x2a0] sm:$0xff] %vm31, 0.0
    %118 = vst.msk [vmem:[#allocation2 + $0x2a8] sm:$0xff] %vm31, 0.0
    %119 = vst.msk [vmem:[#allocation2 + $0x2b0] sm:$0x3] %vm34, 0.0
    %120 = vst.msk [vmem:[#allocation2 + $0x2b8] sm:$0xff] %vm31, 0.0
    %121 = vst.msk [vmem:[#allocation2 + $0x2c0] sm:$0xff] %vm31, 0.0
    %122 = vst.msk [vmem:[#allocation2 + $0x2c8] sm:$0x3] %vm34, 0.0
    %123 = vst.msk [vmem:[#allocation2 + $0x2d0] sm:$0xff] %vm31, 0.0
    %124 = vst.msk [vmem:[#allocation2 + $0x2d8] sm:$0xff] %vm31, 0.0
    %125 = vst.msk [vmem:[#allocation2 + $0x2e0] sm:$0x3] %vm34, 0.0
    %126 = vst.msk [vmem:[#allocation2 + $0x2e8] sm:$0xff] %vm31, 0.0
    %127 = vst.msk [vmem:[#allocation2 + $0x2f0] sm:$0xff] %vm31, 0.0
    %128 = vst.msk [vmem:[#allocation2 + $0x2f8] sm:$0x3] %vm34, 0.0
    %129 = vst.msk [vmem:[#allocation2 + $0x300] sm:$0xff] %vm31, 0.0
    %130 = vst.msk [vmem:[#allocation2 + $0x308] sm:$0xff] %vm31, 0.0
    %131 = vst.msk [vmem:[#allocation2 + $0x310] sm:$0x3] %vm34, 0.0
    %132 = vst.msk [vmem:[#allocation2 + $0x318] sm:$0xff] %vm31, 0.0
    %133 = vst.msk [vmem:[#allocation2 + $0x320] sm:$0xff] %vm31, 0.0
    %134 = vst.msk [vmem:[#allocation2 + $0x328] sm:$0x3] %vm34, 0.0
    %135 = vst.msk [vmem:[#allocation2 + $0x330] sm:$0xff] %vm31, 0.0
    %136 = vst.msk [vmem:[#allocation2 + $0x338] sm:$0xff] %vm31, 0.0
    %137 = vst.msk [vmem:[#allocation2 + $0x340] sm:$0x3] %vm34, 0.0
    %138 = vst.msk [vmem:[#allocation2 + $0x348] sm:$0xff] %vm31, 0.0
    %139 = vst.msk [vmem:[#allocation2 + $0x350] sm:$0xff] %vm31, 0.0
    %140 = vst.msk [vmem:[#allocation2 + $0x358] sm:$0x3] %vm34, 0.0
    %v141 = vld [vmem:[%s0] sm:$0xff]
    %v142 = vld [vmem:[%s0 + $0x8] sm:$0xff]
    %v143 = vld [vmem:[%s0 + $0x10] sm:$0xff]
    %v144 = vld [vmem:[%s0 + $0x18] sm:$0xff]
    %v145 = vld [vmem:[%s0 + $0x20] sm:$0xff]
    %v146 = vld [vmem:[%s0 + $0x28] sm:$0xff]
    %v147 = vld [vmem:[%s0 + $0x30] sm:$0xff]
    %v148 = vld [vmem:[%s0 + $0x38] sm:$0xff]
    %v149 = vld [vmem:[%s0 + $0x40] sm:$0xff]
    %v150 = vld [vmem:[%s0 + $0x48] sm:$0xff]
    %v151 = vld [vmem:[%s0 + $0x50] sm:$0xff]
    %v152 = vld [vmem:[%s0 + $0x58] sm:$0xff]
    %v153 = vld [vmem:[%s0 + $0x60] sm:$0xff]
    %v154 = vld [vmem:[%s0 + $0x68] sm:$0xff]
    %v155 = vld [vmem:[%s0 + $0x70] sm:$0xff]
    %v156 = vld [vmem:[%s0 + $0x78] sm:$0xff]
    %v157 = vld [vmem:[%s0 + $0x80] sm:$0xff]
    %v158 = vld [vmem:[%s0 + $0x88] sm:$0xff]
    %v159 = vld [vmem:[%s0 + $0x90] sm:$0xff]
    %v160 = vld [vmem:[%s0 + $0x98] sm:$0xff]
    %v161 = vld [vmem:[%s0 + $0xa0] sm:$0xff]
    %v162 = vld [vmem:[%s0 + $0xa8] sm:$0xff]
    %v163 = vld [vmem:[%s0 + $0xb0] sm:$0xff]
    %v164 = vld [vmem:[%s0 + $0xb8] sm:$0xff]
    %v165 = vld [vmem:[%s0 + $0xc0] sm:$0xff]
    %v166 = vld [vmem:[%s0 + $0xc8] sm:$0xff]
    %v167 = vld [vmem:[%s0 + $0xd0] sm:$0xff]
    %v168 = vld [vmem:[%s0 + $0xd8] sm:$0xff]
    %v169 = vld [vmem:[%s0 + $0xe0] sm:$0xff]
    %v170 = vld [vmem:[%s0 + $0xe8] sm:$0xff]
    %v171 = vld [vmem:[%s0 + $0xf0] sm:$0xff]
    %v172 = vld [vmem:[%s0 + $0xf8] sm:$0xff]
    %v173 = vld [vmem:[%s0 + $0x100] sm:$0xff]
    %v174 = vld [vmem:[%s0 + $0x108] sm:$0xff]
    %v175 = vld [vmem:[%s0 + $0x110] sm:$0xff]
    %v176 = vld [vmem:[%s0 + $0x118] sm:$0xff]
    %v177 = vld [vmem:[%s0 + $0x120] sm:$0xff]
    %v178 = vld [vmem:[%s0 + $0x128] sm:$0xff]
    %v179 = vld [vmem:[%s0 + $0x130] sm:$0xff]
    %v180 = vld [vmem:[%s0 + $0x138] sm:$0xff]
    %v181 = vld [vmem:[%s0 + $0x140] sm:$0xff]
    %v182 = vld [vmem:[%s0 + $0x148] sm:$0xff]
    %v183 = vld [vmem:[%s0 + $0x150] sm:$0xff]
    %v184 = vld [vmem:[%s0 + $0x158] sm:$0xff]
    %v185 = vld [vmem:[%s0 + $0x160] sm:$0xff]
    %v186 = vld [vmem:[%s0 + $0x168] sm:$0xff]
    %v187 = vld [vmem:[%s0 + $0x170] sm:$0xff]
    %v188 = vld [vmem:[%s0 + $0x178] sm:$0xff]
    %v189 = vld [vmem:[%s0 + $0x180] sm:$0xff]
    %v190 = vld [vmem:[%s0 + $0x188] sm:$0xff]
    %v191 = vld [vmem:[%s0 + $0x190] sm:$0xff]
    %v192 = vld [vmem:[%s0 + $0x198] sm:$0xff]
    %v193 = vld [vmem:[%s0 + $0x1a0] sm:$0xff]
    %v194 = vld [vmem:[%s0 + $0x1a8] sm:$0xff]
    %v195 = vld [vmem:[%s0 + $0x1b0] sm:$0xff]
    %v196 = vld [vmem:[%s0 + $0x1b8] sm:$0xff]
    %v197 = vld [vmem:[%s0 + $0x1c0] sm:$0xff]
    %v198 = vld [vmem:[%s0 + $0x1c8] sm:$0xff]
    %v199 = vld [vmem:[%s0 + $0x1d0] sm:$0xff]
    %v200 = vld [vmem:[%s0 + $0x1d8] sm:$0xff]
    %v201 = vld [vmem:[%s0 + $0x1e0] sm:$0xff]
    %v202 = vld [vmem:[%s0 + $0x1e8] sm:$0xff]
    %v203 = vld [vmem:[%s0 + $0x1f0] sm:$0xff]
    %v204 = vld [vmem:[%s0 + $0x1f8] sm:$0xff]
    %s205 = scalar_lea.vmem [#allocation2], 24
    %vm206 = vcmask 23552
    %207 = vst.msk [vmem:[%s205 + $0x1] sm:$0xff] %vm206, %v141
    %208 = vst.msk [vmem:[%s205 + $0x9] sm:$0xff] %vm206, %v142
    %209 = vst.msk [vmem:[%s205 + $0x19] sm:$0xff] %vm206, %v143
    %210 = vst.msk [vmem:[%s205 + $0x21] sm:$0xff] %vm206, %v144
    %211 = vst.msk [vmem:[%s205 + $0x31] sm:$0xff] %vm206, %v145
    %212 = vst.msk [vmem:[%s205 + $0x39] sm:$0xff] %vm206, %v146
    %213 = vst.msk [vmem:[%s205 + $0x49] sm:$0xff] %vm206, %v147
    %214 = vst.msk [vmem:[%s205 + $0x51] sm:$0xff] %vm206, %v148
    %215 = vst.msk [vmem:[%s205 + $0x61] sm:$0xff] %vm206, %v149
    %216 = vst.msk [vmem:[%s205 + $0x69] sm:$0xff] %vm206, %v150
    %217 = vst.msk [vmem:[%s205 + $0x79] sm:$0xff] %vm206, %v151
    %218 = vst.msk [vmem:[%s205 + $0x81] sm:$0xff] %vm206, %v152
    %219 = vst.msk [vmem:[%s205 + $0x91] sm:$0xff] %vm206, %v153
    %220 = vst.msk [vmem:[%s205 + $0x99] sm:$0xff] %vm206, %v154
    %221 = vst.msk [vmem:[%s205 + $0xa9] sm:$0xff] %vm206, %v155
    %222 = vst.msk [vmem:[%s205 + $0xb1] sm:$0xff] %vm206, %v156
    %223 = vst.msk [vmem:[%s205 + $0xc1] sm:$0xff] %vm206, %v157
    %224 = vst.msk [vmem:[%s205 + $0xc9] sm:$0xff] %vm206, %v158
    %225 = vst.msk [vmem:[%s205 + $0xd9] sm:$0xff] %vm206, %v159
    %226 = vst.msk [vmem:[%s205 + $0xe1] sm:$0xff] %vm206, %v160
    %227 = vst.msk [vmem:[%s205 + $0xf1] sm:$0xff] %vm206, %v161
    %228 = vst.msk [vmem:[%s205 + $0xf9] sm:$0xff] %vm206, %v162
    %229 = vst.msk [vmem:[%s205 + $0x109] sm:$0xff] %vm206, %v163
    %230 = vst.msk [vmem:[%s205 + $0x111] sm:$0xff] %vm206, %v164
    %231 = vst.msk [vmem:[%s205 + $0x121] sm:$0xff] %vm206, %v165
    %232 = vst.msk [vmem:[%s205 + $0x129] sm:$0xff] %vm206, %v166
    %233 = vst.msk [vmem:[%s205 + $0x139] sm:$0xff] %vm206, %v167
    %234 = vst.msk [vmem:[%s205 + $0x141] sm:$0xff] %vm206, %v168
    %235 = vst.msk [vmem:[%s205 + $0x151] sm:$0xff] %vm206, %v169
    %236 = vst.msk [vmem:[%s205 + $0x159] sm:$0xff] %vm206, %v170
    %237 = vst.msk [vmem:[%s205 + $0x169] sm:$0xff] %vm206, %v171
    %238 = vst.msk [vmem:[%s205 + $0x171] sm:$0xff] %vm206, %v172
    %239 = vst.msk [vmem:[%s205 + $0x1b1] sm:$0xff] %vm206, %v173
    %240 = vst.msk [vmem:[%s205 + $0x1b9] sm:$0xff] %vm206, %v174
    %241 = vst.msk [vmem:[%s205 + $0x1c9] sm:$0xff] %vm206, %v175
    %242 = vst.msk [vmem:[%s205 + $0x1d1] sm:$0xff] %vm206, %v176
    %243 = vst.msk [vmem:[%s205 + $0x1e1] sm:$0xff] %vm206, %v177
    %244 = vst.msk [vmem:[%s205 + $0x1e9] sm:$0xff] %vm206, %v178
    %245 = vst.msk [vmem:[%s205 + $0x1f9] sm:$0xff] %vm206, %v179
    %246 = vst.msk [vmem:[%s205 + $0x201] sm:$0xff] %vm206, %v180
    %247 = vst.msk [vmem:[%s205 + $0x211] sm:$0xff] %vm206, %v181
    %248 = vst.msk [vmem:[%s205 + $0x219] sm:$0xff] %vm206, %v182
    %249 = vst.msk [vmem:[%s205 + $0x229] sm:$0xff] %vm206, %v183
    %250 = vst.msk [vmem:[%s205 + $0x231] sm:$0xff] %vm206, %v184
    %251 = vst.msk [vmem:[%s205 + $0x241] sm:$0xff] %vm206, %v185
    %252 = vst.msk [vmem:[%s205 + $0x249] sm:$0xff] %vm206, %v186
    %253 = vst.msk [vmem:[%s205 + $0x259] sm:$0xff] %vm206, %v187
    %254 = vst.msk [vmem:[%s205 + $0x261] sm:$0xff] %vm206, %v188
    %255 = vst.msk [vmem:[%s205 + $0x271] sm:$0xff] %vm206, %v189
    %256 = vst.msk [vmem:[%s205 + $0x279] sm:$0xff] %vm206, %v190
    %257 = vst.msk [vmem:[%s205 + $0x289] sm:$0xff] %vm206, %v191
    %258 = vst.msk [vmem:[%s205 + $0x291] sm:$0xff] %vm206, %v192
    %259 = vst.msk [vmem:[%s205 + $0x2a1] sm:$0xff] %vm206, %v193
    %260 = vst.msk [vmem:[%s205 + $0x2a9] sm:$0xff] %vm206, %v194
    %261 = vst.msk [vmem:[%s205 + $0x2b9] sm:$0xff] %vm206, %v195
    %262 = vst.msk [vmem:[%s205 + $0x2c1] sm:$0xff] %vm206, %v196
    %263 = vst.msk [vmem:[%s205 + $0x2d1] sm:$0xff] %vm206, %v197
    %264 = vst.msk [vmem:[%s205 + $0x2d9] sm:$0xff] %vm206, %v198
    %265 = vst.msk [vmem:[%s205 + $0x2e9] sm:$0xff] %vm206, %v199
    %266 = vst.msk [vmem:[%s205 + $0x2f1] sm:$0xff] %vm206, %v200
    %267 = vst.msk [vmem:[%s205 + $0x301] sm:$0xff] %vm206, %v201
    %268 = vst.msk [vmem:[%s205 + $0x309] sm:$0xff] %vm206, %v202
    %269 = vst.msk [vmem:[%s205 + $0x319] sm:$0xff] %vm206, %v203
    %270 = vst.msk [vmem:[%s205 + $0x321] sm:$0xff] %vm206, %v204
    %v271 = vld [vmem:[%s1] sm:$0xff]
    %v272 = vld [vmem:[%s1 + $0x8] sm:$0xff]
    %v273 = vld [vmem:[%s1 + $0x10] sm:$0xff]
    %v274 = vld [vmem:[%s1 + $0x18] sm:$0xff]
    %v275 = vld [vmem:[%s1 + $0x20] sm:$0xff]
    %v276 = vld [vmem:[%s1 + $0x28] sm:$0xff]
    %v277 = vld [vmem:[%s1 + $0x30] sm:$0xff]
    %v278 = vld [vmem:[%s1 + $0x38] sm:$0xff]
    %v279 = vld [vmem:[%s1 + $0x40] sm:$0xff]
    %v280 = vld [vmem:[%s1 + $0x48] sm:$0xff]
    %v281 = vld [vmem:[%s1 + $0x50] sm:$0xff]
    %v282 = vld [vmem:[%s1 + $0x58] sm:$0xff]
    %v283 = vld [vmem:[%s1 + $0x60] sm:$0xff]
    %v284 = vld [vmem:[%s1 + $0x68] sm:$0xff]
    %v285 = vld [vmem:[%s1 + $0x70] sm:$0xff]
    %v286 = vld [vmem:[%s1 + $0x78] sm:$0xff]
    %v287 = vld [vmem:[%s1 + $0x80] sm:$0xff]
    %v288 = vld [vmem:[%s1 + $0x88] sm:$0xff]
    %v289 = vld [vmem:[%s1 + $0x90] sm:$0xff]
    %v290 = vld [vmem:[%s1 + $0x98] sm:$0xff]
    %v291 = vld [vmem:[%s1 + $0xa0] sm:$0xff]
    %v292 = vld [vmem:[%s1 + $0xa8] sm:$0xff]
    %v293 = vld [vmem:[%s1 + $0xb0] sm:$0xff]
    %v294 = vld [vmem:[%s1 + $0xb8] sm:$0xff]
    %v295 = vld [vmem:[%s1 + $0xc0] sm:$0xff]
    %v296 = vld [vmem:[%s1 + $0xc8] sm:$0xff]
    %v297 = vld [vmem:[%s1 + $0xd0] sm:$0xff]
    %v298 = vld [vmem:[%s1 + $0xd8] sm:$0xff]
    %v299 = vld [vmem:[%s1 + $0xe0] sm:$0xff]
    %v300 = vld [vmem:[%s1 + $0xe8] sm:$0xff]
    %v301 = vld [vmem:[%s1 + $0xf0] sm:$0xff]
    %v302 = vld [vmem:[%s1 + $0xf8] sm:$0xff]
    %v303 = vld [vmem:[%s1 + $0x100] sm:$0xff]
    %v304 = vld [vmem:[%s1 + $0x108] sm:$0xff]
    %v305 = vld [vmem:[%s1 + $0x110] sm:$0xff]
    %v306 = vld [vmem:[%s1 + $0x118] sm:$0xff]
    %v307 = vld [vmem:[%s1 + $0x120] sm:$0xff]
    %v308 = vld [vmem:[%s1 + $0x128] sm:$0xff]
    %v309 = vld [vmem:[%s1 + $0x130] sm:$0xff]
    %v310 = vld [vmem:[%s1 + $0x138] sm:$0xff]
    %v311 = vld [vmem:[%s1 + $0x140] sm:$0xff]
    %v312 = vld [vmem:[%s1 + $0x148] sm:$0xff]
    %v313 = vld [vmem:[%s1 + $0x150] sm:$0xff]
    %v314 = vld [vmem:[%s1 + $0x158] sm:$0xff]
    %v315 = vld [vmem:[%s1 + $0x160] sm:$0xff]
    %v316 = vld [vmem:[%s1 + $0x168] sm:$0xff]
    %v317 = vld [vmem:[%s1 + $0x170] sm:$0xff]
    %v318 = vld [vmem:[%s1 + $0x178] sm:$0xff]
    %v319 = vld [vmem:[%s1 + $0x180] sm:$0xff]
    %v320 = vld [vmem:[%s1 + $0x188] sm:$0xff]
    %v321 = vld [vmem:[%s1 + $0x190] sm:$0xff]
    %v322 = vld [vmem:[%s1 + $0x198] sm:$0xff]
    %v323 = vld [vmem:[%s1 + $0x1a0] sm:$0xff]
    %v324 = vld [vmem:[%s1 + $0x1a8] sm:$0xff]
    %v325 = vld [vmem:[%s1 + $0x1b0] sm:$0xff]
    %v326 = vld [vmem:[%s1 + $0x1b8] sm:$0xff]
    %v327 = vld [vmem:[%s1 + $0x1c0] sm:$0xff]
    %v328 = vld [vmem:[%s1 + $0x1c8] sm:$0xff]
    %v329 = vld [vmem:[%s1 + $0x1d0] sm:$0xff]
    %v330 = vld [vmem:[%s1 + $0x1d8] sm:$0xff]
    %v331 = vld [vmem:[%s1 + $0x1e0] sm:$0xff]
    %v332 = vld [vmem:[%s1 + $0x1e8] sm:$0xff]
    %v333 = vld [vmem:[%s1 + $0x1f0] sm:$0xff]
    %v334 = vld [vmem:[%s1 + $0x1f8] sm:$0xff]
    %399 = vrot.lane.b32.xlu0 %v271, 3
    %v400 = vpop.permute.xlu0 %399
    %401 = vrot.lane.b32.xlu0 %v272, 3
    %v402 = vpop.permute.xlu0 %401
    %403 = vrot.lane.b32.xlu0 %v273, 3
    %v404 = vpop.permute.xlu0 %403
    %405 = vrot.lane.b32.xlu0 %v274, 3
    %v406 = vpop.permute.xlu0 %405
    %407 = vrot.lane.b32.xlu0 %v275, 3
    %v408 = vpop.permute.xlu0 %407
    %409 = vrot.lane.b32.xlu0 %v276, 3
    %v410 = vpop.permute.xlu0 %409
    %411 = vrot.lane.b32.xlu0 %v277, 3
    %v412 = vpop.permute.xlu0 %411
    %413 = vrot.lane.b32.xlu0 %v278, 3
    %v414 = vpop.permute.xlu0 %413
    %415 = vrot.lane.b32.xlu0 %v279, 3
    %v416 = vpop.permute.xlu0 %415
    %417 = vrot.lane.b32.xlu0 %v280, 3
    %v418 = vpop.permute.xlu0 %417
    %419 = vrot.lane.b32.xlu0 %v281, 3
    %v420 = vpop.permute.xlu0 %419
    %421 = vrot.lane.b32.xlu0 %v282, 3
    %v422 = vpop.permute.xlu0 %421
    %423 = vrot.lane.b32.xlu0 %v283, 3
    %v424 = vpop.permute.xlu0 %423
    %425 = vrot.lane.b32.xlu0 %v284, 3
    %v426 = vpop.permute.xlu0 %425
    %427 = vrot.lane.b32.xlu0 %v285, 3
    %v428 = vpop.permute.xlu0 %427
    %429 = vrot.lane.b32.xlu0 %v286, 3
    %v430 = vpop.permute.xlu0 %429
    %431 = vrot.lane.b32.xlu0 %v287, 3
    %v432 = vpop.permute.xlu0 %431
    %433 = vrot.lane.b32.xlu0 %v288, 3
    %v434 = vpop.permute.xlu0 %433
    %435 = vrot.lane.b32.xlu0 %v289, 3
    %v436 = vpop.permute.xlu0 %435
    %437 = vrot.lane.b32.xlu0 %v290, 3
    %v438 = vpop.permute.xlu0 %437
    %439 = vrot.lane.b32.xlu0 %v291, 3
    %v440 = vpop.permute.xlu0 %439
    %441 = vrot.lane.b32.xlu0 %v292, 3
    %v442 = vpop.permute.xlu0 %441
    %443 = vrot.lane.b32.xlu0 %v293, 3
    %v444 = vpop.permute.xlu0 %443
    %445 = vrot.lane.b32.xlu0 %v294, 3
    %v446 = vpop.permute.xlu0 %445
    %447 = vrot.lane.b32.xlu0 %v295, 3
    %v448 = vpop.permute.xlu0 %447
    %449 = vrot.lane.b32.xlu0 %v296, 3
    %v450 = vpop.permute.xlu0 %449
    %451 = vrot.lane.b32.xlu0 %v297, 3
    %v452 = vpop.permute.xlu0 %451
    %453 = vrot.lane.b32.xlu0 %v298, 3
    %v454 = vpop.permute.xlu0 %453
    %455 = vrot.lane.b32.xlu0 %v299, 3
    %v456 = vpop.permute.xlu0 %455
    %457 = vrot.lane.b32.xlu0 %v300, 3
    %v458 = vpop.permute.xlu0 %457
    %459 = vrot.lane.b32.xlu0 %v301, 3
    %v460 = vpop.permute.xlu0 %459
    %461 = vrot.lane.b32.xlu0 %v302, 3
    %v462 = vpop.permute.xlu0 %461
    %463 = vrot.lane.b32.xlu0 %v303, 3
    %v464 = vpop.permute.xlu0 %463
    %465 = vrot.lane.b32.xlu0 %v304, 3
    %v466 = vpop.permute.xlu0 %465
    %467 = vrot.lane.b32.xlu0 %v305, 3
    %v468 = vpop.permute.xlu0 %467
    %469 = vrot.lane.b32.xlu0 %v306, 3
    %v470 = vpop.permute.xlu0 %469
    %471 = vrot.lane.b32.xlu0 %v307, 3
    %v472 = vpop.permute.xlu0 %471
    %473 = vrot.lane.b32.xlu0 %v308, 3
    %v474 = vpop.permute.xlu0 %473
    %475 = vrot.lane.b32.xlu0 %v309, 3
    %v476 = vpop.permute.xlu0 %475
    %477 = vrot.lane.b32.xlu0 %v310, 3
    %v478 = vpop.permute.xlu0 %477
    %479 = vrot.lane.b32.xlu0 %v311, 3
    %v480 = vpop.permute.xlu0 %479
    %481 = vrot.lane.b32.xlu0 %v312, 3
    %v482 = vpop.permute.xlu0 %481
    %483 = vrot.lane.b32.xlu0 %v313, 3
    %v484 = vpop.permute.xlu0 %483
    %485 = vrot.lane.b32.xlu0 %v314, 3
    %v486 = vpop.permute.xlu0 %485
    %487 = vrot.lane.b32.xlu0 %v315, 3
    %v488 = vpop.permute.xlu0 %487
    %489 = vrot.lane.b32.xlu0 %v316, 3
    %v490 = vpop.permute.xlu0 %489
    %491 = vrot.lane.b32.xlu0 %v317, 3
    %v492 = vpop.permute.xlu0 %491
    %493 = vrot.lane.b32.xlu0 %v318, 3
    %v494 = vpop.permute.xlu0 %493
    %495 = vrot.lane.b32.xlu0 %v319, 3
    %v496 = vpop.permute.xlu0 %495
    %497 = vrot.lane.b32.xlu0 %v320, 3
    %v498 = vpop.permute.xlu0 %497
    %499 = vrot.lane.b32.xlu0 %v321, 3
    %v500 = vpop.permute.xlu0 %499
    %501 = vrot.lane.b32.xlu0 %v322, 3
    %v502 = vpop.permute.xlu0 %501
    %503 = vrot.lane.b32.xlu0 %v323, 3
    %v504 = vpop.permute.xlu0 %503
    %505 = vrot.lane.b32.xlu0 %v324, 3
    %v506 = vpop.permute.xlu0 %505
    %507 = vrot.lane.b32.xlu0 %v325, 3
    %v508 = vpop.permute.xlu0 %507
    %509 = vrot.lane.b32.xlu0 %v326, 3
    %v510 = vpop.permute.xlu0 %509
    %511 = vrot.lane.b32.xlu0 %v327, 3
    %v512 = vpop.permute.xlu0 %511
    %513 = vrot.lane.b32.xlu0 %v328, 3
    %v514 = vpop.permute.xlu0 %513
    %515 = vrot.lane.b32.xlu0 %v329, 3
    %v516 = vpop.permute.xlu0 %515
    %517 = vrot.lane.b32.xlu0 %v330, 3
    %v518 = vpop.permute.xlu0 %517
    %519 = vrot.lane.b32.xlu0 %v331, 3
    %v520 = vpop.permute.xlu0 %519
    %521 = vrot.lane.b32.xlu0 %v332, 3
    %v522 = vpop.permute.xlu0 %521
    %523 = vrot.lane.b32.xlu0 %v333, 3
    %v524 = vpop.permute.xlu0 %523
    %525 = vrot.lane.b32.xlu0 %v334, 3
    %v526 = vpop.permute.xlu0 %525
    %vm591 = vcmask 48152
    %592 = vst.msk [vmem:[%s205 + $0x1] sm:$0xff] %vm591, %v400
    %593 = vst.msk [vmem:[%s205 + $0x9] sm:$0xff] %vm591, %v402
    %594 = vst.msk [vmem:[%s205 + $0x19] sm:$0xff] %vm591, %v404
    %595 = vst.msk [vmem:[%s205 + $0x21] sm:$0xff] %vm591, %v406
    %596 = vst.msk [vmem:[%s205 + $0x31] sm:$0xff] %vm591, %v408
    %597 = vst.msk [vmem:[%s205 + $0x39] sm:$0xff] %vm591, %v410
    %598 = vst.msk [vmem:[%s205 + $0x49] sm:$0xff] %vm591, %v412
    %599 = vst.msk [vmem:[%s205 + $0x51] sm:$0xff] %vm591, %v414
    %600 = vst.msk [vmem:[%s205 + $0x61] sm:$0xff] %vm591, %v416
    %601 = vst.msk [vmem:[%s205 + $0x69] sm:$0xff] %vm591, %v418
    %602 = vst.msk [vmem:[%s205 + $0x79] sm:$0xff] %vm591, %v420
    %603 = vst.msk [vmem:[%s205 + $0x81] sm:$0xff] %vm591, %v422
    %604 = vst.msk [vmem:[%s205 + $0x91] sm:$0xff] %vm591, %v424
    %605 = vst.msk [vmem:[%s205 + $0x99] sm:$0xff] %vm591, %v426
    %606 = vst.msk [vmem:[%s205 + $0xa9] sm:$0xff] %vm591, %v428
    %607 = vst.msk [vmem:[%s205 + $0xb1] sm:$0xff] %vm591, %v430
    %608 = vst.msk [vmem:[%s205 + $0xc1] sm:$0xff] %vm591, %v432
    %609 = vst.msk [vmem:[%s205 + $0xc9] sm:$0xff] %vm591, %v434
    %610 = vst.msk [vmem:[%s205 + $0xd9] sm:$0xff] %vm591, %v436
    %611 = vst.msk [vmem:[%s205 + $0xe1] sm:$0xff] %vm591, %v438
    %612 = vst.msk [vmem:[%s205 + $0xf1] sm:$0xff] %vm591, %v440
    %613 = vst.msk [vmem:[%s205 + $0xf9] sm:$0xff] %vm591, %v442
    %614 = vst.msk [vmem:[%s205 + $0x109] sm:$0xff] %vm591, %v444
    %615 = vst.msk [vmem:[%s205 + $0x111] sm:$0xff] %vm591, %v446
    %616 = vst.msk [vmem:[%s205 + $0x121] sm:$0xff] %vm591, %v448
    %617 = vst.msk [vmem:[%s205 + $0x129] sm:$0xff] %vm591, %v450
    %618 = vst.msk [vmem:[%s205 + $0x139] sm:$0xff] %vm591, %v452
    %619 = vst.msk [vmem:[%s205 + $0x141] sm:$0xff] %vm591, %v454
    %620 = vst.msk [vmem:[%s205 + $0x151] sm:$0xff] %vm591, %v456
    %621 = vst.msk [vmem:[%s205 + $0x159] sm:$0xff] %vm591, %v458
    %622 = vst.msk [vmem:[%s205 + $0x169] sm:$0xff] %vm591, %v460
    %623 = vst.msk [vmem:[%s205 + $0x171] sm:$0xff] %vm591, %v462
    %624 = vst.msk [vmem:[%s205 + $0x1b1] sm:$0xff] %vm591, %v464
    %625 = vst.msk [vmem:[%s205 + $0x1b9] sm:$0xff] %vm591, %v466
    %626 = vst.msk [vmem:[%s205 + $0x1c9] sm:$0xff] %vm591, %v468
    %627 = vst.msk [vmem:[%s205 + $0x1d1] sm:$0xff] %vm591, %v470
    %628 = vst.msk [vmem:[%s205 + $0x1e1] sm:$0xff] %vm591, %v472
    %629 = vst.msk [vmem:[%s205 + $0x1e9] sm:$0xff] %vm591, %v474
    %630 = vst.msk [vmem:[%s205 + $0x1f9] sm:$0xff] %vm591, %v476
    %631 = vst.msk [vmem:[%s205 + $0x201] sm:$0xff] %vm591, %v478
    %632 = vst.msk [vmem:[%s205 + $0x211] sm:$0xff] %vm591, %v480
    %633 = vst.msk [vmem:[%s205 + $0x219] sm:$0xff] %vm591, %v482
    %634 = vst.msk [vmem:[%s205 + $0x229] sm:$0xff] %vm591, %v484
    %635 = vst.msk [vmem:[%s205 + $0x231] sm:$0xff] %vm591, %v486
    %636 = vst.msk [vmem:[%s205 + $0x241] sm:$0xff] %vm591, %v488
    %637 = vst.msk [vmem:[%s205 + $0x249] sm:$0xff] %vm591, %v490
    %638 = vst.msk [vmem:[%s205 + $0x259] sm:$0xff] %vm591, %v492
    %639 = vst.msk [vmem:[%s205 + $0x261] sm:$0xff] %vm591, %v494
    %640 = vst.msk [vmem:[%s205 + $0x271] sm:$0xff] %vm591, %v496
    %641 = vst.msk [vmem:[%s205 + $0x279] sm:$0xff] %vm591, %v498
    %642 = vst.msk [vmem:[%s205 + $0x289] sm:$0xff] %vm591, %v500
    %643 = vst.msk [vmem:[%s205 + $0x291] sm:$0xff] %vm591, %v502
    %644 = vst.msk [vmem:[%s205 + $0x2a1] sm:$0xff] %vm591, %v504
    %645 = vst.msk [vmem:[%s205 + $0x2a9] sm:$0xff] %vm591, %v506
    %646 = vst.msk [vmem:[%s205 + $0x2b9] sm:$0xff] %vm591, %v508
    %647 = vst.msk [vmem:[%s205 + $0x2c1] sm:$0xff] %vm591, %v510
    %648 = vst.msk [vmem:[%s205 + $0x2d1] sm:$0xff] %vm591, %v512
    %649 = vst.msk [vmem:[%s205 + $0x2d9] sm:$0xff] %vm591, %v514
    %650 = vst.msk [vmem:[%s205 + $0x2e9] sm:$0xff] %vm591, %v516
    %651 = vst.msk [vmem:[%s205 + $0x2f1] sm:$0xff] %vm591, %v518
    %652 = vst.msk [vmem:[%s205 + $0x301] sm:$0xff] %vm591, %v520
    %653 = vst.msk [vmem:[%s205 + $0x309] sm:$0xff] %vm591, %v522
    %654 = vst.msk [vmem:[%s205 + $0x319] sm:$0xff] %vm591, %v524
    %655 = vst.msk [vmem:[%s205 + $0x321] sm:$0xff] %vm591, %v526
    %vm656 = vcmask 523264
    %657 = vst.msk [vmem:[#allocation3] sm:$0xff] %vm656, 0.0
    %658 = vst.msk [vmem:[#allocation3 + $0x8] sm:$0xff] %vm656, 0.0
    %659 = vst.msk [vmem:[#allocation3 + $0x10] sm:$0xff] %vm656, 0.0
    %660 = vst.msk [vmem:[#allocation3 + $0x18] sm:$0xff] %vm656, 0.0
    %661 = vst.msk [vmem:[#allocation3 + $0x20] sm:$0xff] %vm656, 0.0
    %662 = vst.msk [vmem:[#allocation3 + $0x28] sm:$0xff] %vm656, 0.0
    %663 = vst.msk [vmem:[#allocation3 + $0x30] sm:$0xff] %vm656, 0.0
    %664 = vst.msk [vmem:[#allocation3 + $0x38] sm:$0xff] %vm656, 0.0
    %665 = vst.msk [vmem:[#allocation3 + $0x40] sm:$0xff] %vm656, 0.0
    %666 = vst.msk [vmem:[#allocation3 + $0x48] sm:$0xff] %vm656, 0.0
    %667 = vst.msk [vmem:[#allocation3 + $0x50] sm:$0xff] %vm656, 0.0
    %668 = vst.msk [vmem:[#allocation3 + $0x58] sm:$0xff] %vm656, 0.0
    %669 = vst.msk [vmem:[#allocation3 + $0x60] sm:$0xff] %vm656, 0.0
    %670 = vst.msk [vmem:[#allocation3 + $0x68] sm:$0xff] %vm656, 0.0
    %671 = vst.msk [vmem:[#allocation3 + $0x70] sm:$0xff] %vm656, 0.0
    %672 = vst.msk [vmem:[#allocation3 + $0x78] sm:$0xff] %vm656, 0.0
    %673 = vst.msk [vmem:[#allocation3 + $0x80] sm:$0xff] %vm656, 0.0
    %674 = vst.msk [vmem:[#allocation3 + $0x88] sm:$0xff] %vm656, 0.0
    %675 = vst.msk [vmem:[#allocation3 + $0x90] sm:$0xff] %vm656, 0.0
    %676 = vst.msk [vmem:[#allocation3 + $0x98] sm:$0xff] %vm656, 0.0
    %677 = vst.msk [vmem:[#allocation3 + $0xa0] sm:$0xff] %vm656, 0.0
    %678 = vst.msk [vmem:[#allocation3 + $0xa8] sm:$0xff] %vm656, 0.0
    %679 = vst.msk [vmem:[#allocation3 + $0xb0] sm:$0xff] %vm656, 0.0
    %680 = vst.msk [vmem:[#allocation3 + $0xb8] sm:$0xff] %vm656, 0.0
    %681 = vst.msk [vmem:[#allocation3 + $0xc0] sm:$0xff] %vm656, 0.0
    %682 = vst.msk [vmem:[#allocation3 + $0xc8] sm:$0xff] %vm656, 0.0
    %683 = vst.msk [vmem:[#allocation3 + $0xd0] sm:$0xff] %vm656, 0.0
    %684 = vst.msk [vmem:[#allocation3 + $0xd8] sm:$0xff] %vm656, 0.0
    %685 = vst.msk [vmem:[#allocation3 + $0xe0] sm:$0xff] %vm656, 0.0
    %686 = vst.msk [vmem:[#allocation3 + $0xe8] sm:$0xff] %vm656, 0.0
    %687 = vst.msk [vmem:[#allocation3 + $0xf0] sm:$0xff] %vm656, 0.0
    %688 = vst.msk [vmem:[#allocation3 + $0xf8] sm:$0xff] %vm656, 0.0
    %689 = vst.msk [vmem:[#allocation3 + $0x100] sm:$0xff] %vm656, 0.0
    %690 = vst.msk [vmem:[#allocation3 + $0x108] sm:$0xff] %vm656, 0.0
    %691 = vst.msk [vmem:[#allocation3 + $0x110] sm:$0xff] %vm656, 0.0
    %692 = vst.msk [vmem:[#allocation3 + $0x118] sm:$0xff] %vm656, 0.0
    %693 = vst.msk [vmem:[#allocation3 + $0x120] sm:$0xff] %vm656, 0.0
    %694 = vst.msk [vmem:[#allocation3 + $0x128] sm:$0xff] %vm656, 0.0
    %695 = vst.msk [vmem:[#allocation3 + $0x130] sm:$0xff] %vm656, 0.0
    %696 = vst.msk [vmem:[#allocation3 + $0x138] sm:$0xff] %vm656, 0.0
    %697 = vst.msk [vmem:[#allocation3 + $0x140] sm:$0xff] %vm656, 0.0
    %698 = vst.msk [vmem:[#allocation3 + $0x148] sm:$0xff] %vm656, 0.0
    %699 = vst.msk [vmem:[#allocation3 + $0x150] sm:$0xff] %vm656, 0.0
    %700 = vst.msk [vmem:[#allocation3 + $0x158] sm:$0xff] %vm656, 0.0
    %701 = vst.msk [vmem:[#allocation3 + $0x160] sm:$0xff] %vm656, 0.0
    %702 = vst.msk [vmem:[#allocation3 + $0x168] sm:$0xff] %vm656, 0.0
    %703 = vst.msk [vmem:[#allocation3 + $0x170] sm:$0xff] %vm656, 0.0
    %704 = vst.msk [vmem:[#allocation3 + $0x178] sm:$0xff] %vm656, 0.0
    %705 = vst.msk [vmem:[#allocation3 + $0x180] sm:$0xff] %vm656, 0.0
    %706 = vst.msk [vmem:[#allocation3 + $0x188] sm:$0xff] %vm656, 0.0
    %707 = vst.msk [vmem:[#allocation3 + $0x190] sm:$0xff] %vm656, 0.0
    %708 = vst.msk [vmem:[#allocation3 + $0x198] sm:$0xff] %vm656, 0.0
    %709 = vst.msk [vmem:[#allocation3 + $0x1a0] sm:$0xff] %vm656, 0.0
    %710 = vst.msk [vmem:[#allocation3 + $0x1a8] sm:$0xff] %vm656, 0.0
    %711 = vst.msk [vmem:[#allocation3 + $0x1b0] sm:$0xff] %vm656, 0.0
    %712 = vst.msk [vmem:[#allocation3 + $0x1b8] sm:$0xff] %vm656, 0.0
    %713 = vst.msk [vmem:[#allocation3 + $0x1c0] sm:$0xff] %vm656, 0.0
    %714 = vst.msk [vmem:[#allocation3 + $0x1c8] sm:$0xff] %vm656, 0.0
    %715 = vst.msk [vmem:[#allocation3 + $0x1d0] sm:$0xff] %vm656, 0.0
    %716 = vst.msk [vmem:[#allocation3 + $0x1d8] sm:$0xff] %vm656, 0.0
    %717 = vst.msk [vmem:[#allocation3 + $0x1e0] sm:$0xff] %vm656, 0.0
    %718 = vst.msk [vmem:[#allocation3 + $0x1e8] sm:$0xff] %vm656, 0.0
    %719 = vst.msk [vmem:[#allocation3 + $0x1f0] sm:$0xff] %vm656, 0.0
    %720 = vst.msk [vmem:[#allocation3 + $0x1f8] sm:$0xff] %vm656, 0.0
    %v721 = vld [vmem:[#allocation2] sm:$0xff]
    %v722 = vld [vmem:[#allocation2 + $0x8] sm:$0xff]
    %v723 = vld [vmem:[#allocation2 + $0x18] sm:$0xff]
    %v724 = vld [vmem:[#allocation2 + $0x20] sm:$0xff]
    %v725 = vld [vmem:[#allocation2 + $0x30] sm:$0xff]
    %v726 = vld [vmem:[#allocation2 + $0x38] sm:$0xff]
    %v727 = vld [vmem:[#allocation2 + $0x48] sm:$0xff]
    %v728 = vld [vmem:[#allocation2 + $0x50] sm:$0xff]
    %v729 = vld [vmem:[#allocation2 + $0x60] sm:$0xff]
    %v730 = vld [vmem:[#allocation2 + $0x68] sm:$0xff]
    %v731 = vld [vmem:[#allocation2 + $0x78] sm:$0xff]
    %v732 = vld [vmem:[#allocation2 + $0x80] sm:$0xff]
    %v733 = vld [vmem:[#allocation2 + $0x90] sm:$0xff]
    %v734 = vld [vmem:[#allocation2 + $0x98] sm:$0xff]
    %v735 = vld [vmem:[#allocation2 + $0xa8] sm:$0xff]
    %v736 = vld [vmem:[#allocation2 + $0xb0] sm:$0xff]
    %v737 = vld [vmem:[#allocation2 + $0xc0] sm:$0xff]
    %v738 = vld [vmem:[#allocation2 + $0xc8] sm:$0xff]
    %v739 = vld [vmem:[#allocation2 + $0xd8] sm:$0xff]
    %v740 = vld [vmem:[#allocation2 + $0xe0] sm:$0xff]
    %v741 = vld [vmem:[#allocation2 + $0xf0] sm:$0xff]
    %v742 = vld [vmem:[#allocation2 + $0xf8] sm:$0xff]
    %v743 = vld [vmem:[#allocation2 + $0x108] sm:$0xff]
    %v744 = vld [vmem:[#allocation2 + $0x110] sm:$0xff]
    %v745 = vld [vmem:[#allocation2 + $0x120] sm:$0xff]
    %v746 = vld [vmem:[#allocation2 + $0x128] sm:$0xff]
    %v747 = vld [vmem:[#allocation2 + $0x138] sm:$0xff]
    %v748 = vld [vmem:[#allocation2 + $0x140] sm:$0xff]
    %v749 = vld [vmem:[#allocation2 + $0x150] sm:$0xff]
    %v750 = vld [vmem:[#allocation2 + $0x158] sm:$0xff]
    %v751 = vld [vmem:[#allocation2 + $0x168] sm:$0xff]
    %v752 = vld [vmem:[#allocation2 + $0x170] sm:$0xff]
    %v753 = vld [vmem:[#allocation2 + $0x1b0] sm:$0xff]
    %v754 = vld [vmem:[#allocation2 + $0x1b8] sm:$0xff]
    %v755 = vld [vmem:[#allocation2 + $0x1c8] sm:$0xff]
    %v756 = vld [vmem:[#allocation2 + $0x1d0] sm:$0xff]
    %v757 = vld [vmem:[#allocation2 + $0x1e0] sm:$0xff]
    %v758 = vld [vmem:[#allocation2 + $0x1e8] sm:$0xff]
    %v759 = vld [vmem:[#allocation2 + $0x1f8] sm:$0xff]
    %v760 = vld [vmem:[#allocation2 + $0x200] sm:$0xff]
    %v761 = vld [vmem:[#allocation2 + $0x210] sm:$0xff]
    %v762 = vld [vmem:[#allocation2 + $0x218] sm:$0xff]
    %v763 = vld [vmem:[#allocation2 + $0x228] sm:$0xff]
    %v764 = vld [vmem:[#allocation2 + $0x230] sm:$0xff]
    %v765 = vld [vmem:[#allocation2 + $0x240] sm:$0xff]
    %v766 = vld [vmem:[#allocation2 + $0x248] sm:$0xff]
    %v767 = vld [vmem:[#allocation2 + $0x258] sm:$0xff]
    %v768 = vld [vmem:[#allocation2 + $0x260] sm:$0xff]
    %v769 = vld [vmem:[#allocation2 + $0x270] sm:$0xff]
    %v770 = vld [vmem:[#allocation2 + $0x278] sm:$0xff]
    %v771 = vld [vmem:[#allocation2 + $0x288] sm:$0xff]
    %v772 = vld [vmem:[#allocation2 + $0x290] sm:$0xff]
    %v773 = vld [vmem:[#allocation2 + $0x2a0] sm:$0xff]
    %v774 = vld [vmem:[#allocation2 + $0x2a8] sm:$0xff]
    %v775 = vld [vmem:[#allocation2 + $0x2b8] sm:$0xff]
    %v776 = vld [vmem:[#allocation2 + $0x2c0] sm:$0xff]
    %v777 = vld [vmem:[#allocation2 + $0x2d0] sm:$0xff]
    %v778 = vld [vmem:[#allocation2 + $0x2d8] sm:$0xff]
    %v779 = vld [vmem:[#allocation2 + $0x2e8] sm:$0xff]
    %v780 = vld [vmem:[#allocation2 + $0x2f0] sm:$0xff]
    %v781 = vld [vmem:[#allocation2 + $0x300] sm:$0xff]
    %v782 = vld [vmem:[#allocation2 + $0x308] sm:$0xff]
    %v783 = vld [vmem:[#allocation2 + $0x318] sm:$0xff]
    %v784 = vld [vmem:[#allocation2 + $0x320] sm:$0xff]
    %785 = vst.msk [vmem:[#allocation3] sm:$0xff] %vm31, %v721
    %786 = vst.msk [vmem:[#allocation3 + $0x8] sm:$0xff] %vm31, %v722
    %787 = vst.msk [vmem:[#allocation3 + $0x10] sm:$0xff] %vm31, %v723
    %788 = vst.msk [vmem:[#allocation3 + $0x18] sm:$0xff] %vm31, %v724
    %789 = vst.msk [vmem:[#allocation3 + $0x20] sm:$0xff] %vm31, %v725
    %790 = vst.msk [vmem:[#allocation3 + $0x28] sm:$0xff] %vm31, %v726
    %791 = vst.msk [vmem:[#allocation3 + $0x30] sm:$0xff] %vm31, %v727
    %792 = vst.msk [vmem:[#allocation3 + $0x38] sm:$0xff] %vm31, %v728
    %793 = vst.msk [vmem:[#allocation3 + $0x40] sm:$0xff] %vm31, %v729
    %794 = vst.msk [vmem:[#allocation3 + $0x48] sm:$0xff] %vm31, %v730
    %795 = vst.msk [vmem:[#allocation3 + $0x50] sm:$0xff] %vm31, %v731
    %796 = vst.msk [vmem:[#allocation3 + $0x58] sm:$0xff] %vm31, %v732
    %797 = vst.msk [vmem:[#allocation3 + $0x60] sm:$0xff] %vm31, %v733
    %798 = vst.msk [vmem:[#allocation3 + $0x68] sm:$0xff] %vm31, %v734
    %799 = vst.msk [vmem:[#allocation3 + $0x70] sm:$0xff] %vm31, %v735
    %800 = vst.msk [vmem:[#allocation3 + $0x78] sm:$0xff] %vm31, %v736
    %801 = vst.msk [vmem:[#allocation3 + $0x80] sm:$0xff] %vm31, %v737
    %802 = vst.msk [vmem:[#allocation3 + $0x88] sm:$0xff] %vm31, %v738
    %803 = vst.msk [vmem:[#allocation3 + $0x90] sm:$0xff] %vm31, %v739
    %804 = vst.msk [vmem:[#allocation3 + $0x98] sm:$0xff] %vm31, %v740
    %805 = vst.msk [vmem:[#allocation3 + $0xa0] sm:$0xff] %vm31, %v741
    %806 = vst.msk [vmem:[#allocation3 + $0xa8] sm:$0xff] %vm31, %v742
    %807 = vst.msk [vmem:[#allocation3 + $0xb0] sm:$0xff] %vm31, %v743
    %808 = vst.msk [vmem:[#allocation3 + $0xb8] sm:$0xff] %vm31, %v744
    %809 = vst.msk [vmem:[#allocation3 + $0xc0] sm:$0xff] %vm31, %v745
    %810 = vst.msk [vmem:[#allocation3 + $0xc8] sm:$0xff] %vm31, %v746
    %811 = vst.msk [vmem:[#allocation3 + $0xd0] sm:$0xff] %vm31, %v747
    %812 = vst.msk [vmem:[#allocation3 + $0xd8] sm:$0xff] %vm31, %v748
    %813 = vst.msk [vmem:[#allocation3 + $0xe0] sm:$0xff] %vm31, %v749
    %814 = vst.msk [vmem:[#allocation3 + $0xe8] sm:$0xff] %vm31, %v750
    %815 = vst.msk [vmem:[#allocation3 + $0xf0] sm:$0xff] %vm31, %v751
    %816 = vst.msk [vmem:[#allocation3 + $0xf8] sm:$0xff] %vm31, %v752
    %817 = vst.msk [vmem:[#allocation3 + $0x100] sm:$0xff] %vm31, %v753
    %818 = vst.msk [vmem:[#allocation3 + $0x108] sm:$0xff] %vm31, %v754
    %819 = vst.msk [vmem:[#allocation3 + $0x110] sm:$0xff] %vm31, %v755
    %820 = vst.msk [vmem:[#allocation3 + $0x118] sm:$0xff] %vm31, %v756
    %821 = vst.msk [vmem:[#allocation3 + $0x120] sm:$0xff] %vm31, %v757
    %822 = vst.msk [vmem:[#allocation3 + $0x128] sm:$0xff] %vm31, %v758
    %823 = vst.msk [vmem:[#allocation3 + $0x130] sm:$0xff] %vm31, %v759
    %824 = vst.msk [vmem:[#allocation3 + $0x138] sm:$0xff] %vm31, %v760
    %825 = vst.msk [vmem:[#allocation3 + $0x140] sm:$0xff] %vm31, %v761
    %826 = vst.msk [vmem:[#allocation3 + $0x148] sm:$0xff] %vm31, %v762
    %827 = vst.msk [vmem:[#allocation3 + $0x150] sm:$0xff] %vm31, %v763
    %828 = vst.msk [vmem:[#allocation3 + $0x158] sm:$0xff] %vm31, %v764
    %829 = vst.msk [vmem:[#allocation3 + $0x160] sm:$0xff] %vm31, %v765
    %830 = vst.msk [vmem:[#allocation3 + $0x168] sm:$0xff] %vm31, %v766
    %831 = vst.msk [vmem:[#allocation3 + $0x170] sm:$0xff] %vm31, %v767
    %832 = vst.msk [vmem:[#allocation3 + $0x178] sm:$0xff] %vm31, %v768
    %833 = vst.msk [vmem:[#allocation3 + $0x180] sm:$0xff] %vm31, %v769
    %834 = vst.msk [vmem:[#allocation3 + $0x188] sm:$0xff] %vm31, %v770
    %835 = vst.msk [vmem:[#allocation3 + $0x190] sm:$0xff] %vm31, %v771
    %836 = vst.msk [vmem:[#allocation3 + $0x198] sm:$0xff] %vm31, %v772
    %837 = vst.msk [vmem:[#allocation3 + $0x1a0] sm:$0xff] %vm31, %v773
    %838 = vst.msk [vmem:[#allocation3 + $0x1a8] sm:$0xff] %vm31, %v774
    %839 = vst.msk [vmem:[#allocation3 + $0x1b0] sm:$0xff] %vm31, %v775
    %840 = vst.msk [vmem:[#allocation3 + $0x1b8] sm:$0xff] %vm31, %v776
    %841 = vst.msk [vmem:[#allocation3 + $0x1c0] sm:$0xff] %vm31, %v777
    %842 = vst.msk [vmem:[#allocation3 + $0x1c8] sm:$0xff] %vm31, %v778
    %843 = vst.msk [vmem:[#allocation3 + $0x1d0] sm:$0xff] %vm31, %v779
    %844 = vst.msk [vmem:[#allocation3 + $0x1d8] sm:$0xff] %vm31, %v780
    %845 = vst.msk [vmem:[#allocation3 + $0x1e0] sm:$0xff] %vm31, %v781
    %846 = vst.msk [vmem:[#allocation3 + $0x1e8] sm:$0xff] %vm31, %v782
    %847 = vst.msk [vmem:[#allocation3 + $0x1f0] sm:$0xff] %vm31, %v783
    %848 = vst.msk [vmem:[#allocation3 + $0x1f8] sm:$0xff] %vm31, %v784
    %v849 = vld [vmem:[#allocation2 + $0x1] sm:$0xff]
    %v850 = vld [vmem:[#allocation2 + $0x9] sm:$0xff]
    %v851 = vld [vmem:[#allocation2 + $0x19] sm:$0xff]
    %v852 = vld [vmem:[#allocation2 + $0x21] sm:$0xff]
    %v853 = vld [vmem:[#allocation2 + $0x31] sm:$0xff]
    %v854 = vld [vmem:[#allocation2 + $0x39] sm:$0xff]
    %v855 = vld [vmem:[#allocation2 + $0x49] sm:$0xff]
    %v856 = vld [vmem:[#allocation2 + $0x51] sm:$0xff]
    %v857 = vld [vmem:[#allocation2 + $0x61] sm:$0xff]
    %v858 = vld [vmem:[#allocation2 + $0x69] sm:$0xff]
    %v859 = vld [vmem:[#allocation2 + $0x79] sm:$0xff]
    %v860 = vld [vmem:[#allocation2 + $0x81] sm:$0xff]
    %v861 = vld [vmem:[#allocation2 + $0x91] sm:$0xff]
    %v862 = vld [vmem:[#allocation2 + $0x99] sm:$0xff]
    %v863 = vld [vmem:[#allocation2 + $0xa9] sm:$0xff]
    %v864 = vld [vmem:[#allocation2 + $0xb1] sm:$0xff]
    %v865 = vld [vmem:[#allocation2 + $0xc1] sm:$0xff]
    %v866 = vld [vmem:[#allocation2 + $0xc9] sm:$0xff]
    %v867 = vld [vmem:[#allocation2 + $0xd9] sm:$0xff]
    %v868 = vld [vmem:[#allocation2 + $0xe1] sm:$0xff]
    %v869 = vld [vmem:[#allocation2 + $0xf1] sm:$0xff]
    %v870 = vld [vmem:[#allocation2 + $0xf9] sm:$0xff]
    %v871 = vld [vmem:[#allocation2 + $0x109] sm:$0xff]
    %v872 = vld [vmem:[#allocation2 + $0x111] sm:$0xff]
    %v873 = vld [vmem:[#allocation2 + $0x121] sm:$0xff]
    %v874 = vld [vmem:[#allocation2 + $0x129] sm:$0xff]
    %v875 = vld [vmem:[#allocation2 + $0x139] sm:$0xff]
    %v876 = vld [vmem:[#allocation2 + $0x141] sm:$0xff]
    %v877 = vld [vmem:[#allocation2 + $0x151] sm:$0xff]
    %v878 = vld [vmem:[#allocation2 + $0x159] sm:$0xff]
    %v879 = vld [vmem:[#allocation2 + $0x169] sm:$0xff]
    %v880 = vld [vmem:[#allocation2 + $0x171] sm:$0xff]
    %v881 = vld [vmem:[#allocation2 + $0x1b1] sm:$0xff]
    %v882 = vld [vmem:[#allocation2 + $0x1b9] sm:$0xff]
    %v883 = vld [vmem:[#allocation2 + $0x1c9] sm:$0xff]
    %v884 = vld [vmem:[#allocation2 + $0x1d1] sm:$0xff]
    %v885 = vld [vmem:[#allocation2 + $0x1e1] sm:$0xff]
    %v886 = vld [vmem:[#allocation2 + $0x1e9] sm:$0xff]
    %v887 = vld [vmem:[#allocation2 + $0x1f9] sm:$0xff]
    %v888 = vld [vmem:[#allocation2 + $0x201] sm:$0xff]
    %v889 = vld [vmem:[#allocation2 + $0x211] sm:$0xff]
    %v890 = vld [vmem:[#allocation2 + $0x219] sm:$0xff]
    %v891 = vld [vmem:[#allocation2 + $0x229] sm:$0xff]
    %v892 = vld [vmem:[#allocation2 + $0x231] sm:$0xff]
    %v893 = vld [vmem:[#allocation2 + $0x241] sm:$0xff]
    %v894 = vld [vmem:[#allocation2 + $0x249] sm:$0xff]
    %v895 = vld [vmem:[#allocation2 + $0x259] sm:$0xff]
    %v896 = vld [vmem:[#allocation2 + $0x261] sm:$0xff]
    %v897 = vld [vmem:[#allocation2 + $0x271] sm:$0xff]
    %v898 = vld [vmem:[#allocation2 + $0x279] sm:$0xff]
    %v899 = vld [vmem:[#allocation2 + $0x289] sm:$0xff]
    %v900 = vld [vmem:[#allocation2 + $0x291] sm:$0xff]
    %v901 = vld [vmem:[#allocation2 + $0x2a1] sm:$0xff]
    %v902 = vld [vmem:[#allocation2 + $0x2a9] sm:$0xff]
    %v903 = vld [vmem:[#allocation2 + $0x2b9] sm:$0xff]
    %v904 = vld [vmem:[#allocation2 + $0x2c1] sm:$0xff]
    %v905 = vld [vmem:[#allocation2 + $0x2d1] sm:$0xff]
    %v906 = vld [vmem:[#allocation2 + $0x2d9] sm:$0xff]
    %v907 = vld [vmem:[#allocation2 + $0x2e9] sm:$0xff]
    %v908 = vld [vmem:[#allocation2 + $0x2f1] sm:$0xff]
    %v909 = vld [vmem:[#allocation2 + $0x301] sm:$0xff]
    %v910 = vld [vmem:[#allocation2 + $0x309] sm:$0xff]
    %v911 = vld [vmem:[#allocation2 + $0x319] sm:$0xff]
    %v912 = vld [vmem:[#allocation2 + $0x321] sm:$0xff]
    %977 = vrot.lane.b32.xlu0 %v849, 6
    %v978 = vpop.permute.xlu0 %977
    %979 = vrot.lane.b32.xlu0 %v850, 6
    %v980 = vpop.permute.xlu0 %979
    %981 = vrot.lane.b32.xlu0 %v851, 6
    %v982 = vpop.permute.xlu0 %981
    %983 = vrot.lane.b32.xlu0 %v852, 6
    %v984 = vpop.permute.xlu0 %983
    %985 = vrot.lane.b32.xlu0 %v853, 6
    %v986 = vpop.permute.xlu0 %985
    %987 = vrot.lane.b32.xlu0 %v854, 6
    %v988 = vpop.permute.xlu0 %987
    %989 = vrot.lane.b32.xlu0 %v855, 6
    %v990 = vpop.permute.xlu0 %989
    %991 = vrot.lane.b32.xlu0 %v856, 6
    %v992 = vpop.permute.xlu0 %991
    %993 = vrot.lane.b32.xlu0 %v857, 6
    %v994 = vpop.permute.xlu0 %993
    %995 = vrot.lane.b32.xlu0 %v858, 6
    %v996 = vpop.permute.xlu0 %995
    %997 = vrot.lane.b32.xlu0 %v859, 6
    %v998 = vpop.permute.xlu0 %997
    %999 = vrot.lane.b32.xlu0 %v860, 6
    %v1000 = vpop.permute.xlu0 %999
    %1001 = vrot.lane.b32.xlu0 %v861, 6
    %v1002 = vpop.permute.xlu0 %1001
    %1003 = vrot.lane.b32.xlu0 %v862, 6
    %v1004 = vpop.permute.xlu0 %1003
    %1005 = vrot.lane.b32.xlu0 %v863, 6
    %v1006 = vpop.permute.xlu0 %1005
    %1007 = vrot.lane.b32.xlu0 %v864, 6
    %v1008 = vpop.permute.xlu0 %1007
    %1009 = vrot.lane.b32.xlu0 %v865, 6
    %v1010 = vpop.permute.xlu0 %1009
    %1011 = vrot.lane.b32.xlu0 %v866, 6
    %v1012 = vpop.permute.xlu0 %1011
    %1013 = vrot.lane.b32.xlu0 %v867, 6
    %v1014 = vpop.permute.xlu0 %1013
    %1015 = vrot.lane.b32.xlu0 %v868, 6
    %v1016 = vpop.permute.xlu0 %1015
    %1017 = vrot.lane.b32.xlu0 %v869, 6
    %v1018 = vpop.permute.xlu0 %1017
    %1019 = vrot.lane.b32.xlu0 %v870, 6
    %v1020 = vpop.permute.xlu0 %1019
    %1021 = vrot.lane.b32.xlu0 %v871, 6
    %v1022 = vpop.permute.xlu0 %1021
    %1023 = vrot.lane.b32.xlu0 %v872, 6
    %v1024 = vpop.permute.xlu0 %1023
    %1025 = vrot.lane.b32.xlu0 %v873, 6
    %v1026 = vpop.permute.xlu0 %1025
    %1027 = vrot.lane.b32.xlu0 %v874, 6
    %v1028 = vpop.permute.xlu0 %1027
    %1029 = vrot.lane.b32.xlu0 %v875, 6
    %v1030 = vpop.permute.xlu0 %1029
    %1031 = vrot.lane.b32.xlu0 %v876, 6
    %v1032 = vpop.permute.xlu0 %1031
    %1033 = vrot.lane.b32.xlu0 %v877, 6
    %v1034 = vpop.permute.xlu0 %1033
    %1035 = vrot.lane.b32.xlu0 %v878, 6
    %v1036 = vpop.permute.xlu0 %1035
    %1037 = vrot.lane.b32.xlu0 %v879, 6
    %v1038 = vpop.permute.xlu0 %1037
    %1039 = vrot.lane.b32.xlu0 %v880, 6
    %v1040 = vpop.permute.xlu0 %1039
    %1041 = vrot.lane.b32.xlu0 %v881, 6
    %v1042 = vpop.permute.xlu0 %1041
    %1043 = vrot.lane.b32.xlu0 %v882, 6
    %v1044 = vpop.permute.xlu0 %1043
    %1045 = vrot.lane.b32.xlu0 %v883, 6
    %v1046 = vpop.permute.xlu0 %1045
    %1047 = vrot.lane.b32.xlu0 %v884, 6
    %v1048 = vpop.permute.xlu0 %1047
    %1049 = vrot.lane.b32.xlu0 %v885, 6
    %v1050 = vpop.permute.xlu0 %1049
    %1051 = vrot.lane.b32.xlu0 %v886, 6
    %v1052 = vpop.permute.xlu0 %1051
    %1053 = vrot.lane.b32.xlu0 %v887, 6
    %v1054 = vpop.permute.xlu0 %1053
    %1055 = vrot.lane.b32.xlu0 %v888, 6
    %v1056 = vpop.permute.xlu0 %1055
    %1057 = vrot.lane.b32.xlu0 %v889, 6
    %v1058 = vpop.permute.xlu0 %1057
    %1059 = vrot.lane.b32.xlu0 %v890, 6
    %v1060 = vpop.permute.xlu0 %1059
    %1061 = vrot.lane.b32.xlu0 %v891, 6
    %v1062 = vpop.permute.xlu0 %1061
    %1063 = vrot.lane.b32.xlu0 %v892, 6
    %v1064 = vpop.permute.xlu0 %1063
    %1065 = vrot.lane.b32.xlu0 %v893, 6
    %v1066 = vpop.permute.xlu0 %1065
    %1067 = vrot.lane.b32.xlu0 %v894, 6
    %v1068 = vpop.permute.xlu0 %1067
    %1069 = vrot.lane.b32.xlu0 %v895, 6
    %v1070 = vpop.permute.xlu0 %1069
    %1071 = vrot.lane.b32.xlu0 %v896, 6
    %v1072 = vpop.permute.xlu0 %1071
    %1073 = vrot.lane.b32.xlu0 %v897, 6
    %v1074 = vpop.permute.xlu0 %1073
    %1075 = vrot.lane.b32.xlu0 %v898, 6
    %v1076 = vpop.permute.xlu0 %1075
    %1077 = vrot.lane.b32.xlu0 %v899, 6
    %v1078 = vpop.permute.xlu0 %1077
    %1079 = vrot.lane.b32.xlu0 %v900, 6
    %v1080 = vpop.permute.xlu0 %1079
    %1081 = vrot.lane.b32.xlu0 %v901, 6
    %v1082 = vpop.permute.xlu0 %1081
    %1083 = vrot.lane.b32.xlu0 %v902, 6
    %v1084 = vpop.permute.xlu0 %1083
    %1085 = vrot.lane.b32.xlu0 %v903, 6
    %v1086 = vpop.permute.xlu0 %1085
    %1087 = vrot.lane.b32.xlu0 %v904, 6
    %v1088 = vpop.permute.xlu0 %1087
    %1089 = vrot.lane.b32.xlu0 %v905, 6
    %v1090 = vpop.permute.xlu0 %1089
    %1091 = vrot.lane.b32.xlu0 %v906, 6
    %v1092 = vpop.permute.xlu0 %1091
    %1093 = vrot.lane.b32.xlu0 %v907, 6
    %v1094 = vpop.permute.xlu0 %1093
    %1095 = vrot.lane.b32.xlu0 %v908, 6
    %v1096 = vpop.permute.xlu0 %1095
    %1097 = vrot.lane.b32.xlu0 %v909, 6
    %v1098 = vpop.permute.xlu0 %1097
    %1099 = vrot.lane.b32.xlu0 %v910, 6
    %v1100 = vpop.permute.xlu0 %1099
    %1101 = vrot.lane.b32.xlu0 %v911, 6
    %v1102 = vpop.permute.xlu0 %1101
    %1103 = vrot.lane.b32.xlu0 %v912, 6
    %v1104 = vpop.permute.xlu0 %1103
    %vm1169 = vcmask 97328
    %1170 = vst.msk [vmem:[#allocation3] sm:$0xff] %vm1169, %v978
    %1171 = vst.msk [vmem:[#allocation3 + $0x8] sm:$0xff] %vm1169, %v980
    %1172 = vst.msk [vmem:[#allocation3 + $0x10] sm:$0xff] %vm1169, %v982
    %1173 = vst.msk [vmem:[#allocation3 + $0x18] sm:$0xff] %vm1169, %v984
    %1174 = vst.msk [vmem:[#allocation3 + $0x20] sm:$0xff] %vm1169, %v986
    %1175 = vst.msk [vmem:[#allocation3 + $0x28] sm:$0xff] %vm1169, %v988
    %1176 = vst.msk [vmem:[#allocation3 + $0x30] sm:$0xff] %vm1169, %v990
    %1177 = vst.msk [vmem:[#allocation3 + $0x38] sm:$0xff] %vm1169, %v992
    %1178 = vst.msk [vmem:[#allocation3 + $0x40] sm:$0xff] %vm1169, %v994
    %1179 = vst.msk [vmem:[#allocation3 + $0x48] sm:$0xff] %vm1169, %v996
    %1180 = vst.msk [vmem:[#allocation3 + $0x50] sm:$0xff] %vm1169, %v998
    %1181 = vst.msk [vmem:[#allocation3 + $0x58] sm:$0xff] %vm1169, %v1000
    %1182 = vst.msk [vmem:[#allocation3 + $0x60] sm:$0xff] %vm1169, %v1002
    %1183 = vst.msk [vmem:[#allocation3 + $0x68] sm:$0xff] %vm1169, %v1004
    %1184 = vst.msk [vmem:[#allocation3 + $0x70] sm:$0xff] %vm1169, %v1006
    %1185 = vst.msk [vmem:[#allocation3 + $0x78] sm:$0xff] %vm1169, %v1008
    %1186 = vst.msk [vmem:[#allocation3 + $0x80] sm:$0xff] %vm1169, %v1010
    %1187 = vst.msk [vmem:[#allocation3 + $0x88] sm:$0xff] %vm1169, %v1012
    %1188 = vst.msk [vmem:[#allocation3 + $0x90] sm:$0xff] %vm1169, %v1014
    %1189 = vst.msk [vmem:[#allocation3 + $0x98] sm:$0xff] %vm1169, %v1016
    %1190 = vst.msk [vmem:[#allocation3 + $0xa0] sm:$0xff] %vm1169, %v1018
    %1191 = vst.msk [vmem:[#allocation3 + $0xa8] sm:$0xff] %vm1169, %v1020
    %1192 = vst.msk [vmem:[#allocation3 + $0xb0] sm:$0xff] %vm1169, %v1022
    %1193 = vst.msk [vmem:[#allocation3 + $0xb8] sm:$0xff] %vm1169, %v1024
    %1194 = vst.msk [vmem:[#allocation3 + $0xc0] sm:$0xff] %vm1169, %v1026
    %1195 = vst.msk [vmem:[#allocation3 + $0xc8] sm:$0xff] %vm1169, %v1028
    %1196 = vst.msk [vmem:[#allocation3 + $0xd0] sm:$0xff] %vm1169, %v1030
    %1197 = vst.msk [vmem:[#allocation3 + $0xd8] sm:$0xff] %vm1169, %v1032
    %1198 = vst.msk [vmem:[#allocation3 + $0xe0] sm:$0xff] %vm1169, %v1034
    %1199 = vst.msk [vmem:[#allocation3 + $0xe8] sm:$0xff] %vm1169, %v1036
    %1200 = vst.msk [vmem:[#allocation3 + $0xf0] sm:$0xff] %vm1169, %v1038
    %1201 = vst.msk [vmem:[#allocation3 + $0xf8] sm:$0xff] %vm1169, %v1040
    %1202 = vst.msk [vmem:[#allocation3 + $0x100] sm:$0xff] %vm1169, %v1042
    %1203 = vst.msk [vmem:[#allocation3 + $0x108] sm:$0xff] %vm1169, %v1044
    %1204 = vst.msk [vmem:[#allocation3 + $0x110] sm:$0xff] %vm1169, %v1046
    %1205 = vst.msk [vmem:[#allocation3 + $0x118] sm:$0xff] %vm1169, %v1048
    %1206 = vst.msk [vmem:[#allocation3 + $0x120] sm:$0xff] %vm1169, %v1050
    %1207 = vst.msk [vmem:[#allocation3 + $0x128] sm:$0xff] %vm1169, %v1052
    %1208 = vst.msk [vmem:[#allocation3 + $0x130] sm:$0xff] %vm1169, %v1054
    %1209 = vst.msk [vmem:[#allocation3 + $0x138] sm:$0xff] %vm1169, %v1056
    %1210 = vst.msk [vmem:[#allocation3 + $0x140] sm:$0xff] %vm1169, %v1058
    %1211 = vst.msk [vmem:[#allocation3 + $0x148] sm:$0xff] %vm1169, %v1060
    %1212 = vst.msk [vmem:[#allocation3 + $0x150] sm:$0xff] %vm1169, %v1062
    %1213 = vst.msk [vmem:[#allocation3 + $0x158] sm:$0xff] %vm1169, %v1064
    %1214 = vst.msk [vmem:[#allocation3 + $0x160] sm:$0xff] %vm1169, %v1066
    %1215 = vst.msk [vmem:[#allocation3 + $0x168] sm:$0xff] %vm1169, %v1068
    %1216 = vst.msk [vmem:[#allocation3 + $0x170] sm:$0xff] %vm1169, %v1070
    %1217 = vst.msk [vmem:[#allocation3 + $0x178] sm:$0xff] %vm1169, %v1072
    %1218 = vst.msk [vmem:[#allocation3 + $0x180] sm:$0xff] %vm1169, %v1074
    %1219 = vst.msk [vmem:[#allocation3 + $0x188] sm:$0xff] %vm1169, %v1076
    %1220 = vst.msk [vmem:[#allocation3 + $0x190] sm:$0xff] %vm1169, %v1078
    %1221 = vst.msk [vmem:[#allocation3 + $0x198] sm:$0xff] %vm1169, %v1080
    %1222 = vst.msk [vmem:[#allocation3 + $0x1a0] sm:$0xff] %vm1169, %v1082
    %1223 = vst.msk [vmem:[#allocation3 + $0x1a8] sm:$0xff] %vm1169, %v1084
    %1224 = vst.msk [vmem:[#allocation3 + $0x1b0] sm:$0xff] %vm1169, %v1086
    %1225 = vst.msk [vmem:[#allocation3 + $0x1b8] sm:$0xff] %vm1169, %v1088
    %1226 = vst.msk [vmem:[#allocation3 + $0x1c0] sm:$0xff] %vm1169, %v1090
    %1227 = vst.msk [vmem:[#allocation3 + $0x1c8] sm:$0xff] %vm1169, %v1092
    %1228 = vst.msk [vmem:[#allocation3 + $0x1d0] sm:$0xff] %vm1169, %v1094
    %1229 = vst.msk [vmem:[#allocation3 + $0x1d8] sm:$0xff] %vm1169, %v1096
    %1230 = vst.msk [vmem:[#allocation3 + $0x1e0] sm:$0xff] %vm1169, %v1098
    %1231 = vst.msk [vmem:[#allocation3 + $0x1e8] sm:$0xff] %vm1169, %v1100
    %1232 = vst.msk [vmem:[#allocation3 + $0x1f0] sm:$0xff] %vm1169, %v1102
    %1233 = vst.msk [vmem:[#allocation3 + $0x1f8] sm:$0xff] %vm1169, %v1104
    %v1234 = vld [vmem:[#allocation2 + $0x2] sm:$0xff]
    %v1235 = vld [vmem:[#allocation2 + $0xa] sm:$0xff]
    %v1236 = vld [vmem:[#allocation2 + $0x1a] sm:$0xff]
    %v1237 = vld [vmem:[#allocation2 + $0x22] sm:$0xff]
    %v1238 = vld [vmem:[#allocation2 + $0x32] sm:$0xff]
    %v1239 = vld [vmem:[#allocation2 + $0x3a] sm:$0xff]
    %v1240 = vld [vmem:[#allocation2 + $0x4a] sm:$0xff]
    %v1241 = vld [vmem:[#allocation2 + $0x52] sm:$0xff]
    %v1242 = vld [vmem:[#allocation2 + $0x62] sm:$0xff]
    %v1243 = vld [vmem:[#allocation2 + $0x6a] sm:$0xff]
    %v1244 = vld [vmem:[#allocation2 + $0x7a] sm:$0xff]
    %v1245 = vld [vmem:[#allocation2 + $0x82] sm:$0xff]
    %v1246 = vld [vmem:[#allocation2 + $0x92] sm:$0xff]
    %v1247 = vld [vmem:[#allocation2 + $0x9a] sm:$0xff]
    %v1248 = vld [vmem:[#allocation2 + $0xaa] sm:$0xff]
    %v1249 = vld [vmem:[#allocation2 + $0xb2] sm:$0xff]
    %v1250 = vld [vmem:[#allocation2 + $0xc2] sm:$0xff]
    %v1251 = vld [vmem:[#allocation2 + $0xca] sm:$0xff]
    %v1252 = vld [vmem:[#allocation2 + $0xda] sm:$0xff]
    %v1253 = vld [vmem:[#allocation2 + $0xe2] sm:$0xff]
    %v1254 = vld [vmem:[#allocation2 + $0xf2] sm:$0xff]
    %v1255 = vld [vmem:[#allocation2 + $0xfa] sm:$0xff]
    %v1256 = vld [vmem:[#allocation2 + $0x10a] sm:$0xff]
    %v1257 = vld [vmem:[#allocation2 + $0x112] sm:$0xff]
    %v1258 = vld [vmem:[#allocation2 + $0x122] sm:$0xff]
    %v1259 = vld [vmem:[#allocation2 + $0x12a] sm:$0xff]
    %v1260 = vld [vmem:[#allocation2 + $0x13a] sm:$0xff]
    %v1261 = vld [vmem:[#allocation2 + $0x142] sm:$0xff]
    %v1262 = vld [vmem:[#allocation2 + $0x152] sm:$0xff]
    %v1263 = vld [vmem:[#allocation2 + $0x15a] sm:$0xff]
    %v1264 = vld [vmem:[#allocation2 + $0x16a] sm:$0xff]
    %v1265 = vld [vmem:[#allocation2 + $0x172] sm:$0xff]
    %v1266 = vld [vmem:[#allocation2 + $0x1b2] sm:$0xff]
    %v1267 = vld [vmem:[#allocation2 + $0x1ba] sm:$0xff]
    %v1268 = vld [vmem:[#allocation2 + $0x1ca] sm:$0xff]
    %v1269 = vld [vmem:[#allocation2 + $0x1d2] sm:$0xff]
    %v1270 = vld [vmem:[#allocation2 + $0x1e2] sm:$0xff]
    %v1271 = vld [vmem:[#allocation2 + $0x1ea] sm:$0xff]
    %v1272 = vld [vmem:[#allocation2 + $0x1fa] sm:$0xff]
    %v1273 = vld [vmem:[#allocation2 + $0x202] sm:$0xff]
    %v1274 = vld [vmem:[#allocation2 + $0x212] sm:$0xff]
    %v1275 = vld [vmem:[#allocation2 + $0x21a] sm:$0xff]
    %v1276 = vld [vmem:[#allocation2 + $0x22a] sm:$0xff]
    %v1277 = vld [vmem:[#allocation2 + $0x232] sm:$0xff]
    %v1278 = vld [vmem:[#allocation2 + $0x242] sm:$0xff]
    %v1279 = vld [vmem:[#allocation2 + $0x24a] sm:$0xff]
    %v1280 = vld [vmem:[#allocation2 + $0x25a] sm:$0xff]
    %v1281 = vld [vmem:[#allocation2 + $0x262] sm:$0xff]
    %v1282 = vld [vmem:[#allocation2 + $0x272] sm:$0xff]
    %v1283 = vld [vmem:[#allocation2 + $0x27a] sm:$0xff]
    %v1284 = vld [vmem:[#allocation2 + $0x28a] sm:$0xff]
    %v1285 = vld [vmem:[#allocation2 + $0x292] sm:$0xff]
    %v1286 = vld [vmem:[#allocation2 + $0x2a2] sm:$0xff]
    %v1287 = vld [vmem:[#allocation2 + $0x2aa] sm:$0xff]
    %v1288 = vld [vmem:[#allocation2 + $0x2ba] sm:$0xff]
    %v1289 = vld [vmem:[#allocation2 + $0x2c2] sm:$0xff]
    %v1290 = vld [vmem:[#allocation2 + $0x2d2] sm:$0xff]
    %v1291 = vld [vmem:[#allocation2 + $0x2da] sm:$0xff]
    %v1292 = vld [vmem:[#allocation2 + $0x2ea] sm:$0xff]
    %v1293 = vld [vmem:[#allocation2 + $0x2f2] sm:$0xff]
    %v1294 = vld [vmem:[#allocation2 + $0x302] sm:$0xff]
    %v1295 = vld [vmem:[#allocation2 + $0x30a] sm:$0xff]
    %v1296 = vld [vmem:[#allocation2 + $0x31a] sm:$0xff]
    %v1297 = vld [vmem:[#allocation2 + $0x322] sm:$0xff]
    %1362 = vrot.lane.b32.xlu0 %v1234, 12
    %v1363 = vpop.permute.xlu0 %1362
    %1364 = vrot.lane.b32.xlu0 %v1235, 12
    %v1365 = vpop.permute.xlu0 %1364
    %1366 = vrot.lane.b32.xlu0 %v1236, 12
    %v1367 = vpop.permute.xlu0 %1366
    %1368 = vrot.lane.b32.xlu0 %v1237, 12
    %v1369 = vpop.permute.xlu0 %1368
    %1370 = vrot.lane.b32.xlu0 %v1238, 12
    %v1371 = vpop.permute.xlu0 %1370
    %1372 = vrot.lane.b32.xlu0 %v1239, 12
    %v1373 = vpop.permute.xlu0 %1372
    %1374 = vrot.lane.b32.xlu0 %v1240, 12
    %v1375 = vpop.permute.xlu0 %1374
    %1376 = vrot.lane.b32.xlu0 %v1241, 12
    %v1377 = vpop.permute.xlu0 %1376
    %1378 = vrot.lane.b32.xlu0 %v1242, 12
    %v1379 = vpop.permute.xlu0 %1378
    %1380 = vrot.lane.b32.xlu0 %v1243, 12
    %v1381 = vpop.permute.xlu0 %1380
    %1382 = vrot.lane.b32.xlu0 %v1244, 12
    %v1383 = vpop.permute.xlu0 %1382
    %1384 = vrot.lane.b32.xlu0 %v1245, 12
    %v1385 = vpop.permute.xlu0 %1384
    %1386 = vrot.lane.b32.xlu0 %v1246, 12
    %v1387 = vpop.permute.xlu0 %1386
    %1388 = vrot.lane.b32.xlu0 %v1247, 12
    %v1389 = vpop.permute.xlu0 %1388
    %1390 = vrot.lane.b32.xlu0 %v1248, 12
    %v1391 = vpop.permute.xlu0 %1390
    %1392 = vrot.lane.b32.xlu0 %v1249, 12
    %v1393 = vpop.permute.xlu0 %1392
    %1394 = vrot.lane.b32.xlu0 %v1250, 12
    %v1395 = vpop.permute.xlu0 %1394
    %1396 = vrot.lane.b32.xlu0 %v1251, 12
    %v1397 = vpop.permute.xlu0 %1396
    %1398 = vrot.lane.b32.xlu0 %v1252, 12
    %v1399 = vpop.permute.xlu0 %1398
    %1400 = vrot.lane.b32.xlu0 %v1253, 12
    %v1401 = vpop.permute.xlu0 %1400
    %1402 = vrot.lane.b32.xlu0 %v1254, 12
    %v1403 = vpop.permute.xlu0 %1402
    %1404 = vrot.lane.b32.xlu0 %v1255, 12
    %v1405 = vpop.permute.xlu0 %1404
    %1406 = vrot.lane.b32.xlu0 %v1256, 12
    %v1407 = vpop.permute.xlu0 %1406
    %1408 = vrot.lane.b32.xlu0 %v1257, 12
    %v1409 = vpop.permute.xlu0 %1408
    %1410 = vrot.lane.b32.xlu0 %v1258, 12
    %v1411 = vpop.permute.xlu0 %1410
    %1412 = vrot.lane.b32.xlu0 %v1259, 12
    %v1413 = vpop.permute.xlu0 %1412
    %1414 = vrot.lane.b32.xlu0 %v1260, 12
    %v1415 = vpop.permute.xlu0 %1414
    %1416 = vrot.lane.b32.xlu0 %v1261, 12
    %v1417 = vpop.permute.xlu0 %1416
    %1418 = vrot.lane.b32.xlu0 %v1262, 12
    %v1419 = vpop.permute.xlu0 %1418
    %1420 = vrot.lane.b32.xlu0 %v1263, 12
    %v1421 = vpop.permute.xlu0 %1420
    %1422 = vrot.lane.b32.xlu0 %v1264, 12
    %v1423 = vpop.permute.xlu0 %1422
    %1424 = vrot.lane.b32.xlu0 %v1265, 12
    %v1425 = vpop.permute.xlu0 %1424
    %1426 = vrot.lane.b32.xlu0 %v1266, 12
    %v1427 = vpop.permute.xlu0 %1426
    %1428 = vrot.lane.b32.xlu0 %v1267, 12
    %v1429 = vpop.permute.xlu0 %1428
    %1430 = vrot.lane.b32.xlu0 %v1268, 12
    %v1431 = vpop.permute.xlu0 %1430
    %1432 = vrot.lane.b32.xlu0 %v1269, 12
    %v1433 = vpop.permute.xlu0 %1432
    %1434 = vrot.lane.b32.xlu0 %v1270, 12
    %v1435 = vpop.permute.xlu0 %1434
    %1436 = vrot.lane.b32.xlu0 %v1271, 12
    %v1437 = vpop.permute.xlu0 %1436
    %1438 = vrot.lane.b32.xlu0 %v1272, 12
    %v1439 = vpop.permute.xlu0 %1438
    %1440 = vrot.lane.b32.xlu0 %v1273, 12
    %v1441 = vpop.permute.xlu0 %1440
    %1442 = vrot.lane.b32.xlu0 %v1274, 12
    %v1443 = vpop.permute.xlu0 %1442
    %1444 = vrot.lane.b32.xlu0 %v1275, 12
    %v1445 = vpop.permute.xlu0 %1444
    %1446 = vrot.lane.b32.xlu0 %v1276, 12
    %v1447 = vpop.permute.xlu0 %1446
    %1448 = vrot.lane.b32.xlu0 %v1277, 12
    %v1449 = vpop.permute.xlu0 %1448
    %1450 = vrot.lane.b32.xlu0 %v1278, 12
    %v1451 = vpop.permute.xlu0 %1450
    %1452 = vrot.lane.b32.xlu0 %v1279, 12
    %v1453 = vpop.permute.xlu0 %1452
    %1454 = vrot.lane.b32.xlu0 %v1280, 12
    %v1455 = vpop.permute.xlu0 %1454
    %1456 = vrot.lane.b32.xlu0 %v1281, 12
    %v1457 = vpop.permute.xlu0 %1456
    %1458 = vrot.lane.b32.xlu0 %v1282, 12
    %v1459 = vpop.permute.xlu0 %1458
    %1460 = vrot.lane.b32.xlu0 %v1283, 12
    %v1461 = vpop.permute.xlu0 %1460
    %1462 = vrot.lane.b32.xlu0 %v1284, 12
    %v1463 = vpop.permute.xlu0 %1462
    %1464 = vrot.lane.b32.xlu0 %v1285, 12
    %v1465 = vpop.permute.xlu0 %1464
    %1466 = vrot.lane.b32.xlu0 %v1286, 12
    %v1467 = vpop.permute.xlu0 %1466
    %1468 = vrot.lane.b32.xlu0 %v1287, 12
    %v1469 = vpop.permute.xlu0 %1468
    %1470 = vrot.lane.b32.xlu0 %v1288, 12
    %v1471 = vpop.permute.xlu0 %1470
    %1472 = vrot.lane.b32.xlu0 %v1289, 12
    %v1473 = vpop.permute.xlu0 %1472
    %1474 = vrot.lane.b32.xlu0 %v1290, 12
    %v1475 = vpop.permute.xlu0 %1474
    %1476 = vrot.lane.b32.xlu0 %v1291, 12
    %v1477 = vpop.permute.xlu0 %1476
    %1478 = vrot.lane.b32.xlu0 %v1292, 12
    %v1479 = vpop.permute.xlu0 %1478
    %1480 = vrot.lane.b32.xlu0 %v1293, 12
    %v1481 = vpop.permute.xlu0 %1480
    %1482 = vrot.lane.b32.xlu0 %v1294, 12
    %v1483 = vpop.permute.xlu0 %1482
    %1484 = vrot.lane.b32.xlu0 %v1295, 12
    %v1485 = vpop.permute.xlu0 %1484
    %1486 = vrot.lane.b32.xlu0 %v1296, 12
    %v1487 = vpop.permute.xlu0 %1486
    %1488 = vrot.lane.b32.xlu0 %v1297, 12
    %v1489 = vpop.permute.xlu0 %1488
    %vm1554 = vcmask 146528
    %1555 = vst.msk [vmem:[#allocation3] sm:$0xff] %vm1554, %v1363
    %1556 = vst.msk [vmem:[#allocation3 + $0x8] sm:$0xff] %vm1554, %v1365
    %1557 = vst.msk [vmem:[#allocation3 + $0x10] sm:$0xff] %vm1554, %v1367
    %1558 = vst.msk [vmem:[#allocation3 + $0x18] sm:$0xff] %vm1554, %v1369
    %1559 = vst.msk [vmem:[#allocation3 + $0x20] sm:$0xff] %vm1554, %v1371
    %1560 = vst.msk [vmem:[#allocation3 + $0x28] sm:$0xff] %vm1554, %v1373
    %1561 = vst.msk [vmem:[#allocation3 + $0x30] sm:$0xff] %vm1554, %v1375
    %1562 = vst.msk [vmem:[#allocation3 + $0x38] sm:$0xff] %vm1554, %v1377
    %1563 = vst.msk [vmem:[#allocation3 + $0x40] sm:$0xff] %vm1554, %v1379
    %1564 = vst.msk [vmem:[#allocation3 + $0x48] sm:$0xff] %vm1554, %v1381
    %1565 = vst.msk [vmem:[#allocation3 + $0x50] sm:$0xff] %vm1554, %v1383
    %1566 = vst.msk [vmem:[#allocation3 + $0x58] sm:$0xff] %vm1554, %v1385
    %1567 = vst.msk [vmem:[#allocation3 + $0x60] sm:$0xff] %vm1554, %v1387
    %1568 = vst.msk [vmem:[#allocation3 + $0x68] sm:$0xff] %vm1554, %v1389
    %1569 = vst.msk [vmem:[#allocation3 + $0x70] sm:$0xff] %vm1554, %v1391
    %1570 = vst.msk [vmem:[#allocation3 + $0x78] sm:$0xff] %vm1554, %v1393
    %1571 = vst.msk [vmem:[#allocation3 + $0x80] sm:$0xff] %vm1554, %v1395
    %1572 = vst.msk [vmem:[#allocation3 + $0x88] sm:$0xff] %vm1554, %v1397
    %1573 = vst.msk [vmem:[#allocation3 + $0x90] sm:$0xff] %vm1554, %v1399
    %1574 = vst.msk [vmem:[#allocation3 + $0x98] sm:$0xff] %vm1554, %v1401
    %1575 = vst.msk [vmem:[#allocation3 + $0xa0] sm:$0xff] %vm1554, %v1403
    %1576 = vst.msk [vmem:[#allocation3 + $0xa8] sm:$0xff] %vm1554, %v1405
    %1577 = vst.msk [vmem:[#allocation3 + $0xb0] sm:$0xff] %vm1554, %v1407
    %1578 = vst.msk [vmem:[#allocation3 + $0xb8] sm:$0xff] %vm1554, %v1409
    %1579 = vst.msk [vmem:[#allocation3 + $0xc0] sm:$0xff] %vm1554, %v1411
    %1580 = vst.msk [vmem:[#allocation3 + $0xc8] sm:$0xff] %vm1554, %v1413
    %1581 = vst.msk [vmem:[#allocation3 + $0xd0] sm:$0xff] %vm1554, %v1415
    %1582 = vst.msk [vmem:[#allocation3 + $0xd8] sm:$0xff] %vm1554, %v1417
    %1583 = vst.msk [vmem:[#allocation3 + $0xe0] sm:$0xff] %vm1554, %v1419
    %1584 = vst.msk [vmem:[#allocation3 + $0xe8] sm:$0xff] %vm1554, %v1421
    %1585 = vst.msk [vmem:[#allocation3 + $0xf0] sm:$0xff] %vm1554, %v1423
    %1586 = vst.msk [vmem:[#allocation3 + $0xf8] sm:$0xff] %vm1554, %v1425
    %1587 = vst.msk [vmem:[#allocation3 + $0x100] sm:$0xff] %vm1554, %v1427
    %1588 = vst.msk [vmem:[#allocation3 + $0x108] sm:$0xff] %vm1554, %v1429
    %1589 = vst.msk [vmem:[#allocation3 + $0x110] sm:$0xff] %vm1554, %v1431
    %1590 = vst.msk [vmem:[#allocation3 + $0x118] sm:$0xff] %vm1554, %v1433
    %1591 = vst.msk [vmem:[#allocation3 + $0x120] sm:$0xff] %vm1554, %v1435
    %1592 = vst.msk [vmem:[#allocation3 + $0x128] sm:$0xff] %vm1554, %v1437
    %1593 = vst.msk [vmem:[#allocation3 + $0x130] sm:$0xff] %vm1554, %v1439
    %1594 = vst.msk [vmem:[#allocation3 + $0x138] sm:$0xff] %vm1554, %v1441
    %1595 = vst.msk [vmem:[#allocation3 + $0x140] sm:$0xff] %vm1554, %v1443
    %1596 = vst.msk [vmem:[#allocation3 + $0x148] sm:$0xff] %vm1554, %v1445
    %1597 = vst.msk [vmem:[#allocation3 + $0x150] sm:$0xff] %vm1554, %v1447
    %1598 = vst.msk [vmem:[#allocation3 + $0x158] sm:$0xff] %vm1554, %v1449
    %1599 = vst.msk [vmem:[#allocation3 + $0x160] sm:$0xff] %vm1554, %v1451
    %1600 = vst.msk [vmem:[#allocation3 + $0x168] sm:$0xff] %vm1554, %v1453
    %1601 = vst.msk [vmem:[#allocation3 + $0x170] sm:$0xff] %vm1554, %v1455
    %1602 = vst.msk [vmem:[#allocation3 + $0x178] sm:$0xff] %vm1554, %v1457
    %1603 = vst.msk [vmem:[#allocation3 + $0x180] sm:$0xff] %vm1554, %v1459
    %1604 = vst.msk [vmem:[#allocation3 + $0x188] sm:$0xff] %vm1554, %v1461
    %1605 = vst.msk [vmem:[#allocation3 + $0x190] sm:$0xff] %vm1554, %v1463
    %1606 = vst.msk [vmem:[#allocation3 + $0x198] sm:$0xff] %vm1554, %v1465
    %1607 = vst.msk [vmem:[#allocation3 + $0x1a0] sm:$0xff] %vm1554, %v1467
    %1608 = vst.msk [vmem:[#allocation3 + $0x1a8] sm:$0xff] %vm1554, %v1469
    %1609 = vst.msk [vmem:[#allocation3 + $0x1b0] sm:$0xff] %vm1554, %v1471
    %1610 = vst.msk [vmem:[#allocation3 + $0x1b8] sm:$0xff] %vm1554, %v1473
    %1611 = vst.msk [vmem:[#allocation3 + $0x1c0] sm:$0xff] %vm1554, %v1475
    %1612 = vst.msk [vmem:[#allocation3 + $0x1c8] sm:$0xff] %vm1554, %v1477
    %1613 = vst.msk [vmem:[#allocation3 + $0x1d0] sm:$0xff] %vm1554, %v1479
    %1614 = vst.msk [vmem:[#allocation3 + $0x1d8] sm:$0xff] %vm1554, %v1481
    %1615 = vst.msk [vmem:[#allocation3 + $0x1e0] sm:$0xff] %vm1554, %v1483
    %1616 = vst.msk [vmem:[#allocation3 + $0x1e8] sm:$0xff] %vm1554, %v1485
    %1617 = vst.msk [vmem:[#allocation3 + $0x1f0] sm:$0xff] %vm1554, %v1487
    %1618 = vst.msk [vmem:[#allocation3 + $0x1f8] sm:$0xff] %vm1554, %v1489
    %v1619 = vld [vmem:[%s205] sm:$0xff]
    %v1620 = vld [vmem:[%s205 + $0x8] sm:$0xff]
    %v1621 = vld [vmem:[%s205 + $0x18] sm:$0xff]
    %v1622 = vld [vmem:[%s205 + $0x20] sm:$0xff]
    %v1623 = vld [vmem:[%s205 + $0x30] sm:$0xff]
    %v1624 = vld [vmem:[%s205 + $0x38] sm:$0xff]
    %v1625 = vld [vmem:[%s205 + $0x48] sm:$0xff]
    %v1626 = vld [vmem:[%s205 + $0x50] sm:$0xff]
    %v1627 = vld [vmem:[%s205 + $0x60] sm:$0xff]
    %v1628 = vld [vmem:[%s205 + $0x68] sm:$0xff]
    %v1629 = vld [vmem:[%s205 + $0x78] sm:$0xff]
    %v1630 = vld [vmem:[%s205 + $0x80] sm:$0xff]
    %v1631 = vld [vmem:[%s205 + $0x90] sm:$0xff]
    %v1632 = vld [vmem:[%s205 + $0x98] sm:$0xff]
    %v1633 = vld [vmem:[%s205 + $0xa8] sm:$0xff]
    %v1634 = vld [vmem:[%s205 + $0xb0] sm:$0xff]
    %v1635 = vld [vmem:[%s205 + $0xc0] sm:$0xff]
    %v1636 = vld [vmem:[%s205 + $0xc8] sm:$0xff]
    %v1637 = vld [vmem:[%s205 + $0xd8] sm:$0xff]
    %v1638 = vld [vmem:[%s205 + $0xe0] sm:$0xff]
    %v1639 = vld [vmem:[%s205 + $0xf0] sm:$0xff]
    %v1640 = vld [vmem:[%s205 + $0xf8] sm:$0xff]
    %v1641 = vld [vmem:[%s205 + $0x108] sm:$0xff]
    %v1642 = vld [vmem:[%s205 + $0x110] sm:$0xff]
    %v1643 = vld [vmem:[%s205 + $0x120] sm:$0xff]
    %v1644 = vld [vmem:[%s205 + $0x128] sm:$0xff]
    %v1645 = vld [vmem:[%s205 + $0x138] sm:$0xff]
    %v1646 = vld [vmem:[%s205 + $0x140] sm:$0xff]
    %v1647 = vld [vmem:[%s205 + $0x150] sm:$0xff]
    %v1648 = vld [vmem:[%s205 + $0x158] sm:$0xff]
    %v1649 = vld [vmem:[%s205 + $0x168] sm:$0xff]
    %v1650 = vld [vmem:[%s205 + $0x170] sm:$0xff]
    %v1651 = vld [vmem:[%s205 + $0x1b0] sm:$0xff]
    %v1652 = vld [vmem:[%s205 + $0x1b8] sm:$0xff]
    %v1653 = vld [vmem:[%s205 + $0x1c8] sm:$0xff]
    %v1654 = vld [vmem:[%s205 + $0x1d0] sm:$0xff]
    %v1655 = vld [vmem:[%s205 + $0x1e0] sm:$0xff]
    %v1656 = vld [vmem:[%s205 + $0x1e8] sm:$0xff]
    %v1657 = vld [vmem:[%s205 + $0x1f8] sm:$0xff]
    %v1658 = vld [vmem:[%s205 + $0x200] sm:$0xff]
    %v1659 = vld [vmem:[%s205 + $0x210] sm:$0xff]
    %v1660 = vld [vmem:[%s205 + $0x218] sm:$0xff]
    %v1661 = vld [vmem:[%s205 + $0x228] sm:$0xff]
    %v1662 = vld [vmem:[%s205 + $0x230] sm:$0xff]
    %v1663 = vld [vmem:[%s205 + $0x240] sm:$0xff]
    %v1664 = vld [vmem:[%s205 + $0x248] sm:$0xff]
    %v1665 = vld [vmem:[%s205 + $0x258] sm:$0xff]
    %v1666 = vld [vmem:[%s205 + $0x260] sm:$0xff]
    %v1667 = vld [vmem:[%s205 + $0x270] sm:$0xff]
    %v1668 = vld [vmem:[%s205 + $0x278] sm:$0xff]
    %v1669 = vld [vmem:[%s205 + $0x288] sm:$0xff]
    %v1670 = vld [vmem:[%s205 + $0x290] sm:$0xff]
    %v1671 = vld [vmem:[%s205 + $0x2a0] sm:$0xff]
    %v1672 = vld [vmem:[%s205 + $0x2a8] sm:$0xff]
    %v1673 = vld [vmem:[%s205 + $0x2b8] sm:$0xff]
    %v1674 = vld [vmem:[%s205 + $0x2c0] sm:$0xff]
    %v1675 = vld [vmem:[%s205 + $0x2d0] sm:$0xff]
    %v1676 = vld [vmem:[%s205 + $0x2d8] sm:$0xff]
    %v1677 = vld [vmem:[%s205 + $0x2e8] sm:$0xff]
    %v1678 = vld [vmem:[%s205 + $0x2f0] sm:$0xff]
    %v1679 = vld [vmem:[%s205 + $0x300] sm:$0xff]
    %v1680 = vld [vmem:[%s205 + $0x308] sm:$0xff]
    %v1681 = vld [vmem:[%s205 + $0x318] sm:$0xff]
    %v1682 = vld [vmem:[%s205 + $0x320] sm:$0xff]
    %1747 = vrot.lane.b32.xlu0 %v1619, 18
    %v1748 = vpop.permute.xlu0 %1747
    %1749 = vrot.lane.b32.xlu0 %v1620, 18
    %v1750 = vpop.permute.xlu0 %1749
    %1751 = vrot.lane.b32.xlu0 %v1621, 18
    %v1752 = vpop.permute.xlu0 %1751
    %1753 = vrot.lane.b32.xlu0 %v1622, 18
    %v1754 = vpop.permute.xlu0 %1753
    %1755 = vrot.lane.b32.xlu0 %v1623, 18
    %v1756 = vpop.permute.xlu0 %1755
    %1757 = vrot.lane.b32.xlu0 %v1624, 18
    %v1758 = vpop.permute.xlu0 %1757
    %1759 = vrot.lane.b32.xlu0 %v1625, 18
    %v1760 = vpop.permute.xlu0 %1759
    %1761 = vrot.lane.b32.xlu0 %v1626, 18
    %v1762 = vpop.permute.xlu0 %1761
    %1763 = vrot.lane.b32.xlu0 %v1627, 18
    %v1764 = vpop.permute.xlu0 %1763
    %1765 = vrot.lane.b32.xlu0 %v1628, 18
    %v1766 = vpop.permute.xlu0 %1765
    %1767 = vrot.lane.b32.xlu0 %v1629, 18
    %v1768 = vpop.permute.xlu0 %1767
    %1769 = vrot.lane.b32.xlu0 %v1630, 18
    %v1770 = vpop.permute.xlu0 %1769
    %1771 = vrot.lane.b32.xlu0 %v1631, 18
    %v1772 = vpop.permute.xlu0 %1771
    %1773 = vrot.lane.b32.xlu0 %v1632, 18
    %v1774 = vpop.permute.xlu0 %1773
    %1775 = vrot.lane.b32.xlu0 %v1633, 18
    %v1776 = vpop.permute.xlu0 %1775
    %1777 = vrot.lane.b32.xlu0 %v1634, 18
    %v1778 = vpop.permute.xlu0 %1777
    %1779 = vrot.lane.b32.xlu0 %v1635, 18
    %v1780 = vpop.permute.xlu0 %1779
    %1781 = vrot.lane.b32.xlu0 %v1636, 18
    %v1782 = vpop.permute.xlu0 %1781
    %1783 = vrot.lane.b32.xlu0 %v1637, 18
    %v1784 = vpop.permute.xlu0 %1783
    %1785 = vrot.lane.b32.xlu0 %v1638, 18
    %v1786 = vpop.permute.xlu0 %1785
    %1787 = vrot.lane.b32.xlu0 %v1639, 18
    %v1788 = vpop.permute.xlu0 %1787
    %1789 = vrot.lane.b32.xlu0 %v1640, 18
    %v1790 = vpop.permute.xlu0 %1789
    %1791 = vrot.lane.b32.xlu0 %v1641, 18
    %v1792 = vpop.permute.xlu0 %1791
    %1793 = vrot.lane.b32.xlu0 %v1642, 18
    %v1794 = vpop.permute.xlu0 %1793
    %1795 = vrot.lane.b32.xlu0 %v1643, 18
    %v1796 = vpop.permute.xlu0 %1795
    %1797 = vrot.lane.b32.xlu0 %v1644, 18
    %v1798 = vpop.permute.xlu0 %1797
    %1799 = vrot.lane.b32.xlu0 %v1645, 18
    %v1800 = vpop.permute.xlu0 %1799
    %1801 = vrot.lane.b32.xlu0 %v1646, 18
    %v1802 = vpop.permute.xlu0 %1801
    %1803 = vrot.lane.b32.xlu0 %v1647, 18
    %v1804 = vpop.permute.xlu0 %1803
    %1805 = vrot.lane.b32.xlu0 %v1648, 18
    %v1806 = vpop.permute.xlu0 %1805
    %1807 = vrot.lane.b32.xlu0 %v1649, 18
    %v1808 = vpop.permute.xlu0 %1807
    %1809 = vrot.lane.b32.xlu0 %v1650, 18
    %v1810 = vpop.permute.xlu0 %1809
    %1811 = vrot.lane.b32.xlu0 %v1651, 18
    %v1812 = vpop.permute.xlu0 %1811
    %1813 = vrot.lane.b32.xlu0 %v1652, 18
    %v1814 = vpop.permute.xlu0 %1813
    %1815 = vrot.lane.b32.xlu0 %v1653, 18
    %v1816 = vpop.permute.xlu0 %1815
    %1817 = vrot.lane.b32.xlu0 %v1654, 18
    %v1818 = vpop.permute.xlu0 %1817
    %1819 = vrot.lane.b32.xlu0 %v1655, 18
    %v1820 = vpop.permute.xlu0 %1819
    %1821 = vrot.lane.b32.xlu0 %v1656, 18
    %v1822 = vpop.permute.xlu0 %1821
    %1823 = vrot.lane.b32.xlu0 %v1657, 18
    %v1824 = vpop.permute.xlu0 %1823
    %1825 = vrot.lane.b32.xlu0 %v1658, 18
    %v1826 = vpop.permute.xlu0 %1825
    %1827 = vrot.lane.b32.xlu0 %v1659, 18
    %v1828 = vpop.permute.xlu0 %1827
    %1829 = vrot.lane.b32.xlu0 %v1660, 18
    %v1830 = vpop.permute.xlu0 %1829
    %1831 = vrot.lane.b32.xlu0 %v1661, 18
    %v1832 = vpop.permute.xlu0 %1831
    %1833 = vrot.lane.b32.xlu0 %v1662, 18
    %v1834 = vpop.permute.xlu0 %1833
    %1835 = vrot.lane.b32.xlu0 %v1663, 18
    %v1836 = vpop.permute.xlu0 %1835
    %1837 = vrot.lane.b32.xlu0 %v1664, 18
    %v1838 = vpop.permute.xlu0 %1837
    %1839 = vrot.lane.b32.xlu0 %v1665, 18
    %v1840 = vpop.permute.xlu0 %1839
    %1841 = vrot.lane.b32.xlu0 %v1666, 18
    %v1842 = vpop.permute.xlu0 %1841
    %1843 = vrot.lane.b32.xlu0 %v1667, 18
    %v1844 = vpop.permute.xlu0 %1843
    %1845 = vrot.lane.b32.xlu0 %v1668, 18
    %v1846 = vpop.permute.xlu0 %1845
    %1847 = vrot.lane.b32.xlu0 %v1669, 18
    %v1848 = vpop.permute.xlu0 %1847
    %1849 = vrot.lane.b32.xlu0 %v1670, 18
    %v1850 = vpop.permute.xlu0 %1849
    %1851 = vrot.lane.b32.xlu0 %v1671, 18
    %v1852 = vpop.permute.xlu0 %1851
    %1853 = vrot.lane.b32.xlu0 %v1672, 18
    %v1854 = vpop.permute.xlu0 %1853
    %1855 = vrot.lane.b32.xlu0 %v1673, 18
    %v1856 = vpop.permute.xlu0 %1855
    %1857 = vrot.lane.b32.xlu0 %v1674, 18
    %v1858 = vpop.permute.xlu0 %1857
    %1859 = vrot.lane.b32.xlu0 %v1675, 18
    %v1860 = vpop.permute.xlu0 %1859
    %1861 = vrot.lane.b32.xlu0 %v1676, 18
    %v1862 = vpop.permute.xlu0 %1861
    %1863 = vrot.lane.b32.xlu0 %v1677, 18
    %v1864 = vpop.permute.xlu0 %1863
    %1865 = vrot.lane.b32.xlu0 %v1678, 18
    %v1866 = vpop.permute.xlu0 %1865
    %1867 = vrot.lane.b32.xlu0 %v1679, 18
    %v1868 = vpop.permute.xlu0 %1867
    %1869 = vrot.lane.b32.xlu0 %v1680, 18
    %v1870 = vpop.permute.xlu0 %1869
    %1871 = vrot.lane.b32.xlu0 %v1681, 18
    %v1872 = vpop.permute.xlu0 %1871
    %1873 = vrot.lane.b32.xlu0 %v1682, 18
    %v1874 = vpop.permute.xlu0 %1873
    %vm1939 = vcmask 195728
    %1940 = vst.msk [vmem:[#allocation3] sm:$0xff] %vm1939, %v1748
    %1941 = vst.msk [vmem:[#allocation3 + $0x8] sm:$0xff] %vm1939, %v1750
    %1942 = vst.msk [vmem:[#allocation3 + $0x10] sm:$0xff] %vm1939, %v1752
    %1943 = vst.msk [vmem:[#allocation3 + $0x18] sm:$0xff] %vm1939, %v1754
    %1944 = vst.msk [vmem:[#allocation3 + $0x20] sm:$0xff] %vm1939, %v1756
    %1945 = vst.msk [vmem:[#allocation3 + $0x28] sm:$0xff] %vm1939, %v1758
    %1946 = vst.msk [vmem:[#allocation3 + $0x30] sm:$0xff] %vm1939, %v1760
    %1947 = vst.msk [vmem:[#allocation3 + $0x38] sm:$0xff] %vm1939, %v1762
    %1948 = vst.msk [vmem:[#allocation3 + $0x40] sm:$0xff] %vm1939, %v1764
    %1949 = vst.msk [vmem:[#allocation3 + $0x48] sm:$0xff] %vm1939, %v1766
    %1950 = vst.msk [vmem:[#allocation3 + $0x50] sm:$0xff] %vm1939, %v1768
    %1951 = vst.msk [vmem:[#allocation3 + $0x58] sm:$0xff] %vm1939, %v1770
    %1952 = vst.msk [vmem:[#allocation3 + $0x60] sm:$0xff] %vm1939, %v1772
    %1953 = vst.msk [vmem:[#allocation3 + $0x68] sm:$0xff] %vm1939, %v1774
    %1954 = vst.msk [vmem:[#allocation3 + $0x70] sm:$0xff] %vm1939, %v1776
    %1955 = vst.msk [vmem:[#allocation3 + $0x78] sm:$0xff] %vm1939, %v1778
    %1956 = vst.msk [vmem:[#allocation3 + $0x80] sm:$0xff] %vm1939, %v1780
    %1957 = vst.msk [vmem:[#allocation3 + $0x88] sm:$0xff] %vm1939, %v1782
    %1958 = vst.msk [vmem:[#allocation3 + $0x90] sm:$0xff] %vm1939, %v1784
    %1959 = vst.msk [vmem:[#allocation3 + $0x98] sm:$0xff] %vm1939, %v1786
    %1960 = vst.msk [vmem:[#allocation3 + $0xa0] sm:$0xff] %vm1939, %v1788
    %1961 = vst.msk [vmem:[#allocation3 + $0xa8] sm:$0xff] %vm1939, %v1790
    %1962 = vst.msk [vmem:[#allocation3 + $0xb0] sm:$0xff] %vm1939, %v1792
    %1963 = vst.msk [vmem:[#allocation3 + $0xb8] sm:$0xff] %vm1939, %v1794
    %1964 = vst.msk [vmem:[#allocation3 + $0xc0] sm:$0xff] %vm1939, %v1796
    %1965 = vst.msk [vmem:[#allocation3 + $0xc8] sm:$0xff] %vm1939, %v1798
    %1966 = vst.msk [vmem:[#allocation3 + $0xd0] sm:$0xff] %vm1939, %v1800
    %1967 = vst.msk [vmem:[#allocation3 + $0xd8] sm:$0xff] %vm1939, %v1802
    %1968 = vst.msk [vmem:[#allocation3 + $0xe0] sm:$0xff] %vm1939, %v1804
    %1969 = vst.msk [vmem:[#allocation3 + $0xe8] sm:$0xff] %vm1939, %v1806
    %1970 = vst.msk [vmem:[#allocation3 + $0xf0] sm:$0xff] %vm1939, %v1808
    %1971 = vst.msk [vmem:[#allocation3 + $0xf8] sm:$0xff] %vm1939, %v1810
    %1972 = vst.msk [vmem:[#allocation3 + $0x100] sm:$0xff] %vm1939, %v1812
    %1973 = vst.msk [vmem:[#allocation3 + $0x108] sm:$0xff] %vm1939, %v1814
    %1974 = vst.msk [vmem:[#allocation3 + $0x110] sm:$0xff] %vm1939, %v1816
    %1975 = vst.msk [vmem:[#allocation3 + $0x118] sm:$0xff] %vm1939, %v1818
    %1976 = vst.msk [vmem:[#allocation3 + $0x120] sm:$0xff] %vm1939, %v1820
    %1977 = vst.msk [vmem:[#allocation3 + $0x128] sm:$0xff] %vm1939, %v1822
    %1978 = vst.msk [vmem:[#allocation3 + $0x130] sm:$0xff] %vm1939, %v1824
    %1979 = vst.msk [vmem:[#allocation3 + $0x138] sm:$0xff] %vm1939, %v1826
    %1980 = vst.msk [vmem:[#allocation3 + $0x140] sm:$0xff] %vm1939, %v1828
    %1981 = vst.msk [vmem:[#allocation3 + $0x148] sm:$0xff] %vm1939, %v1830
    %1982 = vst.msk [vmem:[#allocation3 + $0x150] sm:$0xff] %vm1939, %v1832
    %1983 = vst.msk [vmem:[#allocation3 + $0x158] sm:$0xff] %vm1939, %v1834
    %1984 = vst.msk [vmem:[#allocation3 + $0x160] sm:$0xff] %vm1939, %v1836
    %1985 = vst.msk [vmem:[#allocation3 + $0x168] sm:$0xff] %vm1939, %v1838
    %1986 = vst.msk [vmem:[#allocation3 + $0x170] sm:$0xff] %vm1939, %v1840
    %1987 = vst.msk [vmem:[#allocation3 + $0x178] sm:$0xff] %vm1939, %v1842
    %1988 = vst.msk [vmem:[#allocation3 + $0x180] sm:$0xff] %vm1939, %v1844
    %1989 = vst.msk [vmem:[#allocation3 + $0x188] sm:$0xff] %vm1939, %v1846
    %1990 = vst.msk [vmem:[#allocation3 + $0x190] sm:$0xff] %vm1939, %v1848
    %1991 = vst.msk [vmem:[#allocation3 + $0x198] sm:$0xff] %vm1939, %v1850
    %1992 = vst.msk [vmem:[#allocation3 + $0x1a0] sm:$0xff] %vm1939, %v1852
    %1993 = vst.msk [vmem:[#allocation3 + $0x1a8] sm:$0xff] %vm1939, %v1854
    %1994 = vst.msk [vmem:[#allocation3 + $0x1b0] sm:$0xff] %vm1939, %v1856
    %1995 = vst.msk [vmem:[#allocation3 + $0x1b8] sm:$0xff] %vm1939, %v1858
    %1996 = vst.msk [vmem:[#allocation3 + $0x1c0] sm:$0xff] %vm1939, %v1860
    %1997 = vst.msk [vmem:[#allocation3 + $0x1c8] sm:$0xff] %vm1939, %v1862
    %1998 = vst.msk [vmem:[#allocation3 + $0x1d0] sm:$0xff] %vm1939, %v1864
    %1999 = vst.msk [vmem:[#allocation3 + $0x1d8] sm:$0xff] %vm1939, %v1866
    %2000 = vst.msk [vmem:[#allocation3 + $0x1e0] sm:$0xff] %vm1939, %v1868
    %2001 = vst.msk [vmem:[#allocation3 + $0x1e8] sm:$0xff] %vm1939, %v1870
    %2002 = vst.msk [vmem:[#allocation3 + $0x1f0] sm:$0xff] %vm1939, %v1872
    %2003 = vst.msk [vmem:[#allocation3 + $0x1f8] sm:$0xff] %vm1939, %v1874
    %v2004 = vld [vmem:[%s205 + $0x1] sm:$0xff]
    %v2005 = vld [vmem:[%s205 + $0x9] sm:$0xff]
    %v2006 = vld [vmem:[%s205 + $0x19] sm:$0xff]
    %v2007 = vld [vmem:[%s205 + $0x21] sm:$0xff]
    %v2008 = vld [vmem:[%s205 + $0x31] sm:$0xff]
    %v2009 = vld [vmem:[%s205 + $0x39] sm:$0xff]
    %v2010 = vld [vmem:[%s205 + $0x49] sm:$0xff]
    %v2011 = vld [vmem:[%s205 + $0x51] sm:$0xff]
    %v2012 = vld [vmem:[%s205 + $0x61] sm:$0xff]
    %v2013 = vld [vmem:[%s205 + $0x69] sm:$0xff]
    %v2014 = vld [vmem:[%s205 + $0x79] sm:$0xff]
    %v2015 = vld [vmem:[%s205 + $0x81] sm:$0xff]
    %v2016 = vld [vmem:[%s205 + $0x91] sm:$0xff]
    %v2017 = vld [vmem:[%s205 + $0x99] sm:$0xff]
    %v2018 = vld [vmem:[%s205 + $0xa9] sm:$0xff]
    %v2019 = vld [vmem:[%s205 + $0xb1] sm:$0xff]
    %v2020 = vld [vmem:[%s205 + $0xc1] sm:$0xff]
    %v2021 = vld [vmem:[%s205 + $0xc9] sm:$0xff]
    %v2022 = vld [vmem:[%s205 + $0xd9] sm:$0xff]
    %v2023 = vld [vmem:[%s205 + $0xe1] sm:$0xff]
    %v2024 = vld [vmem:[%s205 + $0xf1] sm:$0xff]
    %v2025 = vld [vmem:[%s205 + $0xf9] sm:$0xff]
    %v2026 = vld [vmem:[%s205 + $0x109] sm:$0xff]
    %v2027 = vld [vmem:[%s205 + $0x111] sm:$0xff]
    %v2028 = vld [vmem:[%s205 + $0x121] sm:$0xff]
    %v2029 = vld [vmem:[%s205 + $0x129] sm:$0xff]
    %v2030 = vld [vmem:[%s205 + $0x139] sm:$0xff]
    %v2031 = vld [vmem:[%s205 + $0x141] sm:$0xff]
    %v2032 = vld [vmem:[%s205 + $0x151] sm:$0xff]
    %v2033 = vld [vmem:[%s205 + $0x159] sm:$0xff]
    %v2034 = vld [vmem:[%s205 + $0x169] sm:$0xff]
    %v2035 = vld [vmem:[%s205 + $0x171] sm:$0xff]
    %v2036 = vld [vmem:[%s205 + $0x1b1] sm:$0xff]
    %v2037 = vld [vmem:[%s205 + $0x1b9] sm:$0xff]
    %v2038 = vld [vmem:[%s205 + $0x1c9] sm:$0xff]
    %v2039 = vld [vmem:[%s205 + $0x1d1] sm:$0xff]
    %v2040 = vld [vmem:[%s205 + $0x1e1] sm:$0xff]
    %v2041 = vld [vmem:[%s205 + $0x1e9] sm:$0xff]
    %v2042 = vld [vmem:[%s205 + $0x1f9] sm:$0xff]
    %v2043 = vld [vmem:[%s205 + $0x201] sm:$0xff]
    %v2044 = vld [vmem:[%s205 + $0x211] sm:$0xff]
    %v2045 = vld [vmem:[%s205 + $0x219] sm:$0xff]
    %v2046 = vld [vmem:[%s205 + $0x229] sm:$0xff]
    %v2047 = vld [vmem:[%s205 + $0x231] sm:$0xff]
    %v2048 = vld [vmem:[%s205 + $0x241] sm:$0xff]
    %v2049 = vld [vmem:[%s205 + $0x249] sm:$0xff]
    %v2050 = vld [vmem:[%s205 + $0x259] sm:$0xff]
    %v2051 = vld [vmem:[%s205 + $0x261] sm:$0xff]
    %v2052 = vld [vmem:[%s205 + $0x271] sm:$0xff]
    %v2053 = vld [vmem:[%s205 + $0x279] sm:$0xff]
    %v2054 = vld [vmem:[%s205 + $0x289] sm:$0xff]
    %v2055 = vld [vmem:[%s205 + $0x291] sm:$0xff]
    %v2056 = vld [vmem:[%s205 + $0x2a1] sm:$0xff]
    %v2057 = vld [vmem:[%s205 + $0x2a9] sm:$0xff]
    %v2058 = vld [vmem:[%s205 + $0x2b9] sm:$0xff]
    %v2059 = vld [vmem:[%s205 + $0x2c1] sm:$0xff]
    %v2060 = vld [vmem:[%s205 + $0x2d1] sm:$0xff]
    %v2061 = vld [vmem:[%s205 + $0x2d9] sm:$0xff]
    %v2062 = vld [vmem:[%s205 + $0x2e9] sm:$0xff]
    %v2063 = vld [vmem:[%s205 + $0x2f1] sm:$0xff]
    %v2064 = vld [vmem:[%s205 + $0x301] sm:$0xff]
    %v2065 = vld [vmem:[%s205 + $0x309] sm:$0xff]
    %v2066 = vld [vmem:[%s205 + $0x319] sm:$0xff]
    %v2067 = vld [vmem:[%s205 + $0x321] sm:$0xff]
    %2132 = vrot.lane.b32.xlu0 %v2004, 24
    %v2133 = vpop.permute.xlu0 %2132
    %2134 = vrot.lane.b32.xlu0 %v2005, 24
    %v2135 = vpop.permute.xlu0 %2134
    %2136 = vrot.lane.b32.xlu0 %v2006, 24
    %v2137 = vpop.permute.xlu0 %2136
    %2138 = vrot.lane.b32.xlu0 %v2007, 24
    %v2139 = vpop.permute.xlu0 %2138
    %2140 = vrot.lane.b32.xlu0 %v2008, 24
    %v2141 = vpop.permute.xlu0 %2140
    %2142 = vrot.lane.b32.xlu0 %v2009, 24
    %v2143 = vpop.permute.xlu0 %2142
    %2144 = vrot.lane.b32.xlu0 %v2010, 24
    %v2145 = vpop.permute.xlu0 %2144
    %2146 = vrot.lane.b32.xlu0 %v2011, 24
    %v2147 = vpop.permute.xlu0 %2146
    %2148 = vrot.lane.b32.xlu0 %v2012, 24
    %v2149 = vpop.permute.xlu0 %2148
    %2150 = vrot.lane.b32.xlu0 %v2013, 24
    %v2151 = vpop.permute.xlu0 %2150
    %2152 = vrot.lane.b32.xlu0 %v2014, 24
    %v2153 = vpop.permute.xlu0 %2152
    %2154 = vrot.lane.b32.xlu0 %v2015, 24
    %v2155 = vpop.permute.xlu0 %2154
    %2156 = vrot.lane.b32.xlu0 %v2016, 24
    %v2157 = vpop.permute.xlu0 %2156
    %2158 = vrot.lane.b32.xlu0 %v2017, 24
    %v2159 = vpop.permute.xlu0 %2158
    %2160 = vrot.lane.b32.xlu0 %v2018, 24
    %v2161 = vpop.permute.xlu0 %2160
    %2162 = vrot.lane.b32.xlu0 %v2019, 24
    %v2163 = vpop.permute.xlu0 %2162
    %2164 = vrot.lane.b32.xlu0 %v2020, 24
    %v2165 = vpop.permute.xlu0 %2164
    %2166 = vrot.lane.b32.xlu0 %v2021, 24
    %v2167 = vpop.permute.xlu0 %2166
    %2168 = vrot.lane.b32.xlu0 %v2022, 24
    %v2169 = vpop.permute.xlu0 %2168
    %2170 = vrot.lane.b32.xlu0 %v2023, 24
    %v2171 = vpop.permute.xlu0 %2170
    %2172 = vrot.lane.b32.xlu0 %v2024, 24
    %v2173 = vpop.permute.xlu0 %2172
    %2174 = vrot.lane.b32.xlu0 %v2025, 24
    %v2175 = vpop.permute.xlu0 %2174
    %2176 = vrot.lane.b32.xlu0 %v2026, 24
    %v2177 = vpop.permute.xlu0 %2176
    %2178 = vrot.lane.b32.xlu0 %v2027, 24
    %v2179 = vpop.permute.xlu0 %2178
    %2180 = vrot.lane.b32.xlu0 %v2028, 24
    %v2181 = vpop.permute.xlu0 %2180
    %2182 = vrot.lane.b32.xlu0 %v2029, 24
    %v2183 = vpop.permute.xlu0 %2182
    %2184 = vrot.lane.b32.xlu0 %v2030, 24
    %v2185 = vpop.permute.xlu0 %2184
    %2186 = vrot.lane.b32.xlu0 %v2031, 24
    %v2187 = vpop.permute.xlu0 %2186
    %2188 = vrot.lane.b32.xlu0 %v2032, 24
    %v2189 = vpop.permute.xlu0 %2188
    %2190 = vrot.lane.b32.xlu0 %v2033, 24
    %v2191 = vpop.permute.xlu0 %2190
    %2192 = vrot.lane.b32.xlu0 %v2034, 24
    %v2193 = vpop.permute.xlu0 %2192
    %2194 = vrot.lane.b32.xlu0 %v2035, 24
    %v2195 = vpop.permute.xlu0 %2194
    %2196 = vrot.lane.b32.xlu0 %v2036, 24
    %v2197 = vpop.permute.xlu0 %2196
    %2198 = vrot.lane.b32.xlu0 %v2037, 24
    %v2199 = vpop.permute.xlu0 %2198
    %2200 = vrot.lane.b32.xlu0 %v2038, 24
    %v2201 = vpop.permute.xlu0 %2200
    %2202 = vrot.lane.b32.xlu0 %v2039, 24
    %v2203 = vpop.permute.xlu0 %2202
    %2204 = vrot.lane.b32.xlu0 %v2040, 24
    %v2205 = vpop.permute.xlu0 %2204
    %2206 = vrot.lane.b32.xlu0 %v2041, 24
    %v2207 = vpop.permute.xlu0 %2206
    %2208 = vrot.lane.b32.xlu0 %v2042, 24
    %v2209 = vpop.permute.xlu0 %2208
    %2210 = vrot.lane.b32.xlu0 %v2043, 24
    %v2211 = vpop.permute.xlu0 %2210
    %2212 = vrot.lane.b32.xlu0 %v2044, 24
    %v2213 = vpop.permute.xlu0 %2212
    %2214 = vrot.lane.b32.xlu0 %v2045, 24
    %v2215 = vpop.permute.xlu0 %2214
    %2216 = vrot.lane.b32.xlu0 %v2046, 24
    %v2217 = vpop.permute.xlu0 %2216
    %2218 = vrot.lane.b32.xlu0 %v2047, 24
    %v2219 = vpop.permute.xlu0 %2218
    %2220 = vrot.lane.b32.xlu0 %v2048, 24
    %v2221 = vpop.permute.xlu0 %2220
    %2222 = vrot.lane.b32.xlu0 %v2049, 24
    %v2223 = vpop.permute.xlu0 %2222
    %2224 = vrot.lane.b32.xlu0 %v2050, 24
    %v2225 = vpop.permute.xlu0 %2224
    %2226 = vrot.lane.b32.xlu0 %v2051, 24
    %v2227 = vpop.permute.xlu0 %2226
    %2228 = vrot.lane.b32.xlu0 %v2052, 24
    %v2229 = vpop.permute.xlu0 %2228
    %2230 = vrot.lane.b32.xlu0 %v2053, 24
    %v2231 = vpop.permute.xlu0 %2230
    %2232 = vrot.lane.b32.xlu0 %v2054, 24
    %v2233 = vpop.permute.xlu0 %2232
    %2234 = vrot.lane.b32.xlu0 %v2055, 24
    %v2235 = vpop.permute.xlu0 %2234
    %2236 = vrot.lane.b32.xlu0 %v2056, 24
    %v2237 = vpop.permute.xlu0 %2236
    %2238 = vrot.lane.b32.xlu0 %v2057, 24
    %v2239 = vpop.permute.xlu0 %2238
    %2240 = vrot.lane.b32.xlu0 %v2058, 24
    %v2241 = vpop.permute.xlu0 %2240
    %2242 = vrot.lane.b32.xlu0 %v2059, 24
    %v2243 = vpop.permute.xlu0 %2242
    %2244 = vrot.lane.b32.xlu0 %v2060, 24
    %v2245 = vpop.permute.xlu0 %2244
    %2246 = vrot.lane.b32.xlu0 %v2061, 24
    %v2247 = vpop.permute.xlu0 %2246
    %2248 = vrot.lane.b32.xlu0 %v2062, 24
    %v2249 = vpop.permute.xlu0 %2248
    %2250 = vrot.lane.b32.xlu0 %v2063, 24
    %v2251 = vpop.permute.xlu0 %2250
    %2252 = vrot.lane.b32.xlu0 %v2064, 24
    %v2253 = vpop.permute.xlu0 %2252
    %2254 = vrot.lane.b32.xlu0 %v2065, 24
    %v2255 = vpop.permute.xlu0 %2254
    %2256 = vrot.lane.b32.xlu0 %v2066, 24
    %v2257 = vpop.permute.xlu0 %2256
    %2258 = vrot.lane.b32.xlu0 %v2067, 24
    %v2259 = vpop.permute.xlu0 %2258
    %vm2324 = vcmask 244928
    %2325 = vst.msk [vmem:[#allocation3] sm:$0xff] %vm2324, %v2133
    %2326 = vst.msk [vmem:[#allocation3 + $0x8] sm:$0xff] %vm2324, %v2135
    %2327 = vst.msk [vmem:[#allocation3 + $0x10] sm:$0xff] %vm2324, %v2137
    %2328 = vst.msk [vmem:[#allocation3 + $0x18] sm:$0xff] %vm2324, %v2139
    %2329 = vst.msk [vmem:[#allocation3 + $0x20] sm:$0xff] %vm2324, %v2141
    %2330 = vst.msk [vmem:[#allocation3 + $0x28] sm:$0xff] %vm2324, %v2143
    %2331 = vst.msk [vmem:[#allocation3 + $0x30] sm:$0xff] %vm2324, %v2145
    %2332 = vst.msk [vmem:[#allocation3 + $0x38] sm:$0xff] %vm2324, %v2147
    %2333 = vst.msk [vmem:[#allocation3 + $0x40] sm:$0xff] %vm2324, %v2149
    %2334 = vst.msk [vmem:[#allocation3 + $0x48] sm:$0xff] %vm2324, %v2151
    %2335 = vst.msk [vmem:[#allocation3 + $0x50] sm:$0xff] %vm2324, %v2153
    %2336 = vst.msk [vmem:[#allocation3 + $0x58] sm:$0xff] %vm2324, %v2155
    %2337 = vst.msk [vmem:[#allocation3 + $0x60] sm:$0xff] %vm2324, %v2157
    %2338 = vst.msk [vmem:[#allocation3 + $0x68] sm:$0xff] %vm2324, %v2159
    %2339 = vst.msk [vmem:[#allocation3 + $0x70] sm:$0xff] %vm2324, %v2161
    %2340 = vst.msk [vmem:[#allocation3 + $0x78] sm:$0xff] %vm2324, %v2163
    %2341 = vst.msk [vmem:[#allocation3 + $0x80] sm:$0xff] %vm2324, %v2165
    %2342 = vst.msk [vmem:[#allocation3 + $0x88] sm:$0xff] %vm2324, %v2167
    %2343 = vst.msk [vmem:[#allocation3 + $0x90] sm:$0xff] %vm2324, %v2169
    %2344 = vst.msk [vmem:[#allocation3 + $0x98] sm:$0xff] %vm2324, %v2171
    %2345 = vst.msk [vmem:[#allocation3 + $0xa0] sm:$0xff] %vm2324, %v2173
    %2346 = vst.msk [vmem:[#allocation3 + $0xa8] sm:$0xff] %vm2324, %v2175
    %2347 = vst.msk [vmem:[#allocation3 + $0xb0] sm:$0xff] %vm2324, %v2177
    %2348 = vst.msk [vmem:[#allocation3 + $0xb8] sm:$0xff] %vm2324, %v2179
    %2349 = vst.msk [vmem:[#allocation3 + $0xc0] sm:$0xff] %vm2324, %v2181
    %2350 = vst.msk [vmem:[#allocation3 + $0xc8] sm:$0xff] %vm2324, %v2183
    %2351 = vst.msk [vmem:[#allocation3 + $0xd0] sm:$0xff] %vm2324, %v2185
    %2352 = vst.msk [vmem:[#allocation3 + $0xd8] sm:$0xff] %vm2324, %v2187
    %2353 = vst.msk [vmem:[#allocation3 + $0xe0] sm:$0xff] %vm2324, %v2189
    %2354 = vst.msk [vmem:[#allocation3 + $0xe8] sm:$0xff] %vm2324, %v2191
    %2355 = vst.msk [vmem:[#allocation3 + $0xf0] sm:$0xff] %vm2324, %v2193
    %2356 = vst.msk [vmem:[#allocation3 + $0xf8] sm:$0xff] %vm2324, %v2195
    %2357 = vst.msk [vmem:[#allocation3 + $0x100] sm:$0xff] %vm2324, %v2197
    %2358 = vst.msk [vmem:[#allocation3 + $0x108] sm:$0xff] %vm2324, %v2199
    %2359 = vst.msk [vmem:[#allocation3 + $0x110] sm:$0xff] %vm2324, %v2201
    %2360 = vst.msk [vmem:[#allocation3 + $0x118] sm:$0xff] %vm2324, %v2203
    %2361 = vst.msk [vmem:[#allocation3 + $0x120] sm:$0xff] %vm2324, %v2205
    %2362 = vst.msk [vmem:[#allocation3 + $0x128] sm:$0xff] %vm2324, %v2207
    %2363 = vst.msk [vmem:[#allocation3 + $0x130] sm:$0xff] %vm2324, %v2209
    %2364 = vst.msk [vmem:[#allocation3 + $0x138] sm:$0xff] %vm2324, %v2211
    %2365 = vst.msk [vmem:[#allocation3 + $0x140] sm:$0xff] %vm2324, %v2213
    %2366 = vst.msk [vmem:[#allocation3 + $0x148] sm:$0xff] %vm2324, %v2215
    %2367 = vst.msk [vmem:[#allocation3 + $0x150] sm:$0xff] %vm2324, %v2217
    %2368 = vst.msk [vmem:[#allocation3 + $0x158] sm:$0xff] %vm2324, %v2219
    %2369 = vst.msk [vmem:[#allocation3 + $0x160] sm:$0xff] %vm2324, %v2221
    %2370 = vst.msk [vmem:[#allocation3 + $0x168] sm:$0xff] %vm2324, %v2223
    %2371 = vst.msk [vmem:[#allocation3 + $0x170] sm:$0xff] %vm2324, %v2225
    %2372 = vst.msk [vmem:[#allocation3 + $0x178] sm:$0xff] %vm2324, %v2227
    %2373 = vst.msk [vmem:[#allocation3 + $0x180] sm:$0xff] %vm2324, %v2229
    %2374 = vst.msk [vmem:[#allocation3 + $0x188] sm:$0xff] %vm2324, %v2231
    %2375 = vst.msk [vmem:[#allocation3 + $0x190] sm:$0xff] %vm2324, %v2233
    %2376 = vst.msk [vmem:[#allocation3 + $0x198] sm:$0xff] %vm2324, %v2235
    %2377 = vst.msk [vmem:[#allocation3 + $0x1a0] sm:$0xff] %vm2324, %v2237
    %2378 = vst.msk [vmem:[#allocation3 + $0x1a8] sm:$0xff] %vm2324, %v2239
    %2379 = vst.msk [vmem:[#allocation3 + $0x1b0] sm:$0xff] %vm2324, %v2241
    %2380 = vst.msk [vmem:[#allocation3 + $0x1b8] sm:$0xff] %vm2324, %v2243
    %2381 = vst.msk [vmem:[#allocation3 + $0x1c0] sm:$0xff] %vm2324, %v2245
    %2382 = vst.msk [vmem:[#allocation3 + $0x1c8] sm:$0xff] %vm2324, %v2247
    %2383 = vst.msk [vmem:[#allocation3 + $0x1d0] sm:$0xff] %vm2324, %v2249
    %2384 = vst.msk [vmem:[#allocation3 + $0x1d8] sm:$0xff] %vm2324, %v2251
    %2385 = vst.msk [vmem:[#allocation3 + $0x1e0] sm:$0xff] %vm2324, %v2253
    %2386 = vst.msk [vmem:[#allocation3 + $0x1e8] sm:$0xff] %vm2324, %v2255
    %2387 = vst.msk [vmem:[#allocation3 + $0x1f0] sm:$0xff] %vm2324, %v2257
    %2388 = vst.msk [vmem:[#allocation3 + $0x1f8] sm:$0xff] %vm2324, %v2259
    %v2389 = vld [vmem:[%s205 + $0x2] sm:$0xff]
    %v2390 = vld [vmem:[%s205 + $0xa] sm:$0xff]
    %v2391 = vld [vmem:[%s205 + $0x1a] sm:$0xff]
    %v2392 = vld [vmem:[%s205 + $0x22] sm:$0xff]
    %v2393 = vld [vmem:[%s205 + $0x32] sm:$0xff]
    %v2394 = vld [vmem:[%s205 + $0x3a] sm:$0xff]
    %v2395 = vld [vmem:[%s205 + $0x4a] sm:$0xff]
    %v2396 = vld [vmem:[%s205 + $0x52] sm:$0xff]
    %v2397 = vld [vmem:[%s205 + $0x62] sm:$0xff]
    %v2398 = vld [vmem:[%s205 + $0x6a] sm:$0xff]
    %v2399 = vld [vmem:[%s205 + $0x7a] sm:$0xff]
    %v2400 = vld [vmem:[%s205 + $0x82] sm:$0xff]
    %v2401 = vld [vmem:[%s205 + $0x92] sm:$0xff]
    %v2402 = vld [vmem:[%s205 + $0x9a] sm:$0xff]
    %v2403 = vld [vmem:[%s205 + $0xaa] sm:$0xff]
    %v2404 = vld [vmem:[%s205 + $0xb2] sm:$0xff]
    %v2405 = vld [vmem:[%s205 + $0xc2] sm:$0xff]
    %v2406 = vld [vmem:[%s205 + $0xca] sm:$0xff]
    %v2407 = vld [vmem:[%s205 + $0xda] sm:$0xff]
    %v2408 = vld [vmem:[%s205 + $0xe2] sm:$0xff]
    %v2409 = vld [vmem:[%s205 + $0xf2] sm:$0xff]
    %v2410 = vld [vmem:[%s205 + $0xfa] sm:$0xff]
    %v2411 = vld [vmem:[%s205 + $0x10a] sm:$0xff]
    %v2412 = vld [vmem:[%s205 + $0x112] sm:$0xff]
    %v2413 = vld [vmem:[%s205 + $0x122] sm:$0xff]
    %v2414 = vld [vmem:[%s205 + $0x12a] sm:$0xff]
    %v2415 = vld [vmem:[%s205 + $0x13a] sm:$0xff]
    %v2416 = vld [vmem:[%s205 + $0x142] sm:$0xff]
    %v2417 = vld [vmem:[%s205 + $0x152] sm:$0xff]
    %v2418 = vld [vmem:[%s205 + $0x15a] sm:$0xff]
    %v2419 = vld [vmem:[%s205 + $0x16a] sm:$0xff]
    %v2420 = vld [vmem:[%s205 + $0x172] sm:$0xff]
    %v2421 = vld [vmem:[%s205 + $0x1b2] sm:$0xff]
    %v2422 = vld [vmem:[%s205 + $0x1ba] sm:$0xff]
    %v2423 = vld [vmem:[%s205 + $0x1ca] sm:$0xff]
    %v2424 = vld [vmem:[%s205 + $0x1d2] sm:$0xff]
    %v2425 = vld [vmem:[%s205 + $0x1e2] sm:$0xff]
    %v2426 = vld [vmem:[%s205 + $0x1ea] sm:$0xff]
    %v2427 = vld [vmem:[%s205 + $0x1fa] sm:$0xff]
    %v2428 = vld [vmem:[%s205 + $0x202] sm:$0xff]
    %v2429 = vld [vmem:[%s205 + $0x212] sm:$0xff]
    %v2430 = vld [vmem:[%s205 + $0x21a] sm:$0xff]
    %v2431 = vld [vmem:[%s205 + $0x22a] sm:$0xff]
    %v2432 = vld [vmem:[%s205 + $0x232] sm:$0xff]
    %v2433 = vld [vmem:[%s205 + $0x242] sm:$0xff]
    %v2434 = vld [vmem:[%s205 + $0x24a] sm:$0xff]
    %v2435 = vld [vmem:[%s205 + $0x25a] sm:$0xff]
    %v2436 = vld [vmem:[%s205 + $0x262] sm:$0xff]
    %v2437 = vld [vmem:[%s205 + $0x272] sm:$0xff]
    %v2438 = vld [vmem:[%s205 + $0x27a] sm:$0xff]
    %v2439 = vld [vmem:[%s205 + $0x28a] sm:$0xff]
    %v2440 = vld [vmem:[%s205 + $0x292] sm:$0xff]
    %v2441 = vld [vmem:[%s205 + $0x2a2] sm:$0xff]
    %v2442 = vld [vmem:[%s205 + $0x2aa] sm:$0xff]
    %v2443 = vld [vmem:[%s205 + $0x2ba] sm:$0xff]
    %v2444 = vld [vmem:[%s205 + $0x2c2] sm:$0xff]
    %v2445 = vld [vmem:[%s205 + $0x2d2] sm:$0xff]
    %v2446 = vld [vmem:[%s205 + $0x2da] sm:$0xff]
    %v2447 = vld [vmem:[%s205 + $0x2ea] sm:$0xff]
    %v2448 = vld [vmem:[%s205 + $0x2f2] sm:$0xff]
    %v2449 = vld [vmem:[%s205 + $0x302] sm:$0xff]
    %v2450 = vld [vmem:[%s205 + $0x30a] sm:$0xff]
    %v2451 = vld [vmem:[%s205 + $0x31a] sm:$0xff]
    %v2452 = vld [vmem:[%s205 + $0x322] sm:$0xff]
    %2517 = vrot.lane.b32.xlu0 %v2389, 30
    %v2518 = vpop.permute.xlu0 %2517
    %2519 = vrot.lane.b32.xlu0 %v2390, 30
    %v2520 = vpop.permute.xlu0 %2519
    %2521 = vrot.lane.b32.xlu0 %v2391, 30
    %v2522 = vpop.permute.xlu0 %2521
    %2523 = vrot.lane.b32.xlu0 %v2392, 30
    %v2524 = vpop.permute.xlu0 %2523
    %2525 = vrot.lane.b32.xlu0 %v2393, 30
    %v2526 = vpop.permute.xlu0 %2525
    %2527 = vrot.lane.b32.xlu0 %v2394, 30
    %v2528 = vpop.permute.xlu0 %2527
    %2529 = vrot.lane.b32.xlu0 %v2395, 30
    %v2530 = vpop.permute.xlu0 %2529
    %2531 = vrot.lane.b32.xlu0 %v2396, 30
    %v2532 = vpop.permute.xlu0 %2531
    %2533 = vrot.lane.b32.xlu0 %v2397, 30
    %v2534 = vpop.permute.xlu0 %2533
    %2535 = vrot.lane.b32.xlu0 %v2398, 30
    %v2536 = vpop.permute.xlu0 %2535
    %2537 = vrot.lane.b32.xlu0 %v2399, 30
    %v2538 = vpop.permute.xlu0 %2537
    %2539 = vrot.lane.b32.xlu0 %v2400, 30
    %v2540 = vpop.permute.xlu0 %2539
    %2541 = vrot.lane.b32.xlu0 %v2401, 30
    %v2542 = vpop.permute.xlu0 %2541
    %2543 = vrot.lane.b32.xlu0 %v2402, 30
    %v2544 = vpop.permute.xlu0 %2543
    %2545 = vrot.lane.b32.xlu0 %v2403, 30
    %v2546 = vpop.permute.xlu0 %2545
    %2547 = vrot.lane.b32.xlu0 %v2404, 30
    %v2548 = vpop.permute.xlu0 %2547
    %2549 = vrot.lane.b32.xlu0 %v2405, 30
    %v2550 = vpop.permute.xlu0 %2549
    %2551 = vrot.lane.b32.xlu0 %v2406, 30
    %v2552 = vpop.permute.xlu0 %2551
    %2553 = vrot.lane.b32.xlu0 %v2407, 30
    %v2554 = vpop.permute.xlu0 %2553
    %2555 = vrot.lane.b32.xlu0 %v2408, 30
    %v2556 = vpop.permute.xlu0 %2555
    %2557 = vrot.lane.b32.xlu0 %v2409, 30
    %v2558 = vpop.permute.xlu0 %2557
    %2559 = vrot.lane.b32.xlu0 %v2410, 30
    %v2560 = vpop.permute.xlu0 %2559
    %2561 = vrot.lane.b32.xlu0 %v2411, 30
    %v2562 = vpop.permute.xlu0 %2561
    %2563 = vrot.lane.b32.xlu0 %v2412, 30
    %v2564 = vpop.permute.xlu0 %2563
    %2565 = vrot.lane.b32.xlu0 %v2413, 30
    %v2566 = vpop.permute.xlu0 %2565
    %2567 = vrot.lane.b32.xlu0 %v2414, 30
    %v2568 = vpop.permute.xlu0 %2567
    %2569 = vrot.lane.b32.xlu0 %v2415, 30
    %v2570 = vpop.permute.xlu0 %2569
    %2571 = vrot.lane.b32.xlu0 %v2416, 30
    %v2572 = vpop.permute.xlu0 %2571
    %2573 = vrot.lane.b32.xlu0 %v2417, 30
    %v2574 = vpop.permute.xlu0 %2573
    %2575 = vrot.lane.b32.xlu0 %v2418, 30
    %v2576 = vpop.permute.xlu0 %2575
    %2577 = vrot.lane.b32.xlu0 %v2419, 30
    %v2578 = vpop.permute.xlu0 %2577
    %2579 = vrot.lane.b32.xlu0 %v2420, 30
    %v2580 = vpop.permute.xlu0 %2579
    %2581 = vrot.lane.b32.xlu0 %v2421, 30
    %v2582 = vpop.permute.xlu0 %2581
    %2583 = vrot.lane.b32.xlu0 %v2422, 30
    %v2584 = vpop.permute.xlu0 %2583
    %2585 = vrot.lane.b32.xlu0 %v2423, 30
    %v2586 = vpop.permute.xlu0 %2585
    %2587 = vrot.lane.b32.xlu0 %v2424, 30
    %v2588 = vpop.permute.xlu0 %2587
    %2589 = vrot.lane.b32.xlu0 %v2425, 30
    %v2590 = vpop.permute.xlu0 %2589
    %2591 = vrot.lane.b32.xlu0 %v2426, 30
    %v2592 = vpop.permute.xlu0 %2591
    %2593 = vrot.lane.b32.xlu0 %v2427, 30
    %v2594 = vpop.permute.xlu0 %2593
    %2595 = vrot.lane.b32.xlu0 %v2428, 30
    %v2596 = vpop.permute.xlu0 %2595
    %2597 = vrot.lane.b32.xlu0 %v2429, 30
    %v2598 = vpop.permute.xlu0 %2597
    %2599 = vrot.lane.b32.xlu0 %v2430, 30
    %v2600 = vpop.permute.xlu0 %2599
    %2601 = vrot.lane.b32.xlu0 %v2431, 30
    %v2602 = vpop.permute.xlu0 %2601
    %2603 = vrot.lane.b32.xlu0 %v2432, 30
    %v2604 = vpop.permute.xlu0 %2603
    %2605 = vrot.lane.b32.xlu0 %v2433, 30
    %v2606 = vpop.permute.xlu0 %2605
    %2607 = vrot.lane.b32.xlu0 %v2434, 30
    %v2608 = vpop.permute.xlu0 %2607
    %2609 = vrot.lane.b32.xlu0 %v2435, 30
    %v2610 = vpop.permute.xlu0 %2609
    %2611 = vrot.lane.b32.xlu0 %v2436, 30
    %v2612 = vpop.permute.xlu0 %2611
    %2613 = vrot.lane.b32.xlu0 %v2437, 30
    %v2614 = vpop.permute.xlu0 %2613
    %2615 = vrot.lane.b32.xlu0 %v2438, 30
    %v2616 = vpop.permute.xlu0 %2615
    %2617 = vrot.lane.b32.xlu0 %v2439, 30
    %v2618 = vpop.permute.xlu0 %2617
    %2619 = vrot.lane.b32.xlu0 %v2440, 30
    %v2620 = vpop.permute.xlu0 %2619
    %2621 = vrot.lane.b32.xlu0 %v2441, 30
    %v2622 = vpop.permute.xlu0 %2621
    %2623 = vrot.lane.b32.xlu0 %v2442, 30
    %v2624 = vpop.permute.xlu0 %2623
    %2625 = vrot.lane.b32.xlu0 %v2443, 30
    %v2626 = vpop.permute.xlu0 %2625
    %2627 = vrot.lane.b32.xlu0 %v2444, 30
    %v2628 = vpop.permute.xlu0 %2627
    %2629 = vrot.lane.b32.xlu0 %v2445, 30
    %v2630 = vpop.permute.xlu0 %2629
    %2631 = vrot.lane.b32.xlu0 %v2446, 30
    %v2632 = vpop.permute.xlu0 %2631
    %2633 = vrot.lane.b32.xlu0 %v2447, 30
    %v2634 = vpop.permute.xlu0 %2633
    %2635 = vrot.lane.b32.xlu0 %v2448, 30
    %v2636 = vpop.permute.xlu0 %2635
    %2637 = vrot.lane.b32.xlu0 %v2449, 30
    %v2638 = vpop.permute.xlu0 %2637
    %2639 = vrot.lane.b32.xlu0 %v2450, 30
    %v2640 = vpop.permute.xlu0 %2639
    %2641 = vrot.lane.b32.xlu0 %v2451, 30
    %v2642 = vpop.permute.xlu0 %2641
    %2643 = vrot.lane.b32.xlu0 %v2452, 30
    %v2644 = vpop.permute.xlu0 %2643
    %vm2709 = vcmask 294128
    %2710 = vst.msk [vmem:[#allocation3] sm:$0xff] %vm2709, %v2518
    %2711 = vst.msk [vmem:[#allocation3 + $0x8] sm:$0xff] %vm2709, %v2520
    %2712 = vst.msk [vmem:[#allocation3 + $0x10] sm:$0xff] %vm2709, %v2522
    %2713 = vst.msk [vmem:[#allocation3 + $0x18] sm:$0xff] %vm2709, %v2524
    %2714 = vst.msk [vmem:[#allocation3 + $0x20] sm:$0xff] %vm2709, %v2526
    %2715 = vst.msk [vmem:[#allocation3 + $0x28] sm:$0xff] %vm2709, %v2528
    %2716 = vst.msk [vmem:[#allocation3 + $0x30] sm:$0xff] %vm2709, %v2530
    %2717 = vst.msk [vmem:[#allocation3 + $0x38] sm:$0xff] %vm2709, %v2532
    %2718 = vst.msk [vmem:[#allocation3 + $0x40] sm:$0xff] %vm2709, %v2534
    %2719 = vst.msk [vmem:[#allocation3 + $0x48] sm:$0xff] %vm2709, %v2536
    %2720 = vst.msk [vmem:[#allocation3 + $0x50] sm:$0xff] %vm2709, %v2538
    %2721 = vst.msk [vmem:[#allocation3 + $0x58] sm:$0xff] %vm2709, %v2540
    %2722 = vst.msk [vmem:[#allocation3 + $0x60] sm:$0xff] %vm2709, %v2542
    %2723 = vst.msk [vmem:[#allocation3 + $0x68] sm:$0xff] %vm2709, %v2544
    %2724 = vst.msk [vmem:[#allocation3 + $0x70] sm:$0xff] %vm2709, %v2546
    %2725 = vst.msk [vmem:[#allocation3 + $0x78] sm:$0xff] %vm2709, %v2548
    %2726 = vst.msk [vmem:[#allocation3 + $0x80] sm:$0xff] %vm2709, %v2550
    %2727 = vst.msk [vmem:[#allocation3 + $0x88] sm:$0xff] %vm2709, %v2552
    %2728 = vst.msk [vmem:[#allocation3 + $0x90] sm:$0xff] %vm2709, %v2554
    %2729 = vst.msk [vmem:[#allocation3 + $0x98] sm:$0xff] %vm2709, %v2556
    %2730 = vst.msk [vmem:[#allocation3 + $0xa0] sm:$0xff] %vm2709, %v2558
    %2731 = vst.msk [vmem:[#allocation3 + $0xa8] sm:$0xff] %vm2709, %v2560
    %2732 = vst.msk [vmem:[#allocation3 + $0xb0] sm:$0xff] %vm2709, %v2562
    %2733 = vst.msk [vmem:[#allocation3 + $0xb8] sm:$0xff] %vm2709, %v2564
    %2734 = vst.msk [vmem:[#allocation3 + $0xc0] sm:$0xff] %vm2709, %v2566
    %2735 = vst.msk [vmem:[#allocation3 + $0xc8] sm:$0xff] %vm2709, %v2568
    %2736 = vst.msk [vmem:[#allocation3 + $0xd0] sm:$0xff] %vm2709, %v2570
    %2737 = vst.msk [vmem:[#allocation3 + $0xd8] sm:$0xff] %vm2709, %v2572
    %2738 = vst.msk [vmem:[#allocation3 + $0xe0] sm:$0xff] %vm2709, %v2574
    %2739 = vst.msk [vmem:[#allocation3 + $0xe8] sm:$0xff] %vm2709, %v2576
    %2740 = vst.msk [vmem:[#allocation3 + $0xf0] sm:$0xff] %vm2709, %v2578
    %2741 = vst.msk [vmem:[#allocation3 + $0xf8] sm:$0xff] %vm2709, %v2580
    %2742 = vst.msk [vmem:[#allocation3 + $0x100] sm:$0xff] %vm2709, %v2582
    %2743 = vst.msk [vmem:[#allocation3 + $0x108] sm:$0xff] %vm2709, %v2584
    %2744 = vst.msk [vmem:[#allocation3 + $0x110] sm:$0xff] %vm2709, %v2586
    %2745 = vst.msk [vmem:[#allocation3 + $0x118] sm:$0xff] %vm2709, %v2588
    %2746 = vst.msk [vmem:[#allocation3 + $0x120] sm:$0xff] %vm2709, %v2590
    %2747 = vst.msk [vmem:[#allocation3 + $0x128] sm:$0xff] %vm2709, %v2592
    %2748 = vst.msk [vmem:[#allocation3 + $0x130] sm:$0xff] %vm2709, %v2594
    %2749 = vst.msk [vmem:[#allocation3 + $0x138] sm:$0xff] %vm2709, %v2596
    %2750 = vst.msk [vmem:[#allocation3 + $0x140] sm:$0xff] %vm2709, %v2598
    %2751 = vst.msk [vmem:[#allocation3 + $0x148] sm:$0xff] %vm2709, %v2600
    %2752 = vst.msk [vmem:[#allocation3 + $0x150] sm:$0xff] %vm2709, %v2602
    %2753 = vst.msk [vmem:[#allocation3 + $0x158] sm:$0xff] %vm2709, %v2604
    %2754 = vst.msk [vmem:[#allocation3 + $0x160] sm:$0xff] %vm2709, %v2606
    %2755 = vst.msk [vmem:[#allocation3 + $0x168] sm:$0xff] %vm2709, %v2608
    %2756 = vst.msk [vmem:[#allocation3 + $0x170] sm:$0xff] %vm2709, %v2610
    %2757 = vst.msk [vmem:[#allocation3 + $0x178] sm:$0xff] %vm2709, %v2612
    %2758 = vst.msk [vmem:[#allocation3 + $0x180] sm:$0xff] %vm2709, %v2614
    %2759 = vst.msk [vmem:[#allocation3 + $0x188] sm:$0xff] %vm2709, %v2616
    %2760 = vst.msk [vmem:[#allocation3 + $0x190] sm:$0xff] %vm2709, %v2618
    %2761 = vst.msk [vmem:[#allocation3 + $0x198] sm:$0xff] %vm2709, %v2620
    %2762 = vst.msk [vmem:[#allocation3 + $0x1a0] sm:$0xff] %vm2709, %v2622
    %2763 = vst.msk [vmem:[#allocation3 + $0x1a8] sm:$0xff] %vm2709, %v2624
    %2764 = vst.msk [vmem:[#allocation3 + $0x1b0] sm:$0xff] %vm2709, %v2626
    %2765 = vst.msk [vmem:[#allocation3 + $0x1b8] sm:$0xff] %vm2709, %v2628
    %2766 = vst.msk [vmem:[#allocation3 + $0x1c0] sm:$0xff] %vm2709, %v2630
    %2767 = vst.msk [vmem:[#allocation3 + $0x1c8] sm:$0xff] %vm2709, %v2632
    %2768 = vst.msk [vmem:[#allocation3 + $0x1d0] sm:$0xff] %vm2709, %v2634
    %2769 = vst.msk [vmem:[#allocation3 + $0x1d8] sm:$0xff] %vm2709, %v2636
    %2770 = vst.msk [vmem:[#allocation3 + $0x1e0] sm:$0xff] %vm2709, %v2638
    %2771 = vst.msk [vmem:[#allocation3 + $0x1e8] sm:$0xff] %vm2709, %v2640
    %2772 = vst.msk [vmem:[#allocation3 + $0x1f0] sm:$0xff] %vm2709, %v2642
    %2773 = vst.msk [vmem:[#allocation3 + $0x1f8] sm:$0xff] %vm2709, %v2644
    %s2774 = scalar_lea.vmem [#allocation2], 48
    %v2775 = vld [vmem:[%s2774] sm:$0xff]
    %v2776 = vld [vmem:[%s2774 + $0x8] sm:$0xff]
    %v2777 = vld [vmem:[%s2774 + $0x18] sm:$0xff]
    %v2778 = vld [vmem:[%s2774 + $0x20] sm:$0xff]
    %v2779 = vld [vmem:[%s2774 + $0x30] sm:$0xff]
    %v2780 = vld [vmem:[%s2774 + $0x38] sm:$0xff]
    %v2781 = vld [vmem:[%s2774 + $0x48] sm:$0xff]
    %v2782 = vld [vmem:[%s2774 + $0x50] sm:$0xff]
    %v2783 = vld [vmem:[%s2774 + $0x60] sm:$0xff]
    %v2784 = vld [vmem:[%s2774 + $0x68] sm:$0xff]
    %v2785 = vld [vmem:[%s2774 + $0x78] sm:$0xff]
    %v2786 = vld [vmem:[%s2774 + $0x80] sm:$0xff]
    %v2787 = vld [vmem:[%s2774 + $0x90] sm:$0xff]
    %v2788 = vld [vmem:[%s2774 + $0x98] sm:$0xff]
    %v2789 = vld [vmem:[%s2774 + $0xa8] sm:$0xff]
    %v2790 = vld [vmem:[%s2774 + $0xb0] sm:$0xff]
    %v2791 = vld [vmem:[%s2774 + $0xc0] sm:$0xff]
    %v2792 = vld [vmem:[%s2774 + $0xc8] sm:$0xff]
    %v2793 = vld [vmem:[%s2774 + $0xd8] sm:$0xff]
    %v2794 = vld [vmem:[%s2774 + $0xe0] sm:$0xff]
    %v2795 = vld [vmem:[%s2774 + $0xf0] sm:$0xff]
    %v2796 = vld [vmem:[%s2774 + $0xf8] sm:$0xff]
    %v2797 = vld [vmem:[%s2774 + $0x108] sm:$0xff]
    %v2798 = vld [vmem:[%s2774 + $0x110] sm:$0xff]
    %v2799 = vld [vmem:[%s2774 + $0x120] sm:$0xff]
    %v2800 = vld [vmem:[%s2774 + $0x128] sm:$0xff]
    %v2801 = vld [vmem:[%s2774 + $0x138] sm:$0xff]
    %v2802 = vld [vmem:[%s2774 + $0x140] sm:$0xff]
    %v2803 = vld [vmem:[%s2774 + $0x150] sm:$0xff]
    %v2804 = vld [vmem:[%s2774 + $0x158] sm:$0xff]
    %v2805 = vld [vmem:[%s2774 + $0x168] sm:$0xff]
    %v2806 = vld [vmem:[%s2774 + $0x170] sm:$0xff]
    %v2807 = vld [vmem:[%s2774 + $0x1b0] sm:$0xff]
    %v2808 = vld [vmem:[%s2774 + $0x1b8] sm:$0xff]
    %v2809 = vld [vmem:[%s2774 + $0x1c8] sm:$0xff]
    %v2810 = vld [vmem:[%s2774 + $0x1d0] sm:$0xff]
    %v2811 = vld [vmem:[%s2774 + $0x1e0] sm:$0xff]
    %v2812 = vld [vmem:[%s2774 + $0x1e8] sm:$0xff]
    %v2813 = vld [vmem:[%s2774 + $0x1f8] sm:$0xff]
    %v2814 = vld [vmem:[%s2774 + $0x200] sm:$0xff]
    %v2815 = vld [vmem:[%s2774 + $0x210] sm:$0xff]
    %v2816 = vld [vmem:[%s2774 + $0x218] sm:$0xff]
    %v2817 = vld [vmem:[%s2774 + $0x228] sm:$0xff]
    %v2818 = vld [vmem:[%s2774 + $0x230] sm:$0xff]
    %v2819 = vld [vmem:[%s2774 + $0x240] sm:$0xff]
    %v2820 = vld [vmem:[%s2774 + $0x248] sm:$0xff]
    %v2821 = vld [vmem:[%s2774 + $0x258] sm:$0xff]
    %v2822 = vld [vmem:[%s2774 + $0x260] sm:$0xff]
    %v2823 = vld [vmem:[%s2774 + $0x270] sm:$0xff]
    %v2824 = vld [vmem:[%s2774 + $0x278] sm:$0xff]
    %v2825 = vld [vmem:[%s2774 + $0x288] sm:$0xff]
    %v2826 = vld [vmem:[%s2774 + $0x290] sm:$0xff]
    %v2827 = vld [vmem:[%s2774 + $0x2a0] sm:$0xff]
    %v2828 = vld [vmem:[%s2774 + $0x2a8] sm:$0xff]
    %v2829 = vld [vmem:[%s2774 + $0x2b8] sm:$0xff]
    %v2830 = vld [vmem:[%s2774 + $0x2c0] sm:$0xff]
    %v2831 = vld [vmem:[%s2774 + $0x2d0] sm:$0xff]
    %v2832 = vld [vmem:[%s2774 + $0x2d8] sm:$0xff]
    %v2833 = vld [vmem:[%s2774 + $0x2e8] sm:$0xff]
    %v2834 = vld [vmem:[%s2774 + $0x2f0] sm:$0xff]
    %v2835 = vld [vmem:[%s2774 + $0x300] sm:$0xff]
    %v2836 = vld [vmem:[%s2774 + $0x308] sm:$0xff]
    %v2837 = vld [vmem:[%s2774 + $0x318] sm:$0xff]
    %v2838 = vld [vmem:[%s2774 + $0x320] sm:$0xff]
    %2903 = vrot.lane.b32.xlu0 %v2775, 36
    %v2904 = vpop.permute.xlu0 %2903
    %2905 = vrot.lane.b32.xlu0 %v2776, 36
    %v2906 = vpop.permute.xlu0 %2905
    %2907 = vrot.lane.b32.xlu0 %v2777, 36
    %v2908 = vpop.permute.xlu0 %2907
    %2909 = vrot.lane.b32.xlu0 %v2778, 36
    %v2910 = vpop.permute.xlu0 %2909
    %2911 = vrot.lane.b32.xlu0 %v2779, 36
    %v2912 = vpop.permute.xlu0 %2911
    %2913 = vrot.lane.b32.xlu0 %v2780, 36
    %v2914 = vpop.permute.xlu0 %2913
    %2915 = vrot.lane.b32.xlu0 %v2781, 36
    %v2916 = vpop.permute.xlu0 %2915
    %2917 = vrot.lane.b32.xlu0 %v2782, 36
    %v2918 = vpop.permute.xlu0 %2917
    %2919 = vrot.lane.b32.xlu0 %v2783, 36
    %v2920 = vpop.permute.xlu0 %2919
    %2921 = vrot.lane.b32.xlu0 %v2784, 36
    %v2922 = vpop.permute.xlu0 %2921
    %2923 = vrot.lane.b32.xlu0 %v2785, 36
    %v2924 = vpop.permute.xlu0 %2923
    %2925 = vrot.lane.b32.xlu0 %v2786, 36
    %v2926 = vpop.permute.xlu0 %2925
    %2927 = vrot.lane.b32.xlu0 %v2787, 36
    %v2928 = vpop.permute.xlu0 %2927
    %2929 = vrot.lane.b32.xlu0 %v2788, 36
    %v2930 = vpop.permute.xlu0 %2929
    %2931 = vrot.lane.b32.xlu0 %v2789, 36
    %v2932 = vpop.permute.xlu0 %2931
    %2933 = vrot.lane.b32.xlu0 %v2790, 36
    %v2934 = vpop.permute.xlu0 %2933
    %2935 = vrot.lane.b32.xlu0 %v2791, 36
    %v2936 = vpop.permute.xlu0 %2935
    %2937 = vrot.lane.b32.xlu0 %v2792, 36
    %v2938 = vpop.permute.xlu0 %2937
    %2939 = vrot.lane.b32.xlu0 %v2793, 36
    %v2940 = vpop.permute.xlu0 %2939
    %2941 = vrot.lane.b32.xlu0 %v2794, 36
    %v2942 = vpop.permute.xlu0 %2941
    %2943 = vrot.lane.b32.xlu0 %v2795, 36
    %v2944 = vpop.permute.xlu0 %2943
    %2945 = vrot.lane.b32.xlu0 %v2796, 36
    %v2946 = vpop.permute.xlu0 %2945
    %2947 = vrot.lane.b32.xlu0 %v2797, 36
    %v2948 = vpop.permute.xlu0 %2947
    %2949 = vrot.lane.b32.xlu0 %v2798, 36
    %v2950 = vpop.permute.xlu0 %2949
    %2951 = vrot.lane.b32.xlu0 %v2799, 36
    %v2952 = vpop.permute.xlu0 %2951
    %2953 = vrot.lane.b32.xlu0 %v2800, 36
    %v2954 = vpop.permute.xlu0 %2953
    %2955 = vrot.lane.b32.xlu0 %v2801, 36
    %v2956 = vpop.permute.xlu0 %2955
    %2957 = vrot.lane.b32.xlu0 %v2802, 36
    %v2958 = vpop.permute.xlu0 %2957
    %2959 = vrot.lane.b32.xlu0 %v2803, 36
    %v2960 = vpop.permute.xlu0 %2959
    %2961 = vrot.lane.b32.xlu0 %v2804, 36
    %v2962 = vpop.permute.xlu0 %2961
    %2963 = vrot.lane.b32.xlu0 %v2805, 36
    %v2964 = vpop.permute.xlu0 %2963
    %2965 = vrot.lane.b32.xlu0 %v2806, 36
    %v2966 = vpop.permute.xlu0 %2965
    %2967 = vrot.lane.b32.xlu0 %v2807, 36
    %v2968 = vpop.permute.xlu0 %2967
    %2969 = vrot.lane.b32.xlu0 %v2808, 36
    %v2970 = vpop.permute.xlu0 %2969
    %2971 = vrot.lane.b32.xlu0 %v2809, 36
    %v2972 = vpop.permute.xlu0 %2971
    %2973 = vrot.lane.b32.xlu0 %v2810, 36
    %v2974 = vpop.permute.xlu0 %2973
    %2975 = vrot.lane.b32.xlu0 %v2811, 36
    %v2976 = vpop.permute.xlu0 %2975
    %2977 = vrot.lane.b32.xlu0 %v2812, 36
    %v2978 = vpop.permute.xlu0 %2977
    %2979 = vrot.lane.b32.xlu0 %v2813, 36
    %v2980 = vpop.permute.xlu0 %2979
    %2981 = vrot.lane.b32.xlu0 %v2814, 36
    %v2982 = vpop.permute.xlu0 %2981
    %2983 = vrot.lane.b32.xlu0 %v2815, 36
    %v2984 = vpop.permute.xlu0 %2983
    %2985 = vrot.lane.b32.xlu0 %v2816, 36
    %v2986 = vpop.permute.xlu0 %2985
    %2987 = vrot.lane.b32.xlu0 %v2817, 36
    %v2988 = vpop.permute.xlu0 %2987
    %2989 = vrot.lane.b32.xlu0 %v2818, 36
    %v2990 = vpop.permute.xlu0 %2989
    %2991 = vrot.lane.b32.xlu0 %v2819, 36
    %v2992 = vpop.permute.xlu0 %2991
    %2993 = vrot.lane.b32.xlu0 %v2820, 36
    %v2994 = vpop.permute.xlu0 %2993
    %2995 = vrot.lane.b32.xlu0 %v2821, 36
    %v2996 = vpop.permute.xlu0 %2995
    %2997 = vrot.lane.b32.xlu0 %v2822, 36
    %v2998 = vpop.permute.xlu0 %2997
    %2999 = vrot.lane.b32.xlu0 %v2823, 36
    %v3000 = vpop.permute.xlu0 %2999
    %3001 = vrot.lane.b32.xlu0 %v2824, 36
    %v3002 = vpop.permute.xlu0 %3001
    %3003 = vrot.lane.b32.xlu0 %v2825, 36
    %v3004 = vpop.permute.xlu0 %3003
    %3005 = vrot.lane.b32.xlu0 %v2826, 36
    %v3006 = vpop.permute.xlu0 %3005
    %3007 = vrot.lane.b32.xlu0 %v2827, 36
    %v3008 = vpop.permute.xlu0 %3007
    %3009 = vrot.lane.b32.xlu0 %v2828, 36
    %v3010 = vpop.permute.xlu0 %3009
    %3011 = vrot.lane.b32.xlu0 %v2829, 36
    %v3012 = vpop.permute.xlu0 %3011
    %3013 = vrot.lane.b32.xlu0 %v2830, 36
    %v3014 = vpop.permute.xlu0 %3013
    %3015 = vrot.lane.b32.xlu0 %v2831, 36
    %v3016 = vpop.permute.xlu0 %3015
    %3017 = vrot.lane.b32.xlu0 %v2832, 36
    %v3018 = vpop.permute.xlu0 %3017
    %3019 = vrot.lane.b32.xlu0 %v2833, 36
    %v3020 = vpop.permute.xlu0 %3019
    %3021 = vrot.lane.b32.xlu0 %v2834, 36
    %v3022 = vpop.permute.xlu0 %3021
    %3023 = vrot.lane.b32.xlu0 %v2835, 36
    %v3024 = vpop.permute.xlu0 %3023
    %3025 = vrot.lane.b32.xlu0 %v2836, 36
    %v3026 = vpop.permute.xlu0 %3025
    %3027 = vrot.lane.b32.xlu0 %v2837, 36
    %v3028 = vpop.permute.xlu0 %3027
    %3029 = vrot.lane.b32.xlu0 %v2838, 36
    %v3030 = vpop.permute.xlu0 %3029
    %vm3095 = vcmask 343328
    %3096 = vst.msk [vmem:[#allocation3] sm:$0xff] %vm3095, %v2904
    %3097 = vst.msk [vmem:[#allocation3 + $0x8] sm:$0xff] %vm3095, %v2906
    %3098 = vst.msk [vmem:[#allocation3 + $0x10] sm:$0xff] %vm3095, %v2908
    %3099 = vst.msk [vmem:[#allocation3 + $0x18] sm:$0xff] %vm3095, %v2910
    %3100 = vst.msk [vmem:[#allocation3 + $0x20] sm:$0xff] %vm3095, %v2912
    %3101 = vst.msk [vmem:[#allocation3 + $0x28] sm:$0xff] %vm3095, %v2914
    %3102 = vst.msk [vmem:[#allocation3 + $0x30] sm:$0xff] %vm3095, %v2916
    %3103 = vst.msk [vmem:[#allocation3 + $0x38] sm:$0xff] %vm3095, %v2918
    %3104 = vst.msk [vmem:[#allocation3 + $0x40] sm:$0xff] %vm3095, %v2920
    %3105 = vst.msk [vmem:[#allocation3 + $0x48] sm:$0xff] %vm3095, %v2922
    %3106 = vst.msk [vmem:[#allocation3 + $0x50] sm:$0xff] %vm3095, %v2924
    %3107 = vst.msk [vmem:[#allocation3 + $0x58] sm:$0xff] %vm3095, %v2926
    %3108 = vst.msk [vmem:[#allocation3 + $0x60] sm:$0xff] %vm3095, %v2928
    %3109 = vst.msk [vmem:[#allocation3 + $0x68] sm:$0xff] %vm3095, %v2930
    %3110 = vst.msk [vmem:[#allocation3 + $0x70] sm:$0xff] %vm3095, %v2932
    %3111 = vst.msk [vmem:[#allocation3 + $0x78] sm:$0xff] %vm3095, %v2934
    %3112 = vst.msk [vmem:[#allocation3 + $0x80] sm:$0xff] %vm3095, %v2936
    %3113 = vst.msk [vmem:[#allocation3 + $0x88] sm:$0xff] %vm3095, %v2938
    %3114 = vst.msk [vmem:[#allocation3 + $0x90] sm:$0xff] %vm3095, %v2940
    %3115 = vst.msk [vmem:[#allocation3 + $0x98] sm:$0xff] %vm3095, %v2942
    %3116 = vst.msk [vmem:[#allocation3 + $0xa0] sm:$0xff] %vm3095, %v2944
    %3117 = vst.msk [vmem:[#allocation3 + $0xa8] sm:$0xff] %vm3095, %v2946
    %3118 = vst.msk [vmem:[#allocation3 + $0xb0] sm:$0xff] %vm3095, %v2948
    %3119 = vst.msk [vmem:[#allocation3 + $0xb8] sm:$0xff] %vm3095, %v2950
    %3120 = vst.msk [vmem:[#allocation3 + $0xc0] sm:$0xff] %vm3095, %v2952
    %3121 = vst.msk [vmem:[#allocation3 + $0xc8] sm:$0xff] %vm3095, %v2954
    %3122 = vst.msk [vmem:[#allocation3 + $0xd0] sm:$0xff] %vm3095, %v2956
    %3123 = vst.msk [vmem:[#allocation3 + $0xd8] sm:$0xff] %vm3095, %v2958
    %3124 = vst.msk [vmem:[#allocation3 + $0xe0] sm:$0xff] %vm3095, %v2960
    %3125 = vst.msk [vmem:[#allocation3 + $0xe8] sm:$0xff] %vm3095, %v2962
    %3126 = vst.msk [vmem:[#allocation3 + $0xf0] sm:$0xff] %vm3095, %v2964
    %3127 = vst.msk [vmem:[#allocation3 + $0xf8] sm:$0xff] %vm3095, %v2966
    %3128 = vst.msk [vmem:[#allocation3 + $0x100] sm:$0xff] %vm3095, %v2968
    %3129 = vst.msk [vmem:[#allocation3 + $0x108] sm:$0xff] %vm3095, %v2970
    %3130 = vst.msk [vmem:[#allocation3 + $0x110] sm:$0xff] %vm3095, %v2972
    %3131 = vst.msk [vmem:[#allocation3 + $0x118] sm:$0xff] %vm3095, %v2974
    %3132 = vst.msk [vmem:[#allocation3 + $0x120] sm:$0xff] %vm3095, %v2976
    %3133 = vst.msk [vmem:[#allocation3 + $0x128] sm:$0xff] %vm3095, %v2978
    %3134 = vst.msk [vmem:[#allocation3 + $0x130] sm:$0xff] %vm3095, %v2980
    %3135 = vst.msk [vmem:[#allocation3 + $0x138] sm:$0xff] %vm3095, %v2982
    %3136 = vst.msk [vmem:[#allocation3 + $0x140] sm:$0xff] %vm3095, %v2984
    %3137 = vst.msk [vmem:[#allocation3 + $0x148] sm:$0xff] %vm3095, %v2986
    %3138 = vst.msk [vmem:[#allocation3 + $0x150] sm:$0xff] %vm3095, %v2988
    %3139 = vst.msk [vmem:[#allocation3 + $0x158] sm:$0xff] %vm3095, %v2990
    %3140 = vst.msk [vmem:[#allocation3 + $0x160] sm:$0xff] %vm3095, %v2992
    %3141 = vst.msk [vmem:[#allocation3 + $0x168] sm:$0xff] %vm3095, %v2994
    %3142 = vst.msk [vmem:[#allocation3 + $0x170] sm:$0xff] %vm3095, %v2996
    %3143 = vst.msk [vmem:[#allocation3 + $0x178] sm:$0xff] %vm3095, %v2998
    %3144 = vst.msk [vmem:[#allocation3 + $0x180] sm:$0xff] %vm3095, %v3000
    %3145 = vst.msk [vmem:[#allocation3 + $0x188] sm:$0xff] %vm3095, %v3002
    %3146 = vst.msk [vmem:[#allocation3 + $0x190] sm:$0xff] %vm3095, %v3004
    %3147 = vst.msk [vmem:[#allocation3 + $0x198] sm:$0xff] %vm3095, %v3006
    %3148 = vst.msk [vmem:[#allocation3 + $0x1a0] sm:$0xff] %vm3095, %v3008
    %3149 = vst.msk [vmem:[#allocation3 + $0x1a8] sm:$0xff] %vm3095, %v3010
    %3150 = vst.msk [vmem:[#allocation3 + $0x1b0] sm:$0xff] %vm3095, %v3012
    %3151 = vst.msk [vmem:[#allocation3 + $0x1b8] sm:$0xff] %vm3095, %v3014
    %3152 = vst.msk [vmem:[#allocation3 + $0x1c0] sm:$0xff] %vm3095, %v3016
    %3153 = vst.msk [vmem:[#allocation3 + $0x1c8] sm:$0xff] %vm3095, %v3018
    %3154 = vst.msk [vmem:[#allocation3 + $0x1d0] sm:$0xff] %vm3095, %v3020
    %3155 = vst.msk [vmem:[#allocation3 + $0x1d8] sm:$0xff] %vm3095, %v3022
    %3156 = vst.msk [vmem:[#allocation3 + $0x1e0] sm:$0xff] %vm3095, %v3024
    %3157 = vst.msk [vmem:[#allocation3 + $0x1e8] sm:$0xff] %vm3095, %v3026
    %3158 = vst.msk [vmem:[#allocation3 + $0x1f0] sm:$0xff] %vm3095, %v3028
    %3159 = vst.msk [vmem:[#allocation3 + $0x1f8] sm:$0xff] %vm3095, %v3030
    %v3160 = vld [vmem:[%s2774 + $0x1] sm:$0xff]
    %v3161 = vld [vmem:[%s2774 + $0x9] sm:$0xff]
    %v3162 = vld [vmem:[%s2774 + $0x19] sm:$0xff]
    %v3163 = vld [vmem:[%s2774 + $0x21] sm:$0xff]
    %v3164 = vld [vmem:[%s2774 + $0x31] sm:$0xff]
    %v3165 = vld [vmem:[%s2774 + $0x39] sm:$0xff]
    %v3166 = vld [vmem:[%s2774 + $0x49] sm:$0xff]
    %v3167 = vld [vmem:[%s2774 + $0x51] sm:$0xff]
    %v3168 = vld [vmem:[%s2774 + $0x61] sm:$0xff]
    %v3169 = vld [vmem:[%s2774 + $0x69] sm:$0xff]
    %v3170 = vld [vmem:[%s2774 + $0x79] sm:$0xff]
    %v3171 = vld [vmem:[%s2774 + $0x81] sm:$0xff]
    %v3172 = vld [vmem:[%s2774 + $0x91] sm:$0xff]
    %v3173 = vld [vmem:[%s2774 + $0x99] sm:$0xff]
    %v3174 = vld [vmem:[%s2774 + $0xa9] sm:$0xff]
    %v3175 = vld [vmem:[%s2774 + $0xb1] sm:$0xff]
    %v3176 = vld [vmem:[%s2774 + $0xc1] sm:$0xff]
    %v3177 = vld [vmem:[%s2774 + $0xc9] sm:$0xff]
    %v3178 = vld [vmem:[%s2774 + $0xd9] sm:$0xff]
    %v3179 = vld [vmem:[%s2774 + $0xe1] sm:$0xff]
    %v3180 = vld [vmem:[%s2774 + $0xf1] sm:$0xff]
    %v3181 = vld [vmem:[%s2774 + $0xf9] sm:$0xff]
    %v3182 = vld [vmem:[%s2774 + $0x109] sm:$0xff]
    %v3183 = vld [vmem:[%s2774 + $0x111] sm:$0xff]
    %v3184 = vld [vmem:[%s2774 + $0x121] sm:$0xff]
    %v3185 = vld [vmem:[%s2774 + $0x129] sm:$0xff]
    %v3186 = vld [vmem:[%s2774 + $0x139] sm:$0xff]
    %v3187 = vld [vmem:[%s2774 + $0x141] sm:$0xff]
    %v3188 = vld [vmem:[%s2774 + $0x151] sm:$0xff]
    %v3189 = vld [vmem:[%s2774 + $0x159] sm:$0xff]
    %v3190 = vld [vmem:[%s2774 + $0x169] sm:$0xff]
    %v3191 = vld [vmem:[%s2774 + $0x171] sm:$0xff]
    %v3192 = vld [vmem:[%s2774 + $0x1b1] sm:$0xff]
    %v3193 = vld [vmem:[%s2774 + $0x1b9] sm:$0xff]
    %v3194 = vld [vmem:[%s2774 + $0x1c9] sm:$0xff]
    %v3195 = vld [vmem:[%s2774 + $0x1d1] sm:$0xff]
    %v3196 = vld [vmem:[%s2774 + $0x1e1] sm:$0xff]
    %v3197 = vld [vmem:[%s2774 + $0x1e9] sm:$0xff]
    %v3198 = vld [vmem:[%s2774 + $0x1f9] sm:$0xff]
    %v3199 = vld [vmem:[%s2774 + $0x201] sm:$0xff]
    %v3200 = vld [vmem:[%s2774 + $0x211] sm:$0xff]
    %v3201 = vld [vmem:[%s2774 + $0x219] sm:$0xff]
    %v3202 = vld [vmem:[%s2774 + $0x229] sm:$0xff]
    %v3203 = vld [vmem:[%s2774 + $0x231] sm:$0xff]
    %v3204 = vld [vmem:[%s2774 + $0x241] sm:$0xff]
    %v3205 = vld [vmem:[%s2774 + $0x249] sm:$0xff]
    %v3206 = vld [vmem:[%s2774 + $0x259] sm:$0xff]
    %v3207 = vld [vmem:[%s2774 + $0x261] sm:$0xff]
    %v3208 = vld [vmem:[%s2774 + $0x271] sm:$0xff]
    %v3209 = vld [vmem:[%s2774 + $0x279] sm:$0xff]
    %v3210 = vld [vmem:[%s2774 + $0x289] sm:$0xff]
    %v3211 = vld [vmem:[%s2774 + $0x291] sm:$0xff]
    %v3212 = vld [vmem:[%s2774 + $0x2a1] sm:$0xff]
    %v3213 = vld [vmem:[%s2774 + $0x2a9] sm:$0xff]
    %v3214 = vld [vmem:[%s2774 + $0x2b9] sm:$0xff]
    %v3215 = vld [vmem:[%s2774 + $0x2c1] sm:$0xff]
    %v3216 = vld [vmem:[%s2774 + $0x2d1] sm:$0xff]
    %v3217 = vld [vmem:[%s2774 + $0x2d9] sm:$0xff]
    %v3218 = vld [vmem:[%s2774 + $0x2e9] sm:$0xff]
    %v3219 = vld [vmem:[%s2774 + $0x2f1] sm:$0xff]
    %v3220 = vld [vmem:[%s2774 + $0x301] sm:$0xff]
    %v3221 = vld [vmem:[%s2774 + $0x309] sm:$0xff]
    %v3222 = vld [vmem:[%s2774 + $0x319] sm:$0xff]
    %v3223 = vld [vmem:[%s2774 + $0x321] sm:$0xff]
    %3288 = vrot.lane.b32.xlu0 %v3160, 42
    %v3289 = vpop.permute.xlu0 %3288
    %3290 = vrot.lane.b32.xlu0 %v3161, 42
    %v3291 = vpop.permute.xlu0 %3290
    %3292 = vrot.lane.b32.xlu0 %v3162, 42
    %v3293 = vpop.permute.xlu0 %3292
    %3294 = vrot.lane.b32.xlu0 %v3163, 42
    %v3295 = vpop.permute.xlu0 %3294
    %3296 = vrot.lane.b32.xlu0 %v3164, 42
    %v3297 = vpop.permute.xlu0 %3296
    %3298 = vrot.lane.b32.xlu0 %v3165, 42
    %v3299 = vpop.permute.xlu0 %3298
    %3300 = vrot.lane.b32.xlu0 %v3166, 42
    %v3301 = vpop.permute.xlu0 %3300
    %3302 = vrot.lane.b32.xlu0 %v3167, 42
    %v3303 = vpop.permute.xlu0 %3302
    %3304 = vrot.lane.b32.xlu0 %v3168, 42
    %v3305 = vpop.permute.xlu0 %3304
    %3306 = vrot.lane.b32.xlu0 %v3169, 42
    %v3307 = vpop.permute.xlu0 %3306
    %3308 = vrot.lane.b32.xlu0 %v3170, 42
    %v3309 = vpop.permute.xlu0 %3308
    %3310 = vrot.lane.b32.xlu0 %v3171, 42
    %v3311 = vpop.permute.xlu0 %3310
    %3312 = vrot.lane.b32.xlu0 %v3172, 42
    %v3313 = vpop.permute.xlu0 %3312
    %3314 = vrot.lane.b32.xlu0 %v3173, 42
    %v3315 = vpop.permute.xlu0 %3314
    %3316 = vrot.lane.b32.xlu0 %v3174, 42
    %v3317 = vpop.permute.xlu0 %3316
    %3318 = vrot.lane.b32.xlu0 %v3175, 42
    %v3319 = vpop.permute.xlu0 %3318
    %3320 = vrot.lane.b32.xlu0 %v3176, 42
    %v3321 = vpop.permute.xlu0 %3320
    %3322 = vrot.lane.b32.xlu0 %v3177, 42
    %v3323 = vpop.permute.xlu0 %3322
    %3324 = vrot.lane.b32.xlu0 %v3178, 42
    %v3325 = vpop.permute.xlu0 %3324
    %3326 = vrot.lane.b32.xlu0 %v3179, 42
    %v3327 = vpop.permute.xlu0 %3326
    %3328 = vrot.lane.b32.xlu0 %v3180, 42
    %v3329 = vpop.permute.xlu0 %3328
    %3330 = vrot.lane.b32.xlu0 %v3181, 42
    %v3331 = vpop.permute.xlu0 %3330
    %3332 = vrot.lane.b32.xlu0 %v3182, 42
    %v3333 = vpop.permute.xlu0 %3332
    %3334 = vrot.lane.b32.xlu0 %v3183, 42
    %v3335 = vpop.permute.xlu0 %3334
    %3336 = vrot.lane.b32.xlu0 %v3184, 42
    %v3337 = vpop.permute.xlu0 %3336
    %3338 = vrot.lane.b32.xlu0 %v3185, 42
    %v3339 = vpop.permute.xlu0 %3338
    %3340 = vrot.lane.b32.xlu0 %v3186, 42
    %v3341 = vpop.permute.xlu0 %3340
    %3342 = vrot.lane.b32.xlu0 %v3187, 42
    %v3343 = vpop.permute.xlu0 %3342
    %3344 = vrot.lane.b32.xlu0 %v3188, 42
    %v3345 = vpop.permute.xlu0 %3344
    %3346 = vrot.lane.b32.xlu0 %v3189, 42
    %v3347 = vpop.permute.xlu0 %3346
    %3348 = vrot.lane.b32.xlu0 %v3190, 42
    %v3349 = vpop.permute.xlu0 %3348
    %3350 = vrot.lane.b32.xlu0 %v3191, 42
    %v3351 = vpop.permute.xlu0 %3350
    %3352 = vrot.lane.b32.xlu0 %v3192, 42
    %v3353 = vpop.permute.xlu0 %3352
    %3354 = vrot.lane.b32.xlu0 %v3193, 42
    %v3355 = vpop.permute.xlu0 %3354
    %3356 = vrot.lane.b32.xlu0 %v3194, 42
    %v3357 = vpop.permute.xlu0 %3356
    %3358 = vrot.lane.b32.xlu0 %v3195, 42
    %v3359 = vpop.permute.xlu0 %3358
    %3360 = vrot.lane.b32.xlu0 %v3196, 42
    %v3361 = vpop.permute.xlu0 %3360
    %3362 = vrot.lane.b32.xlu0 %v3197, 42
    %v3363 = vpop.permute.xlu0 %3362
    %3364 = vrot.lane.b32.xlu0 %v3198, 42
    %v3365 = vpop.permute.xlu0 %3364
    %3366 = vrot.lane.b32.xlu0 %v3199, 42
    %v3367 = vpop.permute.xlu0 %3366
    %3368 = vrot.lane.b32.xlu0 %v3200, 42
    %v3369 = vpop.permute.xlu0 %3368
    %3370 = vrot.lane.b32.xlu0 %v3201, 42
    %v3371 = vpop.permute.xlu0 %3370
    %3372 = vrot.lane.b32.xlu0 %v3202, 42
    %v3373 = vpop.permute.xlu0 %3372
    %3374 = vrot.lane.b32.xlu0 %v3203, 42
    %v3375 = vpop.permute.xlu0 %3374
    %3376 = vrot.lane.b32.xlu0 %v3204, 42
    %v3377 = vpop.permute.xlu0 %3376
    %3378 = vrot.lane.b32.xlu0 %v3205, 42
    %v3379 = vpop.permute.xlu0 %3378
    %3380 = vrot.lane.b32.xlu0 %v3206, 42
    %v3381 = vpop.permute.xlu0 %3380
    %3382 = vrot.lane.b32.xlu0 %v3207, 42
    %v3383 = vpop.permute.xlu0 %3382
    %3384 = vrot.lane.b32.xlu0 %v3208, 42
    %v3385 = vpop.permute.xlu0 %3384
    %3386 = vrot.lane.b32.xlu0 %v3209, 42
    %v3387 = vpop.permute.xlu0 %3386
    %3388 = vrot.lane.b32.xlu0 %v3210, 42
    %v3389 = vpop.permute.xlu0 %3388
    %3390 = vrot.lane.b32.xlu0 %v3211, 42
    %v3391 = vpop.permute.xlu0 %3390
    %3392 = vrot.lane.b32.xlu0 %v3212, 42
    %v3393 = vpop.permute.xlu0 %3392
    %3394 = vrot.lane.b32.xlu0 %v3213, 42
    %v3395 = vpop.permute.xlu0 %3394
    %3396 = vrot.lane.b32.xlu0 %v3214, 42
    %v3397 = vpop.permute.xlu0 %3396
    %3398 = vrot.lane.b32.xlu0 %v3215, 42
    %v3399 = vpop.permute.xlu0 %3398
    %3400 = vrot.lane.b32.xlu0 %v3216, 42
    %v3401 = vpop.permute.xlu0 %3400
    %3402 = vrot.lane.b32.xlu0 %v3217, 42
    %v3403 = vpop.permute.xlu0 %3402
    %3404 = vrot.lane.b32.xlu0 %v3218, 42
    %v3405 = vpop.permute.xlu0 %3404
    %3406 = vrot.lane.b32.xlu0 %v3219, 42
    %v3407 = vpop.permute.xlu0 %3406
    %3408 = vrot.lane.b32.xlu0 %v3220, 42
    %v3409 = vpop.permute.xlu0 %3408
    %3410 = vrot.lane.b32.xlu0 %v3221, 42
    %v3411 = vpop.permute.xlu0 %3410
    %3412 = vrot.lane.b32.xlu0 %v3222, 42
    %v3413 = vpop.permute.xlu0 %3412
    %3414 = vrot.lane.b32.xlu0 %v3223, 42
    %v3415 = vpop.permute.xlu0 %3414
    %vm3480 = vcmask 392528
    %3481 = vst.msk [vmem:[#allocation3] sm:$0xff] %vm3480, %v3289
    %3482 = vst.msk [vmem:[#allocation3 + $0x8] sm:$0xff] %vm3480, %v3291
    %3483 = vst.msk [vmem:[#allocation3 + $0x10] sm:$0xff] %vm3480, %v3293
    %3484 = vst.msk [vmem:[#allocation3 + $0x18] sm:$0xff] %vm3480, %v3295
    %3485 = vst.msk [vmem:[#allocation3 + $0x20] sm:$0xff] %vm3480, %v3297
    %3486 = vst.msk [vmem:[#allocation3 + $0x28] sm:$0xff] %vm3480, %v3299
    %3487 = vst.msk [vmem:[#allocation3 + $0x30] sm:$0xff] %vm3480, %v3301
    %3488 = vst.msk [vmem:[#allocation3 + $0x38] sm:$0xff] %vm3480, %v3303
    %3489 = vst.msk [vmem:[#allocation3 + $0x40] sm:$0xff] %vm3480, %v3305
    %3490 = vst.msk [vmem:[#allocation3 + $0x48] sm:$0xff] %vm3480, %v3307
    %3491 = vst.msk [vmem:[#allocation3 + $0x50] sm:$0xff] %vm3480, %v3309
    %3492 = vst.msk [vmem:[#allocation3 + $0x58] sm:$0xff] %vm3480, %v3311
    %3493 = vst.msk [vmem:[#allocation3 + $0x60] sm:$0xff] %vm3480, %v3313
    %3494 = vst.msk [vmem:[#allocation3 + $0x68] sm:$0xff] %vm3480, %v3315
    %3495 = vst.msk [vmem:[#allocation3 + $0x70] sm:$0xff] %vm3480, %v3317
    %3496 = vst.msk [vmem:[#allocation3 + $0x78] sm:$0xff] %vm3480, %v3319
    %3497 = vst.msk [vmem:[#allocation3 + $0x80] sm:$0xff] %vm3480, %v3321
    %3498 = vst.msk [vmem:[#allocation3 + $0x88] sm:$0xff] %vm3480, %v3323
    %3499 = vst.msk [vmem:[#allocation3 + $0x90] sm:$0xff] %vm3480, %v3325
    %3500 = vst.msk [vmem:[#allocation3 + $0x98] sm:$0xff] %vm3480, %v3327
    %3501 = vst.msk [vmem:[#allocation3 + $0xa0] sm:$0xff] %vm3480, %v3329
    %3502 = vst.msk [vmem:[#allocation3 + $0xa8] sm:$0xff] %vm3480, %v3331
    %3503 = vst.msk [vmem:[#allocation3 + $0xb0] sm:$0xff] %vm3480, %v3333
    %3504 = vst.msk [vmem:[#allocation3 + $0xb8] sm:$0xff] %vm3480, %v3335
    %3505 = vst.msk [vmem:[#allocation3 + $0xc0] sm:$0xff] %vm3480, %v3337
    %3506 = vst.msk [vmem:[#allocation3 + $0xc8] sm:$0xff] %vm3480, %v3339
    %3507 = vst.msk [vmem:[#allocation3 + $0xd0] sm:$0xff] %vm3480, %v3341
    %3508 = vst.msk [vmem:[#allocation3 + $0xd8] sm:$0xff] %vm3480, %v3343
    %3509 = vst.msk [vmem:[#allocation3 + $0xe0] sm:$0xff] %vm3480, %v3345
    %3510 = vst.msk [vmem:[#allocation3 + $0xe8] sm:$0xff] %vm3480, %v3347
    %3511 = vst.msk [vmem:[#allocation3 + $0xf0] sm:$0xff] %vm3480, %v3349
    %3512 = vst.msk [vmem:[#allocation3 + $0xf8] sm:$0xff] %vm3480, %v3351
    %3513 = vst.msk [vmem:[#allocation3 + $0x100] sm:$0xff] %vm3480, %v3353
    %3514 = vst.msk [vmem:[#allocation3 + $0x108] sm:$0xff] %vm3480, %v3355
    %3515 = vst.msk [vmem:[#allocation3 + $0x110] sm:$0xff] %vm3480, %v3357
    %3516 = vst.msk [vmem:[#allocation3 + $0x118] sm:$0xff] %vm3480, %v3359
    %3517 = vst.msk [vmem:[#allocation3 + $0x120] sm:$0xff] %vm3480, %v3361
    %3518 = vst.msk [vmem:[#allocation3 + $0x128] sm:$0xff] %vm3480, %v3363
    %3519 = vst.msk [vmem:[#allocation3 + $0x130] sm:$0xff] %vm3480, %v3365
    %3520 = vst.msk [vmem:[#allocation3 + $0x138] sm:$0xff] %vm3480, %v3367
    %3521 = vst.msk [vmem:[#allocation3 + $0x140] sm:$0xff] %vm3480, %v3369
    %3522 = vst.msk [vmem:[#allocation3 + $0x148] sm:$0xff] %vm3480, %v3371
    %3523 = vst.msk [vmem:[#allocation3 + $0x150] sm:$0xff] %vm3480, %v3373
    %3524 = vst.msk [vmem:[#allocation3 + $0x158] sm:$0xff] %vm3480, %v3375
    %3525 = vst.msk [vmem:[#allocation3 + $0x160] sm:$0xff] %vm3480, %v3377
    %3526 = vst.msk [vmem:[#allocation3 + $0x168] sm:$0xff] %vm3480, %v3379
    %3527 = vst.msk [vmem:[#allocation3 + $0x170] sm:$0xff] %vm3480, %v3381
    %3528 = vst.msk [vmem:[#allocation3 + $0x178] sm:$0xff] %vm3480, %v3383
    %3529 = vst.msk [vmem:[#allocation3 + $0x180] sm:$0xff] %vm3480, %v3385
    %3530 = vst.msk [vmem:[#allocation3 + $0x188] sm:$0xff] %vm3480, %v3387
    %3531 = vst.msk [vmem:[#allocation3 + $0x190] sm:$0xff] %vm3480, %v3389
    %3532 = vst.msk [vmem:[#allocation3 + $0x198] sm:$0xff] %vm3480, %v3391
    %3533 = vst.msk [vmem:[#allocation3 + $0x1a0] sm:$0xff] %vm3480, %v3393
    %3534 = vst.msk [vmem:[#allocation3 + $0x1a8] sm:$0xff] %vm3480, %v3395
    %3535 = vst.msk [vmem:[#allocation3 + $0x1b0] sm:$0xff] %vm3480, %v3397
    %3536 = vst.msk [vmem:[#allocation3 + $0x1b8] sm:$0xff] %vm3480, %v3399
    %3537 = vst.msk [vmem:[#allocation3 + $0x1c0] sm:$0xff] %vm3480, %v3401
    %3538 = vst.msk [vmem:[#allocation3 + $0x1c8] sm:$0xff] %vm3480, %v3403
    %3539 = vst.msk [vmem:[#allocation3 + $0x1d0] sm:$0xff] %vm3480, %v3405
    %3540 = vst.msk [vmem:[#allocation3 + $0x1d8] sm:$0xff] %vm3480, %v3407
    %3541 = vst.msk [vmem:[#allocation3 + $0x1e0] sm:$0xff] %vm3480, %v3409
    %3542 = vst.msk [vmem:[#allocation3 + $0x1e8] sm:$0xff] %vm3480, %v3411
    %3543 = vst.msk [vmem:[#allocation3 + $0x1f0] sm:$0xff] %vm3480, %v3413
    %3544 = vst.msk [vmem:[#allocation3 + $0x1f8] sm:$0xff] %vm3480, %v3415
    %v3545 = vld [vmem:[%s2774 + $0x2] sm:$0xff]
    %v3546 = vld [vmem:[%s2774 + $0xa] sm:$0xff]
    %v3547 = vld [vmem:[%s2774 + $0x1a] sm:$0xff]
    %v3548 = vld [vmem:[%s2774 + $0x22] sm:$0xff]
    %v3549 = vld [vmem:[%s2774 + $0x32] sm:$0xff]
    %v3550 = vld [vmem:[%s2774 + $0x3a] sm:$0xff]
    %v3551 = vld [vmem:[%s2774 + $0x4a] sm:$0xff]
    %v3552 = vld [vmem:[%s2774 + $0x52] sm:$0xff]
    %v3553 = vld [vmem:[%s2774 + $0x62] sm:$0xff]
    %v3554 = vld [vmem:[%s2774 + $0x6a] sm:$0xff]
    %v3555 = vld [vmem:[%s2774 + $0x7a] sm:$0xff]
    %v3556 = vld [vmem:[%s2774 + $0x82] sm:$0xff]
    %v3557 = vld [vmem:[%s2774 + $0x92] sm:$0xff]
    %v3558 = vld [vmem:[%s2774 + $0x9a] sm:$0xff]
    %v3559 = vld [vmem:[%s2774 + $0xaa] sm:$0xff]
    %v3560 = vld [vmem:[%s2774 + $0xb2] sm:$0xff]
    %v3561 = vld [vmem:[%s2774 + $0xc2] sm:$0xff]
    %v3562 = vld [vmem:[%s2774 + $0xca] sm:$0xff]
    %v3563 = vld [vmem:[%s2774 + $0xda] sm:$0xff]
    %v3564 = vld [vmem:[%s2774 + $0xe2] sm:$0xff]
    %v3565 = vld [vmem:[%s2774 + $0xf2] sm:$0xff]
    %v3566 = vld [vmem:[%s2774 + $0xfa] sm:$0xff]
    %v3567 = vld [vmem:[%s2774 + $0x10a] sm:$0xff]
    %v3568 = vld [vmem:[%s2774 + $0x112] sm:$0xff]
    %v3569 = vld [vmem:[%s2774 + $0x122] sm:$0xff]
    %v3570 = vld [vmem:[%s2774 + $0x12a] sm:$0xff]
    %v3571 = vld [vmem:[%s2774 + $0x13a] sm:$0xff]
    %v3572 = vld [vmem:[%s2774 + $0x142] sm:$0xff]
    %v3573 = vld [vmem:[%s2774 + $0x152] sm:$0xff]
    %v3574 = vld [vmem:[%s2774 + $0x15a] sm:$0xff]
    %v3575 = vld [vmem:[%s2774 + $0x16a] sm:$0xff]
    %v3576 = vld [vmem:[%s2774 + $0x172] sm:$0xff]
    %v3577 = vld [vmem:[%s2774 + $0x1b2] sm:$0xff]
    %v3578 = vld [vmem:[%s2774 + $0x1ba] sm:$0xff]
    %v3579 = vld [vmem:[%s2774 + $0x1ca] sm:$0xff]
    %v3580 = vld [vmem:[%s2774 + $0x1d2] sm:$0xff]
    %v3581 = vld [vmem:[%s2774 + $0x1e2] sm:$0xff]
    %v3582 = vld [vmem:[%s2774 + $0x1ea] sm:$0xff]
    %v3583 = vld [vmem:[%s2774 + $0x1fa] sm:$0xff]
    %v3584 = vld [vmem:[%s2774 + $0x202] sm:$0xff]
    %v3585 = vld [vmem:[%s2774 + $0x212] sm:$0xff]
    %v3586 = vld [vmem:[%s2774 + $0x21a] sm:$0xff]
    %v3587 = vld [vmem:[%s2774 + $0x22a] sm:$0xff]
    %v3588 = vld [vmem:[%s2774 + $0x232] sm:$0xff]
    %v3589 = vld [vmem:[%s2774 + $0x242] sm:$0xff]
    %v3590 = vld [vmem:[%s2774 + $0x24a] sm:$0xff]
    %v3591 = vld [vmem:[%s2774 + $0x25a] sm:$0xff]
    %v3592 = vld [vmem:[%s2774 + $0x262] sm:$0xff]
    %v3593 = vld [vmem:[%s2774 + $0x272] sm:$0xff]
    %v3594 = vld [vmem:[%s2774 + $0x27a] sm:$0xff]
    %v3595 = vld [vmem:[%s2774 + $0x28a] sm:$0xff]
    %v3596 = vld [vmem:[%s2774 + $0x292] sm:$0xff]
    %v3597 = vld [vmem:[%s2774 + $0x2a2] sm:$0xff]
    %v3598 = vld [vmem:[%s2774 + $0x2aa] sm:$0xff]
    %v3599 = vld [vmem:[%s2774 + $0x2ba] sm:$0xff]
    %v3600 = vld [vmem:[%s2774 + $0x2c2] sm:$0xff]
    %v3601 = vld [vmem:[%s2774 + $0x2d2] sm:$0xff]
    %v3602 = vld [vmem:[%s2774 + $0x2da] sm:$0xff]
    %v3603 = vld [vmem:[%s2774 + $0x2ea] sm:$0xff]
    %v3604 = vld [vmem:[%s2774 + $0x2f2] sm:$0xff]
    %v3605 = vld [vmem:[%s2774 + $0x302] sm:$0xff]
    %v3606 = vld [vmem:[%s2774 + $0x30a] sm:$0xff]
    %v3607 = vld [vmem:[%s2774 + $0x31a] sm:$0xff]
    %v3608 = vld [vmem:[%s2774 + $0x322] sm:$0xff]
    %3673 = vrot.lane.b32.xlu0 %v3545, 48
    %v3674 = vpop.permute.xlu0 %3673
    %3675 = vrot.lane.b32.xlu0 %v3546, 48
    %v3676 = vpop.permute.xlu0 %3675
    %3677 = vrot.lane.b32.xlu0 %v3547, 48
    %v3678 = vpop.permute.xlu0 %3677
    %3679 = vrot.lane.b32.xlu0 %v3548, 48
    %v3680 = vpop.permute.xlu0 %3679
    %3681 = vrot.lane.b32.xlu0 %v3549, 48
    %v3682 = vpop.permute.xlu0 %3681
    %3683 = vrot.lane.b32.xlu0 %v3550, 48
    %v3684 = vpop.permute.xlu0 %3683
    %3685 = vrot.lane.b32.xlu0 %v3551, 48
    %v3686 = vpop.permute.xlu0 %3685
    %3687 = vrot.lane.b32.xlu0 %v3552, 48
    %v3688 = vpop.permute.xlu0 %3687
    %3689 = vrot.lane.b32.xlu0 %v3553, 48
    %v3690 = vpop.permute.xlu0 %3689
    %3691 = vrot.lane.b32.xlu0 %v3554, 48
    %v3692 = vpop.permute.xlu0 %3691
    %3693 = vrot.lane.b32.xlu0 %v3555, 48
    %v3694 = vpop.permute.xlu0 %3693
    %3695 = vrot.lane.b32.xlu0 %v3556, 48
    %v3696 = vpop.permute.xlu0 %3695
    %3697 = vrot.lane.b32.xlu0 %v3557, 48
    %v3698 = vpop.permute.xlu0 %3697
    %3699 = vrot.lane.b32.xlu0 %v3558, 48
    %v3700 = vpop.permute.xlu0 %3699
    %3701 = vrot.lane.b32.xlu0 %v3559, 48
    %v3702 = vpop.permute.xlu0 %3701
    %3703 = vrot.lane.b32.xlu0 %v3560, 48
    %v3704 = vpop.permute.xlu0 %3703
    %3705 = vrot.lane.b32.xlu0 %v3561, 48
    %v3706 = vpop.permute.xlu0 %3705
    %3707 = vrot.lane.b32.xlu0 %v3562, 48
    %v3708 = vpop.permute.xlu0 %3707
    %3709 = vrot.lane.b32.xlu0 %v3563, 48
    %v3710 = vpop.permute.xlu0 %3709
    %3711 = vrot.lane.b32.xlu0 %v3564, 48
    %v3712 = vpop.permute.xlu0 %3711
    %3713 = vrot.lane.b32.xlu0 %v3565, 48
    %v3714 = vpop.permute.xlu0 %3713
    %3715 = vrot.lane.b32.xlu0 %v3566, 48
    %v3716 = vpop.permute.xlu0 %3715
    %3717 = vrot.lane.b32.xlu0 %v3567, 48
    %v3718 = vpop.permute.xlu0 %3717
    %3719 = vrot.lane.b32.xlu0 %v3568, 48
    %v3720 = vpop.permute.xlu0 %3719
    %3721 = vrot.lane.b32.xlu0 %v3569, 48
    %v3722 = vpop.permute.xlu0 %3721
    %3723 = vrot.lane.b32.xlu0 %v3570, 48
    %v3724 = vpop.permute.xlu0 %3723
    %3725 = vrot.lane.b32.xlu0 %v3571, 48
    %v3726 = vpop.permute.xlu0 %3725
    %3727 = vrot.lane.b32.xlu0 %v3572, 48
    %v3728 = vpop.permute.xlu0 %3727
    %3729 = vrot.lane.b32.xlu0 %v3573, 48
    %v3730 = vpop.permute.xlu0 %3729
    %3731 = vrot.lane.b32.xlu0 %v3574, 48
    %v3732 = vpop.permute.xlu0 %3731
    %3733 = vrot.lane.b32.xlu0 %v3575, 48
    %v3734 = vpop.permute.xlu0 %3733
    %3735 = vrot.lane.b32.xlu0 %v3576, 48
    %v3736 = vpop.permute.xlu0 %3735
    %3737 = vrot.lane.b32.xlu0 %v3577, 48
    %v3738 = vpop.permute.xlu0 %3737
    %3739 = vrot.lane.b32.xlu0 %v3578, 48
    %v3740 = vpop.permute.xlu0 %3739
    %3741 = vrot.lane.b32.xlu0 %v3579, 48
    %v3742 = vpop.permute.xlu0 %3741
    %3743 = vrot.lane.b32.xlu0 %v3580, 48
    %v3744 = vpop.permute.xlu0 %3743
    %3745 = vrot.lane.b32.xlu0 %v3581, 48
    %v3746 = vpop.permute.xlu0 %3745
    %3747 = vrot.lane.b32.xlu0 %v3582, 48
    %v3748 = vpop.permute.xlu0 %3747
    %3749 = vrot.lane.b32.xlu0 %v3583, 48
    %v3750 = vpop.permute.xlu0 %3749
    %3751 = vrot.lane.b32.xlu0 %v3584, 48
    %v3752 = vpop.permute.xlu0 %3751
    %3753 = vrot.lane.b32.xlu0 %v3585, 48
    %v3754 = vpop.permute.xlu0 %3753
    %3755 = vrot.lane.b32.xlu0 %v3586, 48
    %v3756 = vpop.permute.xlu0 %3755
    %3757 = vrot.lane.b32.xlu0 %v3587, 48
    %v3758 = vpop.permute.xlu0 %3757
    %3759 = vrot.lane.b32.xlu0 %v3588, 48
    %v3760 = vpop.permute.xlu0 %3759
    %3761 = vrot.lane.b32.xlu0 %v3589, 48
    %v3762 = vpop.permute.xlu0 %3761
    %3763 = vrot.lane.b32.xlu0 %v3590, 48
    %v3764 = vpop.permute.xlu0 %3763
    %3765 = vrot.lane.b32.xlu0 %v3591, 48
    %v3766 = vpop.permute.xlu0 %3765
    %3767 = vrot.lane.b32.xlu0 %v3592, 48
    %v3768 = vpop.permute.xlu0 %3767
    %3769 = vrot.lane.b32.xlu0 %v3593, 48
    %v3770 = vpop.permute.xlu0 %3769
    %3771 = vrot.lane.b32.xlu0 %v3594, 48
    %v3772 = vpop.permute.xlu0 %3771
    %3773 = vrot.lane.b32.xlu0 %v3595, 48
    %v3774 = vpop.permute.xlu0 %3773
    %3775 = vrot.lane.b32.xlu0 %v3596, 48
    %v3776 = vpop.permute.xlu0 %3775
    %3777 = vrot.lane.b32.xlu0 %v3597, 48
    %v3778 = vpop.permute.xlu0 %3777
    %3779 = vrot.lane.b32.xlu0 %v3598, 48
    %v3780 = vpop.permute.xlu0 %3779
    %3781 = vrot.lane.b32.xlu0 %v3599, 48
    %v3782 = vpop.permute.xlu0 %3781
    %3783 = vrot.lane.b32.xlu0 %v3600, 48
    %v3784 = vpop.permute.xlu0 %3783
    %3785 = vrot.lane.b32.xlu0 %v3601, 48
    %v3786 = vpop.permute.xlu0 %3785
    %3787 = vrot.lane.b32.xlu0 %v3602, 48
    %v3788 = vpop.permute.xlu0 %3787
    %3789 = vrot.lane.b32.xlu0 %v3603, 48
    %v3790 = vpop.permute.xlu0 %3789
    %3791 = vrot.lane.b32.xlu0 %v3604, 48
    %v3792 = vpop.permute.xlu0 %3791
    %3793 = vrot.lane.b32.xlu0 %v3605, 48
    %v3794 = vpop.permute.xlu0 %3793
    %3795 = vrot.lane.b32.xlu0 %v3606, 48
    %v3796 = vpop.permute.xlu0 %3795
    %3797 = vrot.lane.b32.xlu0 %v3607, 48
    %v3798 = vpop.permute.xlu0 %3797
    %3799 = vrot.lane.b32.xlu0 %v3608, 48
    %v3800 = vpop.permute.xlu0 %3799
    %vm3865 = vcmask 441728
    %3866 = vst.msk [vmem:[#allocation3] sm:$0xff] %vm3865, %v3674
    %3867 = vst.msk [vmem:[#allocation3 + $0x8] sm:$0xff] %vm3865, %v3676
    %3868 = vst.msk [vmem:[#allocation3 + $0x10] sm:$0xff] %vm3865, %v3678
    %3869 = vst.msk [vmem:[#allocation3 + $0x18] sm:$0xff] %vm3865, %v3680
    %3870 = vst.msk [vmem:[#allocation3 + $0x20] sm:$0xff] %vm3865, %v3682
    %3871 = vst.msk [vmem:[#allocation3 + $0x28] sm:$0xff] %vm3865, %v3684
    %3872 = vst.msk [vmem:[#allocation3 + $0x30] sm:$0xff] %vm3865, %v3686
    %3873 = vst.msk [vmem:[#allocation3 + $0x38] sm:$0xff] %vm3865, %v3688
    %3874 = vst.msk [vmem:[#allocation3 + $0x40] sm:$0xff] %vm3865, %v3690
    %3875 = vst.msk [vmem:[#allocation3 + $0x48] sm:$0xff] %vm3865, %v3692
    %3876 = vst.msk [vmem:[#allocation3 + $0x50] sm:$0xff] %vm3865, %v3694
    %3877 = vst.msk [vmem:[#allocation3 + $0x58] sm:$0xff] %vm3865, %v3696
    %3878 = vst.msk [vmem:[#allocation3 + $0x60] sm:$0xff] %vm3865, %v3698
    %3879 = vst.msk [vmem:[#allocation3 + $0x68] sm:$0xff] %vm3865, %v3700
    %3880 = vst.msk [vmem:[#allocation3 + $0x70] sm:$0xff] %vm3865, %v3702
    %3881 = vst.msk [vmem:[#allocation3 + $0x78] sm:$0xff] %vm3865, %v3704
    %3882 = vst.msk [vmem:[#allocation3 + $0x80] sm:$0xff] %vm3865, %v3706
    %3883 = vst.msk [vmem:[#allocation3 + $0x88] sm:$0xff] %vm3865, %v3708
    %3884 = vst.msk [vmem:[#allocation3 + $0x90] sm:$0xff] %vm3865, %v3710
    %3885 = vst.msk [vmem:[#allocation3 + $0x98] sm:$0xff] %vm3865, %v3712
    %3886 = vst.msk [vmem:[#allocation3 + $0xa0] sm:$0xff] %vm3865, %v3714
    %3887 = vst.msk [vmem:[#allocation3 + $0xa8] sm:$0xff] %vm3865, %v3716
    %3888 = vst.msk [vmem:[#allocation3 + $0xb0] sm:$0xff] %vm3865, %v3718
    %3889 = vst.msk [vmem:[#allocation3 + $0xb8] sm:$0xff] %vm3865, %v3720
    %3890 = vst.msk [vmem:[#allocation3 + $0xc0] sm:$0xff] %vm3865, %v3722
    %3891 = vst.msk [vmem:[#allocation3 + $0xc8] sm:$0xff] %vm3865, %v3724
    %3892 = vst.msk [vmem:[#allocation3 + $0xd0] sm:$0xff] %vm3865, %v3726
    %3893 = vst.msk [vmem:[#allocation3 + $0xd8] sm:$0xff] %vm3865, %v3728
    %3894 = vst.msk [vmem:[#allocation3 + $0xe0] sm:$0xff] %vm3865, %v3730
    %3895 = vst.msk [vmem:[#allocation3 + $0xe8] sm:$0xff] %vm3865, %v3732
    %3896 = vst.msk [vmem:[#allocation3 + $0xf0] sm:$0xff] %vm3865, %v3734
    %3897 = vst.msk [vmem:[#allocation3 + $0xf8] sm:$0xff] %vm3865, %v3736
    %3898 = vst.msk [vmem:[#allocation3 + $0x100] sm:$0xff] %vm3865, %v3738
    %3899 = vst.msk [vmem:[#allocation3 + $0x108] sm:$0xff] %vm3865, %v3740
    %3900 = vst.msk [vmem:[#allocation3 + $0x110] sm:$0xff] %vm3865, %v3742
    %3901 = vst.msk [vmem:[#allocation3 + $0x118] sm:$0xff] %vm3865, %v3744
    %3902 = vst.msk [vmem:[#allocation3 + $0x120] sm:$0xff] %vm3865, %v3746
    %3903 = vst.msk [vmem:[#allocation3 + $0x128] sm:$0xff] %vm3865, %v3748
    %3904 = vst.msk [vmem:[#allocation3 + $0x130] sm:$0xff] %vm3865, %v3750
    %3905 = vst.msk [vmem:[#allocation3 + $0x138] sm:$0xff] %vm3865, %v3752
    %3906 = vst.msk [vmem:[#allocation3 + $0x140] sm:$0xff] %vm3865, %v3754
    %3907 = vst.msk [vmem:[#allocation3 + $0x148] sm:$0xff] %vm3865, %v3756
    %3908 = vst.msk [vmem:[#allocation3 + $0x150] sm:$0xff] %vm3865, %v3758
    %3909 = vst.msk [vmem:[#allocation3 + $0x158] sm:$0xff] %vm3865, %v3760
    %3910 = vst.msk [vmem:[#allocation3 + $0x160] sm:$0xff] %vm3865, %v3762
    %3911 = vst.msk [vmem:[#allocation3 + $0x168] sm:$0xff] %vm3865, %v3764
    %3912 = vst.msk [vmem:[#allocation3 + $0x170] sm:$0xff] %vm3865, %v3766
    %3913 = vst.msk [vmem:[#allocation3 + $0x178] sm:$0xff] %vm3865, %v3768
    %3914 = vst.msk [vmem:[#allocation3 + $0x180] sm:$0xff] %vm3865, %v3770
    %3915 = vst.msk [vmem:[#allocation3 + $0x188] sm:$0xff] %vm3865, %v3772
    %3916 = vst.msk [vmem:[#allocation3 + $0x190] sm:$0xff] %vm3865, %v3774
    %3917 = vst.msk [vmem:[#allocation3 + $0x198] sm:$0xff] %vm3865, %v3776
    %3918 = vst.msk [vmem:[#allocation3 + $0x1a0] sm:$0xff] %vm3865, %v3778
    %3919 = vst.msk [vmem:[#allocation3 + $0x1a8] sm:$0xff] %vm3865, %v3780
    %3920 = vst.msk [vmem:[#allocation3 + $0x1b0] sm:$0xff] %vm3865, %v3782
    %3921 = vst.msk [vmem:[#allocation3 + $0x1b8] sm:$0xff] %vm3865, %v3784
    %3922 = vst.msk [vmem:[#allocation3 + $0x1c0] sm:$0xff] %vm3865, %v3786
    %3923 = vst.msk [vmem:[#allocation3 + $0x1c8] sm:$0xff] %vm3865, %v3788
    %3924 = vst.msk [vmem:[#allocation3 + $0x1d0] sm:$0xff] %vm3865, %v3790
    %3925 = vst.msk [vmem:[#allocation3 + $0x1d8] sm:$0xff] %vm3865, %v3792
    %3926 = vst.msk [vmem:[#allocation3 + $0x1e0] sm:$0xff] %vm3865, %v3794
    %3927 = vst.msk [vmem:[#allocation3 + $0x1e8] sm:$0xff] %vm3865, %v3796
    %3928 = vst.msk [vmem:[#allocation3 + $0x1f0] sm:$0xff] %vm3865, %v3798
    %3929 = vst.msk [vmem:[#allocation3 + $0x1f8] sm:$0xff] %vm3865, %v3800
    %v3930 = vld [vmem:[#allocation3] sm:$0xff]
    %v3931 = vld [vmem:[#allocation3 + $0x8] sm:$0xff]
    %v3932 = vld [vmem:[#allocation3 + $0x10] sm:$0xff]
    %v3933 = vld [vmem:[#allocation3 + $0x18] sm:$0xff]
    %v3934 = vld [vmem:[#allocation3 + $0x20] sm:$0xff]
    %v3935 = vld [vmem:[#allocation3 + $0x28] sm:$0xff]
    %v3936 = vld [vmem:[#allocation3 + $0x30] sm:$0xff]
    %v3937 = vld [vmem:[#allocation3 + $0x38] sm:$0xff]
    %v3938 = vld [vmem:[#allocation3 + $0x40] sm:$0xff]
    %v3939 = vld [vmem:[#allocation3 + $0x48] sm:$0xff]
    %v3940 = vld [vmem:[#allocation3 + $0x50] sm:$0xff]
    %v3941 = vld [vmem:[#allocation3 + $0x58] sm:$0xff]
    %v3942 = vld [vmem:[#allocation3 + $0x60] sm:$0xff]
    %v3943 = vld [vmem:[#allocation3 + $0x68] sm:$0xff]
    %v3944 = vld [vmem:[#allocation3 + $0x70] sm:$0xff]
    %v3945 = vld [vmem:[#allocation3 + $0x78] sm:$0xff]
    %v3946 = vld [vmem:[#allocation3 + $0x80] sm:$0xff]
    %v3947 = vld [vmem:[#allocation3 + $0x88] sm:$0xff]
    %v3948 = vld [vmem:[#allocation3 + $0x90] sm:$0xff]
    %v3949 = vld [vmem:[#allocation3 + $0x98] sm:$0xff]
    %v3950 = vld [vmem:[#allocation3 + $0xa0] sm:$0xff]
    %v3951 = vld [vmem:[#allocation3 + $0xa8] sm:$0xff]
    %v3952 = vld [vmem:[#allocation3 + $0xb0] sm:$0xff]
    %v3953 = vld [vmem:[#allocation3 + $0xb8] sm:$0xff]
    %v3954 = vld [vmem:[#allocation3 + $0xc0] sm:$0xff]
    %v3955 = vld [vmem:[#allocation3 + $0xc8] sm:$0xff]
    %v3956 = vld [vmem:[#allocation3 + $0xd0] sm:$0xff]
    %v3957 = vld [vmem:[#allocation3 + $0xd8] sm:$0xff]
    %v3958 = vld [vmem:[#allocation3 + $0xe0] sm:$0xff]
    %v3959 = vld [vmem:[#allocation3 + $0xe8] sm:$0xff]
    %v3960 = vld [vmem:[#allocation3 + $0xf0] sm:$0xff]
    %v3961 = vld [vmem:[#allocation3 + $0xf8] sm:$0xff]
    %v3962 = vld [vmem:[#allocation3 + $0x100] sm:$0xff]
    %v3963 = vld [vmem:[#allocation3 + $0x108] sm:$0xff]
    %v3964 = vld [vmem:[#allocation3 + $0x110] sm:$0xff]
    %v3965 = vld [vmem:[#allocation3 + $0x118] sm:$0xff]
    %v3966 = vld [vmem:[#allocation3 + $0x120] sm:$0xff]
    %v3967 = vld [vmem:[#allocation3 + $0x128] sm:$0xff]
    %v3968 = vld [vmem:[#allocation3 + $0x130] sm:$0xff]
    %v3969 = vld [vmem:[#allocation3 + $0x138] sm:$0xff]
    %v3970 = vld [vmem:[#allocation3 + $0x140] sm:$0xff]
    %v3971 = vld [vmem:[#allocation3 + $0x148] sm:$0xff]
    %v3972 = vld [vmem:[#allocation3 + $0x150] sm:$0xff]
    %v3973 = vld [vmem:[#allocation3 + $0x158] sm:$0xff]
    %v3974 = vld [vmem:[#allocation3 + $0x160] sm:$0xff]
    %v3975 = vld [vmem:[#allocation3 + $0x168] sm:$0xff]
    %v3976 = vld [vmem:[#allocation3 + $0x170] sm:$0xff]
    %v3977 = vld [vmem:[#allocation3 + $0x178] sm:$0xff]
    %v3978 = vld [vmem:[#allocation3 + $0x180] sm:$0xff]
    %v3979 = vld [vmem:[#allocation3 + $0x188] sm:$0xff]
    %v3980 = vld [vmem:[#allocation3 + $0x190] sm:$0xff]
    %v3981 = vld [vmem:[#allocation3 + $0x198] sm:$0xff]
    %v3982 = vld [vmem:[#allocation3 + $0x1a0] sm:$0xff]
    %v3983 = vld [vmem:[#allocation3 + $0x1a8] sm:$0xff]
    %v3984 = vld [vmem:[#allocation3 + $0x1b0] sm:$0xff]
    %v3985 = vld [vmem:[#allocation3 + $0x1b8] sm:$0xff]
    %v3986 = vld [vmem:[#allocation3 + $0x1c0] sm:$0xff]
    %v3987 = vld [vmem:[#allocation3 + $0x1c8] sm:$0xff]
    %v3988 = vld [vmem:[#allocation3 + $0x1d0] sm:$0xff]
    %v3989 = vld [vmem:[#allocation3 + $0x1d8] sm:$0xff]
    %v3990 = vld [vmem:[#allocation3 + $0x1e0] sm:$0xff]
    %v3991 = vld [vmem:[#allocation3 + $0x1e8] sm:$0xff]
    %v3992 = vld [vmem:[#allocation3 + $0x1f0] sm:$0xff]
    %v3993 = vld [vmem:[#allocation3 + $0x1f8] sm:$0xff]
    %v3994 = vpack.c.bf16 %v3931, %v3930
    %v3995 = vpack.c.bf16 %v3933, %v3932
    %v3996 = vpack.c.bf16 %v3935, %v3934
    %v3997 = vpack.c.bf16 %v3937, %v3936
    %v3998 = vpack.c.bf16 %v3939, %v3938
    %v3999 = vpack.c.bf16 %v3941, %v3940
    %v4000 = vpack.c.bf16 %v3943, %v3942
    %v4001 = vpack.c.bf16 %v3945, %v3944
    %v4002 = vpack.c.bf16 %v3947, %v3946
    %v4003 = vpack.c.bf16 %v3949, %v3948
    %v4004 = vpack.c.bf16 %v3951, %v3950
    %v4005 = vpack.c.bf16 %v3953, %v3952
    %v4006 = vpack.c.bf16 %v3955, %v3954
    %v4007 = vpack.c.bf16 %v3957, %v3956
    %v4008 = vpack.c.bf16 %v3959, %v3958
    %v4009 = vpack.c.bf16 %v3961, %v3960
    %v4010 = vpack.c.bf16 %v3963, %v3962
    %v4011 = vpack.c.bf16 %v3965, %v3964
    %v4012 = vpack.c.bf16 %v3967, %v3966
    %v4013 = vpack.c.bf16 %v3969, %v3968
    %v4014 = vpack.c.bf16 %v3971, %v3970
    %v4015 = vpack.c.bf16 %v3973, %v3972
    %v4016 = vpack.c.bf16 %v3975, %v3974
    %v4017 = vpack.c.bf16 %v3977, %v3976
    %v4018 = vpack.c.bf16 %v3979, %v3978
    %v4019 = vpack.c.bf16 %v3981, %v3980
    %v4020 = vpack.c.bf16 %v3983, %v3982
    %v4021 = vpack.c.bf16 %v3985, %v3984
    %v4022 = vpack.c.bf16 %v3987, %v3986
    %v4023 = vpack.c.bf16 %v3989, %v3988
    %v4024 = vpack.c.bf16 %v3991, %v3990
    %v4025 = vpack.c.bf16 %v3993, %v3992
    %v4026 = vld [vmem:[%s2] sm:$0xf]
    %v4027 = vld [vmem:[%s2 + $0x4] sm:$0xf]
    %v4028 = vld [vmem:[%s2 + $0x8] sm:$0xf]
    %v4029 = vld [vmem:[%s2 + $0xc] sm:$0xf]
    %v4030 = vld [vmem:[%s2 + $0x10] sm:$0xf]
    %v4031 = vld [vmem:[%s2 + $0x14] sm:$0xf]
    %v4032 = vld [vmem:[%s2 + $0x18] sm:$0xf]
    %v4033 = vld [vmem:[%s2 + $0x1c] sm:$0xf]
    %v4034 = vld [vmem:[%s3] sm:$0x1]
    %v4036 = vlaneseq
    %v4037 = vshrl.u32 %v4036, 7
    %v4038 = vsub.s32 0, %v4037
    %v4039 = vrot.slane %v4034, %v4038
    %v4049 = vunpack.c.l.b16 %v4026
    %v4050 = vunpack.c.l.b16 %v4027
    %v4051 = vunpack.c.l.b16 %v4028
    %v4052 = vunpack.c.l.b16 %v4029
    %v4053 = vunpack.c.l.b16 %v4030
    %v4054 = vunpack.c.l.b16 %v4031
    %v4055 = vunpack.c.l.b16 %v4032
    %v4056 = vunpack.c.l.b16 %v4033
    %v4057 = vpack.c.b16 %v4050, %v4049
    %v4058 = vpack.c.b16 %v4052, %v4051
    %v4059 = vpack.c.b16 %v4054, %v4053
    %v4060 = vpack.c.b16 %v4056, %v4055
    %v4066 = vsel %vm656, %v3994, 0
    %v4069 = vsel %vm656, %v3995, 0
    %v4072 = vsel %vm656, %v3996, 0
    %v4075 = vsel %vm656, %v3997, 0
    %v4078 = vsel %vm656, %v3998, 0
    %v4081 = vsel %vm656, %v3999, 0
    %v4084 = vsel %vm656, %v4000, 0
    %v4087 = vsel %vm656, %v4001, 0
    %v4090 = vsel %vm656, %v4002, 0
    %v4093 = vsel %vm656, %v4003, 0
    %v4096 = vsel %vm656, %v4004, 0
    %v4099 = vsel %vm656, %v4005, 0
    %v4102 = vsel %vm656, %v4006, 0
    %v4105 = vsel %vm656, %v4007, 0
    %v4108 = vsel %vm656, %v4008, 0
    %v4111 = vsel %vm656, %v4009, 0
    %v4114 = vsel %vm656, %v4010, 0
    %v4117 = vsel %vm656, %v4011, 0
    %v4120 = vsel %vm656, %v4012, 0
    %v4123 = vsel %vm656, %v4013, 0
    %v4126 = vsel %vm656, %v4014, 0
    %v4129 = vsel %vm656, %v4015, 0
    %v4132 = vsel %vm656, %v4016, 0
    %v4135 = vsel %vm656, %v4017, 0
    %v4138 = vsel %vm656, %v4018, 0
    %v4141 = vsel %vm656, %v4019, 0
    %v4144 = vsel %vm656, %v4020, 0
    %v4147 = vsel %vm656, %v4021, 0
    %v4150 = vsel %vm656, %v4022, 0
    %v4153 = vsel %vm656, %v4023, 0
    %v4156 = vsel %vm656, %v4024, 0
    %v4159 = vsel %vm656, %v4025, 0
    %4161 = vmatprep.subr.bf16.mxu0 0
    %4162 = vmatpush1.bf16.msra.mxu0 %v4057
    %4163 = vmatprep.subr.bf16.mxu0 0
    %4164 = vmatpush1.bf16.msra.mxu0 %v4058
    %4165 = vmatprep.subr.bf16.mxu0 0
    %4166 = vmatpush1.bf16.msra.mxu0 %v4059
    %4167 = vmatprep.subr.bf16.mxu0 0
    %4168 = vmatpush1.bf16.msra.mxu0 %v4060
    %4169 = vmatprep.subr.bf16.mxu0 0
    %4170 = vmatpush1.bf16.msra.mxu0 0
    %4171 = vmatprep.subr.bf16.mxu0 0
    %4172 = vmatpush1.bf16.msra.mxu0 0
    %4173 = vmatprep.subr.bf16.mxu0 0
    %4174 = vmatpush1.bf16.msra.mxu0 0
    %4175 = vmatprep.subr.bf16.mxu0 0
    %4176 = vmatpush1.bf16.msra.mxu0 0
    %4177 = vmatprep.subr.bf16.mxu0 0
    %4178 = vmatpush1.bf16.msra.mxu0 0
    %4179 = vmatprep.subr.bf16.mxu0 0
    %4180 = vmatpush1.bf16.msra.mxu0 0
    %4181 = vmatprep.subr.bf16.mxu0 0
    %4182 = vmatpush1.bf16.msra.mxu0 0
    %4183 = vmatprep.subr.bf16.mxu0 0
    %4184 = vmatpush1.bf16.msra.mxu0 0
    %4185 = vmatprep.subr.bf16.mxu0 0
    %4186 = vmatpush1.bf16.msra.mxu0 0
    %4187 = vmatprep.subr.bf16.mxu0 0
    %4188 = vmatpush1.bf16.msra.mxu0 0
    %4189 = vmatprep.subr.bf16.mxu0 0
    %4190 = vmatpush1.bf16.msra.mxu0 0
    %4191 = vmatprep.subr.bf16.mxu0 0
    %4192 = vmatpush1.bf16.msra.mxu0 0
    %4193 = vmatprep.mubr.bf16.mxu0 0
    %4194 = vmatmul.mubr.bf16.gmra.mrb[0].mxu0 %v4066
    %v4195 = vpop.f32.mrb[0].mxu0
    %v4196 = vadd.f32 %v4039, %v4195
    %v4197 = vpop.f32.mrb[0].mxu0
    %v4198 = vpop.f32.mrb[0].mxu0
    %v4199 = vadd.f32 %v4039, %v4198
    %v4200 = vpop.f32.mrb[0].mxu0
    %4201 = vmatprep.mubr.bf16.mxu0 0
    %4202 = vmatmul.mubr.bf16.gmra.mrb[0].mxu0 %v4069
    %v4203 = vpop.f32.mrb[0].mxu0
    %v4204 = vadd.f32 %v4039, %v4203
    %v4205 = vpop.f32.mrb[0].mxu0
    %v4206 = vpop.f32.mrb[0].mxu0
    %v4207 = vadd.f32 %v4039, %v4206
    %v4208 = vpop.f32.mrb[0].mxu0
    %4209 = vmatprep.mubr.bf16.mxu0 0
    %4210 = vmatmul.mubr.bf16.gmra.mrb[0].mxu0 %v4072
    %v4211 = vpop.f32.mrb[0].mxu0
    %v4212 = vadd.f32 %v4039, %v4211
    %v4213 = vpop.f32.mrb[0].mxu0
    %v4214 = vpop.f32.mrb[0].mxu0
    %v4215 = vadd.f32 %v4039, %v4214
    %v4216 = vpop.f32.mrb[0].mxu0
    %4217 = vmatprep.mubr.bf16.mxu0 0
    %4218 = vmatmul.mubr.bf16.gmra.mrb[0].mxu0 %v4075
    %v4219 = vpop.f32.mrb[0].mxu0
    %v4220 = vadd.f32 %v4039, %v4219
    %v4221 = vpop.f32.mrb[0].mxu0
    %v4222 = vpop.f32.mrb[0].mxu0
    %v4223 = vadd.f32 %v4039, %v4222
    %v4224 = vpop.f32.mrb[0].mxu0
    %4225 = vmatprep.mubr.bf16.mxu0 0
    %4226 = vmatmul.mubr.bf16.gmra.mrb[0].mxu0 %v4078
    %v4227 = vpop.f32.mrb[0].mxu0
    %v4228 = vadd.f32 %v4039, %v4227
    %v4229 = vpop.f32.mrb[0].mxu0
    %v4230 = vpop.f32.mrb[0].mxu0
    %v4231 = vadd.f32 %v4039, %v4230
    %v4232 = vpop.f32.mrb[0].mxu0
    %4233 = vmatprep.mubr.bf16.mxu0 0
    %4234 = vmatmul.mubr.bf16.gmra.mrb[0].mxu0 %v4081
    %v4235 = vpop.f32.mrb[0].mxu0
    %v4236 = vadd.f32 %v4039, %v4235
    %v4237 = vpop.f32.mrb[0].mxu0
    %v4238 = vpop.f32.mrb[0].mxu0
    %v4239 = vadd.f32 %v4039, %v4238
    %v4240 = vpop.f32.mrb[0].mxu0
    %4241 = vmatprep.mubr.bf16.mxu0 0
    %4242 = vmatmul.mubr.bf16.gmra.mrb[0].mxu0 %v4084
    %v4243 = vpop.f32.mrb[0].mxu0
    %v4244 = vadd.f32 %v4039, %v4243
    %v4245 = vpop.f32.mrb[0].mxu0
    %v4246 = vpop.f32.mrb[0].mxu0
    %v4247 = vadd.f32 %v4039, %v4246
    %v4248 = vpop.f32.mrb[0].mxu0
    %4249 = vmatprep.mubr.bf16.mxu0 0
    %4250 = vmatmul.mubr.bf16.gmra.mrb[0].mxu0 %v4087
    %v4251 = vpop.f32.mrb[0].mxu0
    %v4252 = vadd.f32 %v4039, %v4251
    %v4253 = vpop.f32.mrb[0].mxu0
    %v4254 = vpop.f32.mrb[0].mxu0
    %v4255 = vadd.f32 %v4039, %v4254
    %v4256 = vpop.f32.mrb[0].mxu0
    %4257 = vmatprep.mubr.bf16.mxu0 0
    %4258 = vmatmul.mubr.bf16.gmra.mrb[0].mxu0 %v4090
    %v4259 = vpop.f32.mrb[0].mxu0
    %v4260 = vadd.f32 %v4039, %v4259
    %v4261 = vpop.f32.mrb[0].mxu0
    %v4262 = vpop.f32.mrb[0].mxu0
    %v4263 = vadd.f32 %v4039, %v4262
    %v4264 = vpop.f32.mrb[0].mxu0
    %4265 = vmatprep.mubr.bf16.mxu0 0
    %4266 = vmatmul.mubr.bf16.gmra.mrb[0].mxu0 %v4093
    %v4267 = vpop.f32.mrb[0].mxu0
    %v4268 = vadd.f32 %v4039, %v4267
    %v4269 = vpop.f32.mrb[0].mxu0
    %v4270 = vpop.f32.mrb[0].mxu0
    %v4271 = vadd.f32 %v4039, %v4270
    %v4272 = vpop.f32.mrb[0].mxu0
    %4273 = vmatprep.mubr.bf16.mxu0 0
    %4274 = vmatmul.mubr.bf16.gmra.mrb[0].mxu0 %v4096
    %v4275 = vpop.f32.mrb[0].mxu0
    %v4276 = vadd.f32 %v4039, %v4275
    %v4277 = vpop.f32.mrb[0].mxu0
    %v4278 = vpop.f32.mrb[0].mxu0
    %v4279 = vadd.f32 %v4039, %v4278
    %v4280 = vpop.f32.mrb[0].mxu0
    %4281 = vmatprep.mubr.bf16.mxu0 0
    %4282 = vmatmul.mubr.bf16.gmra.mrb[0].mxu0 %v4099
    %v4283 = vpop.f32.mrb[0].mxu0
    %v4284 = vadd.f32 %v4039, %v4283
    %v4285 = vpop.f32.mrb[0].mxu0
    %v4286 = vpop.f32.mrb[0].mxu0
    %v4287 = vadd.f32 %v4039, %v4286
    %v4288 = vpop.f32.mrb[0].mxu0
    %4289 = vmatprep.mubr.bf16.mxu0 0
    %4290 = vmatmul.mubr.bf16.gmra.mrb[0].mxu0 %v4102
    %v4291 = vpop.f32.mrb[0].mxu0
    %v4292 = vadd.f32 %v4039, %v4291
    %v4293 = vpop.f32.mrb[0].mxu0
    %v4294 = vpop.f32.mrb[0].mxu0
    %v4295 = vadd.f32 %v4039, %v4294
    %v4296 = vpop.f32.mrb[0].mxu0
    %4297 = vmatprep.mubr.bf16.mxu0 0
    %4298 = vmatmul.mubr.bf16.gmra.mrb[0].mxu0 %v4105
    %v4299 = vpop.f32.mrb[0].mxu0
    %v4300 = vadd.f32 %v4039, %v4299
    %v4301 = vpop.f32.mrb[0].mxu0
    %v4302 = vpop.f32.mrb[0].mxu0
    %v4303 = vadd.f32 %v4039, %v4302
    %v4304 = vpop.f32.mrb[0].mxu0
    %4305 = vmatprep.mubr.bf16.mxu0 0
    %4306 = vmatmul.mubr.bf16.gmra.mrb[0].mxu0 %v4108
    %v4307 = vpop.f32.mrb[0].mxu0
    %v4308 = vadd.f32 %v4039, %v4307
    %v4309 = vpop.f32.mrb[0].mxu0
    %v4310 = vpop.f32.mrb[0].mxu0
    %v4311 = vadd.f32 %v4039, %v4310
    %v4312 = vpop.f32.mrb[0].mxu0
    %4313 = vmatprep.mubr.bf16.mxu0 0
    %4314 = vmatmul.mubr.bf16.gmra.mrb[0].mxu0 %v4111
    %v4315 = vpop.f32.mrb[0].mxu0
    %v4316 = vadd.f32 %v4039, %v4315
    %v4317 = vpop.f32.mrb[0].mxu0
    %v4318 = vpop.f32.mrb[0].mxu0
    %v4319 = vadd.f32 %v4039, %v4318
    %v4320 = vpop.f32.mrb[0].mxu0
    %4321 = vmatprep.mubr.bf16.mxu0 0
    %4322 = vmatmul.mubr.bf16.gmra.mrb[0].mxu0 %v4114
    %v4323 = vpop.f32.mrb[0].mxu0
    %v4324 = vadd.f32 %v4039, %v4323
    %v4325 = vpop.f32.mrb[0].mxu0
    %v4326 = vpop.f32.mrb[0].mxu0
    %v4327 = vadd.f32 %v4039, %v4326
    %v4328 = vpop.f32.mrb[0].mxu0
    %4329 = vmatprep.mubr.bf16.mxu0 0
    %4330 = vmatmul.mubr.bf16.gmra.mrb[0].mxu0 %v4117
    %v4331 = vpop.f32.mrb[0].mxu0
    %v4332 = vadd.f32 %v4039, %v4331
    %v4333 = vpop.f32.mrb[0].mxu0
    %v4334 = vpop.f32.mrb[0].mxu0
    %v4335 = vadd.f32 %v4039, %v4334
    %v4336 = vpop.f32.mrb[0].mxu0
    %4337 = vmatprep.mubr.bf16.mxu0 0
    %4338 = vmatmul.mubr.bf16.gmra.mrb[0].mxu0 %v4120
    %v4339 = vpop.f32.mrb[0].mxu0
    %v4340 = vadd.f32 %v4039, %v4339
    %v4341 = vpop.f32.mrb[0].mxu0
    %v4342 = vpop.f32.mrb[0].mxu0
    %v4343 = vadd.f32 %v4039, %v4342
    %v4344 = vpop.f32.mrb[0].mxu0
    %4345 = vmatprep.mubr.bf16.mxu0 0
    %4346 = vmatmul.mubr.bf16.gmra.mrb[0].mxu0 %v4123
    %v4347 = vpop.f32.mrb[0].mxu0
    %v4348 = vadd.f32 %v4039, %v4347
    %v4349 = vpop.f32.mrb[0].mxu0
    %v4350 = vpop.f32.mrb[0].mxu0
    %v4351 = vadd.f32 %v4039, %v4350
    %v4352 = vpop.f32.mrb[0].mxu0
    %4353 = vmatprep.mubr.bf16.mxu0 0
    %4354 = vmatmul.mubr.bf16.gmra.mrb[0].mxu0 %v4126
    %v4355 = vpop.f32.mrb[0].mxu0
    %v4356 = vadd.f32 %v4039, %v4355
    %v4357 = vpop.f32.mrb[0].mxu0
    %v4358 = vpop.f32.mrb[0].mxu0
    %v4359 = vadd.f32 %v4039, %v4358
    %v4360 = vpop.f32.mrb[0].mxu0
    %4361 = vmatprep.mubr.bf16.mxu0 0
    %4362 = vmatmul.mubr.bf16.gmra.mrb[0].mxu0 %v4129
    %v4363 = vpop.f32.mrb[0].mxu0
    %v4364 = vadd.f32 %v4039, %v4363
    %v4365 = vpop.f32.mrb[0].mxu0
    %v4366 = vpop.f32.mrb[0].mxu0
    %v4367 = vadd.f32 %v4039, %v4366
    %v4368 = vpop.f32.mrb[0].mxu0
    %4369 = vmatprep.mubr.bf16.mxu0 0
    %4370 = vmatmul.mubr.bf16.gmra.mrb[0].mxu0 %v4132
    %v4371 = vpop.f32.mrb[0].mxu0
    %v4372 = vadd.f32 %v4039, %v4371
    %v4373 = vpop.f32.mrb[0].mxu0
    %v4374 = vpop.f32.mrb[0].mxu0
    %v4375 = vadd.f32 %v4039, %v4374
    %v4376 = vpop.f32.mrb[0].mxu0
    %4377 = vmatprep.mubr.bf16.mxu0 0
    %4378 = vmatmul.mubr.bf16.gmra.mrb[0].mxu0 %v4135
    %v4379 = vpop.f32.mrb[0].mxu0
    %v4380 = vadd.f32 %v4039, %v4379
    %v4381 = vpop.f32.mrb[0].mxu0
    %v4382 = vpop.f32.mrb[0].mxu0
    %v4383 = vadd.f32 %v4039, %v4382
    %v4384 = vpop.f32.mrb[0].mxu0
    %4385 = vmatprep.mubr.bf16.mxu0 0
    %4386 = vmatmul.mubr.bf16.gmra.mrb[0].mxu0 %v4138
    %v4387 = vpop.f32.mrb[0].mxu0
    %v4388 = vadd.f32 %v4039, %v4387
    %v4389 = vpop.f32.mrb[0].mxu0
    %v4390 = vpop.f32.mrb[0].mxu0
    %v4391 = vadd.f32 %v4039, %v4390
    %v4392 = vpop.f32.mrb[0].mxu0
    %4393 = vmatprep.mubr.bf16.mxu0 0
    %4394 = vmatmul.mubr.bf16.gmra.mrb[0].mxu0 %v4141
    %v4395 = vpop.f32.mrb[0].mxu0
    %v4396 = vadd.f32 %v4039, %v4395
    %v4397 = vpop.f32.mrb[0].mxu0
    %v4398 = vpop.f32.mrb[0].mxu0
    %v4399 = vadd.f32 %v4039, %v4398
    %v4400 = vpop.f32.mrb[0].mxu0
    %4401 = vmatprep.mubr.bf16.mxu0 0
    %4402 = vmatmul.mubr.bf16.gmra.mrb[0].mxu0 %v4144
    %v4403 = vpop.f32.mrb[0].mxu0
    %v4404 = vadd.f32 %v4039, %v4403
    %v4405 = vpop.f32.mrb[0].mxu0
    %v4406 = vpop.f32.mrb[0].mxu0
    %v4407 = vadd.f32 %v4039, %v4406
    %v4408 = vpop.f32.mrb[0].mxu0
    %4409 = vmatprep.mubr.bf16.mxu0 0
    %4410 = vmatmul.mubr.bf16.gmra.mrb[0].mxu0 %v4147
    %v4411 = vpop.f32.mrb[0].mxu0
    %v4412 = vadd.f32 %v4039, %v4411
    %v4413 = vpop.f32.mrb[0].mxu0
    %v4414 = vpop.f32.mrb[0].mxu0
    %v4415 = vadd.f32 %v4039, %v4414
    %v4416 = vpop.f32.mrb[0].mxu0
    %4417 = vmatprep.mubr.bf16.mxu0 0
    %4418 = vmatmul.mubr.bf16.gmra.mrb[0].mxu0 %v4150
    %v4419 = vpop.f32.mrb[0].mxu0
    %v4420 = vadd.f32 %v4039, %v4419
    %v4421 = vpop.f32.mrb[0].mxu0
    %v4422 = vpop.f32.mrb[0].mxu0
    %v4423 = vadd.f32 %v4039, %v4422
    %v4424 = vpop.f32.mrb[0].mxu0
    %4425 = vmatprep.mubr.bf16.mxu0 0
    %4426 = vmatmul.mubr.bf16.gmra.mrb[0].mxu0 %v4153
    %v4427 = vpop.f32.mrb[0].mxu0
    %v4428 = vadd.f32 %v4039, %v4427
    %v4429 = vpop.f32.mrb[0].mxu0
    %v4430 = vpop.f32.mrb[0].mxu0
    %v4431 = vadd.f32 %v4039, %v4430
    %v4432 = vpop.f32.mrb[0].mxu0
    %4433 = vmatprep.mubr.bf16.mxu0 0
    %4434 = vmatmul.mubr.bf16.gmra.mrb[0].mxu0 %v4156
    %v4435 = vpop.f32.mrb[0].mxu0
    %v4436 = vadd.f32 %v4039, %v4435
    %v4437 = vpop.f32.mrb[0].mxu0
    %v4438 = vpop.f32.mrb[0].mxu0
    %v4439 = vadd.f32 %v4039, %v4438
    %v4440 = vpop.f32.mrb[0].mxu0
    %4441 = vmatprep.mubr.bf16.mxu0 0
    %4442 = vmatmul.mubr.bf16.gmra.mrb[0].mxu0 %v4159
    %v4443 = vpop.f32.mrb[0].mxu0
    %v4444 = vadd.f32 %v4039, %v4443
    %v4445 = vpop.f32.mrb[0].mxu0
    %v4446 = vpop.f32.mrb[0].mxu0
    %v4447 = vadd.f32 %v4039, %v4446
    %v4448 = vpop.f32.mrb[0].mxu0
    %4449 = vdwg.mxu0
    %v4450 = vmax.f32 %v4196, 0.0
    %v4451 = vmax.f32 %v4199, 0.0
    %v4452 = vmax.f32 %v4204, 0.0
    %v4453 = vmax.f32 %v4207, 0.0
    %v4454 = vmax.f32 %v4212, 0.0
    %v4455 = vmax.f32 %v4215, 0.0
    %v4456 = vmax.f32 %v4220, 0.0
    %v4457 = vmax.f32 %v4223, 0.0
    %v4458 = vmax.f32 %v4228, 0.0
    %v4459 = vmax.f32 %v4231, 0.0
    %v4460 = vmax.f32 %v4236, 0.0
    %v4461 = vmax.f32 %v4239, 0.0
    %v4462 = vmax.f32 %v4244, 0.0
    %v4463 = vmax.f32 %v4247, 0.0
    %v4464 = vmax.f32 %v4252, 0.0
    %v4465 = vmax.f32 %v4255, 0.0
    %v4466 = vmax.f32 %v4260, 0.0
    %v4467 = vmax.f32 %v4263, 0.0
    %v4468 = vmax.f32 %v4268, 0.0
    %v4469 = vmax.f32 %v4271, 0.0
    %v4470 = vmax.f32 %v4276, 0.0
    %v4471 = vmax.f32 %v4279, 0.0
    %v4472 = vmax.f32 %v4284, 0.0
    %v4473 = vmax.f32 %v4287, 0.0
    %v4474 = vmax.f32 %v4292, 0.0
    %v4475 = vmax.f32 %v4295, 0.0
    %v4476 = vmax.f32 %v4300, 0.0
    %v4477 = vmax.f32 %v4303, 0.0
    %v4478 = vmax.f32 %v4308, 0.0
    %v4479 = vmax.f32 %v4311, 0.0
    %v4480 = vmax.f32 %v4316, 0.0
    %v4481 = vmax.f32 %v4319, 0.0
    %v4482 = vmax.f32 %v4324, 0.0
    %v4483 = vmax.f32 %v4327, 0.0
    %v4484 = vmax.f32 %v4332, 0.0
    %v4485 = vmax.f32 %v4335, 0.0
    %v4486 = vmax.f32 %v4340, 0.0
    %v4487 = vmax.f32 %v4343, 0.0
    %v4488 = vmax.f32 %v4348, 0.0
    %v4489 = vmax.f32 %v4351, 0.0
    %v4490 = vmax.f32 %v4356, 0.0
    %v4491 = vmax.f32 %v4359, 0.0
    %v4492 = vmax.f32 %v4364, 0.0
    %v4493 = vmax.f32 %v4367, 0.0
    %v4494 = vmax.f32 %v4372, 0.0
    %v4495 = vmax.f32 %v4375, 0.0
    %v4496 = vmax.f32 %v4380, 0.0
    %v4497 = vmax.f32 %v4383, 0.0
    %v4498 = vmax.f32 %v4388, 0.0
    %v4499 = vmax.f32 %v4391, 0.0
    %v4500 = vmax.f32 %v4396, 0.0
    %v4501 = vmax.f32 %v4399, 0.0
    %v4502 = vmax.f32 %v4404, 0.0
    %v4503 = vmax.f32 %v4407, 0.0
    %v4504 = vmax.f32 %v4412, 0.0
    %v4505 = vmax.f32 %v4415, 0.0
    %v4506 = vmax.f32 %v4420, 0.0
    %v4507 = vmax.f32 %v4423, 0.0
    %v4508 = vmax.f32 %v4428, 0.0
    %v4509 = vmax.f32 %v4431, 0.0
    %v4510 = vmax.f32 %v4436, 0.0
    %v4511 = vmax.f32 %v4439, 0.0
    %v4512 = vmax.f32 %v4444, 0.0
    %v4513 = vmax.f32 %v4447, 0.0
    %vm4514 = vcmask 261120
    %v4515 = vsel %vm4514, %v4450, 0.0
    %v4516 = vsel %vm4514, %v4451, 0.0
    %v4517 = vadd.f32 %v4515, %v4516
    %v4518 = vsel %vm4514, %v4452, 0.0
    %v4519 = vadd.f32 %v4517, %v4518
    %v4520 = vsel %vm4514, %v4453, 0.0
    %v4521 = vadd.f32 %v4519, %v4520
    %v4522 = vsel %vm4514, %v4454, 0.0
    %v4523 = vadd.f32 %v4521, %v4522
    %v4524 = vsel %vm4514, %v4455, 0.0
    %v4525 = vadd.f32 %v4523, %v4524
    %v4526 = vsel %vm4514, %v4456, 0.0
    %v4527 = vadd.f32 %v4525, %v4526
    %v4528 = vsel %vm4514, %v4457, 0.0
    %v4529 = vadd.f32 %v4527, %v4528
    %v4530 = vsel %vm4514, %v4458, 0.0
    %v4531 = vadd.f32 %v4529, %v4530
    %v4532 = vsel %vm4514, %v4459, 0.0
    %v4533 = vadd.f32 %v4531, %v4532
    %v4534 = vsel %vm4514, %v4460, 0.0
    %v4535 = vadd.f32 %v4533, %v4534
    %v4536 = vsel %vm4514, %v4461, 0.0
    %v4537 = vadd.f32 %v4535, %v4536
    %v4538 = vsel %vm4514, %v4462, 0.0
    %v4539 = vadd.f32 %v4537, %v4538
    %v4540 = vsel %vm4514, %v4463, 0.0
    %v4541 = vadd.f32 %v4539, %v4540
    %v4542 = vsel %vm4514, %v4464, 0.0
    %v4543 = vadd.f32 %v4541, %v4542
    %v4544 = vsel %vm4514, %v4465, 0.0
    %v4545 = vadd.f32 %v4543, %v4544
    %v4546 = vsel %vm4514, %v4466, 0.0
    %v4547 = vadd.f32 %v4545, %v4546
    %v4548 = vsel %vm4514, %v4467, 0.0
    %v4549 = vadd.f32 %v4547, %v4548
    %v4550 = vsel %vm4514, %v4468, 0.0
    %v4551 = vadd.f32 %v4549, %v4550
    %v4552 = vsel %vm4514, %v4469, 0.0
    %v4553 = vadd.f32 %v4551, %v4552
    %v4554 = vsel %vm4514, %v4470, 0.0
    %v4555 = vadd.f32 %v4553, %v4554
    %v4556 = vsel %vm4514, %v4471, 0.0
    %v4557 = vadd.f32 %v4555, %v4556
    %v4558 = vsel %vm4514, %v4472, 0.0
    %v4559 = vadd.f32 %v4557, %v4558
    %v4560 = vsel %vm4514, %v4473, 0.0
    %v4561 = vadd.f32 %v4559, %v4560
    %v4562 = vsel %vm4514, %v4474, 0.0
    %v4563 = vadd.f32 %v4561, %v4562
    %v4564 = vsel %vm4514, %v4475, 0.0
    %v4565 = vadd.f32 %v4563, %v4564
    %v4566 = vsel %vm4514, %v4476, 0.0
    %v4567 = vadd.f32 %v4565, %v4566
    %v4568 = vsel %vm4514, %v4477, 0.0
    %v4569 = vadd.f32 %v4567, %v4568
    %v4570 = vsel %vm4514, %v4478, 0.0
    %v4571 = vadd.f32 %v4569, %v4570
    %v4572 = vsel %vm4514, %v4479, 0.0
    %v4573 = vadd.f32 %v4571, %v4572
    %v4574 = vsel %vm4514, %v4480, 0.0
    %v4575 = vadd.f32 %v4573, %v4574
    %v4576 = vsel %vm4514, %v4481, 0.0
    %v4577 = vadd.f32 %v4575, %v4576
    %v4578 = vrot.slane %v4577, 4
    %v4579 = vadd.f32 %v4577, %v4578
    %v4580 = vrot.slane %v4579, 2
    %v4581 = vadd.f32 %v4579, %v4580
    %v4582 = vrot.slane %v4581, 1
    %v4583 = vadd.f32 %v4581, %v4582
    %v4584 = vsel %vm4514, %v4482, 0.0
    %v4585 = vsel %vm4514, %v4483, 0.0
    %v4586 = vadd.f32 %v4584, %v4585
    %v4587 = vsel %vm4514, %v4484, 0.0
    %v4588 = vadd.f32 %v4586, %v4587
    %v4589 = vsel %vm4514, %v4485, 0.0
    %v4590 = vadd.f32 %v4588, %v4589
    %v4591 = vsel %vm4514, %v4486, 0.0
    %v4592 = vadd.f32 %v4590, %v4591
    %v4593 = vsel %vm4514, %v4487, 0.0
    %v4594 = vadd.f32 %v4592, %v4593
    %v4595 = vsel %vm4514, %v4488, 0.0
    %v4596 = vadd.f32 %v4594, %v4595
    %v4597 = vsel %vm4514, %v4489, 0.0
    %v4598 = vadd.f32 %v4596, %v4597
    %v4599 = vsel %vm4514, %v4490, 0.0
    %v4600 = vadd.f32 %v4598, %v4599
    %v4601 = vsel %vm4514, %v4491, 0.0
    %v4602 = vadd.f32 %v4600, %v4601
    %v4603 = vsel %vm4514, %v4492, 0.0
    %v4604 = vadd.f32 %v4602, %v4603
    %v4605 = vsel %vm4514, %v4493, 0.0
    %v4606 = vadd.f32 %v4604, %v4605
    %v4607 = vsel %vm4514, %v4494, 0.0
    %v4608 = vadd.f32 %v4606, %v4607
    %v4609 = vsel %vm4514, %v4495, 0.0
    %v4610 = vadd.f32 %v4608, %v4609
    %v4611 = vsel %vm4514, %v4496, 0.0
    %v4612 = vadd.f32 %v4610, %v4611
    %v4613 = vsel %vm4514, %v4497, 0.0
    %v4614 = vadd.f32 %v4612, %v4613
    %v4615 = vsel %vm4514, %v4498, 0.0
    %v4616 = vadd.f32 %v4614, %v4615
    %v4617 = vsel %vm4514, %v4499, 0.0
    %v4618 = vadd.f32 %v4616, %v4617
    %v4619 = vsel %vm4514, %v4500, 0.0
    %v4620 = vadd.f32 %v4618, %v4619
    %v4621 = vsel %vm4514, %v4501, 0.0
    %v4622 = vadd.f32 %v4620, %v4621
    %v4623 = vsel %vm4514, %v4502, 0.0
    %v4624 = vadd.f32 %v4622, %v4623
    %v4625 = vsel %vm4514, %v4503, 0.0
    %v4626 = vadd.f32 %v4624, %v4625
    %v4627 = vsel %vm4514, %v4504, 0.0
    %v4628 = vadd.f32 %v4626, %v4627
    %v4629 = vsel %vm4514, %v4505, 0.0
    %v4630 = vadd.f32 %v4628, %v4629
    %v4631 = vsel %vm4514, %v4506, 0.0
    %v4632 = vadd.f32 %v4630, %v4631
    %v4633 = vsel %vm4514, %v4507, 0.0
    %v4634 = vadd.f32 %v4632, %v4633
    %v4635 = vsel %vm4514, %v4508, 0.0
    %v4636 = vadd.f32 %v4634, %v4635
    %v4637 = vsel %vm4514, %v4509, 0.0
    %v4638 = vadd.f32 %v4636, %v4637
    %v4639 = vsel %vm4514, %v4510, 0.0
    %v4640 = vadd.f32 %v4638, %v4639
    %v4641 = vsel %vm4514, %v4511, 0.0
    %v4642 = vadd.f32 %v4640, %v4641
    %v4643 = vsel %vm4514, %v4512, 0.0
    %v4644 = vadd.f32 %v4642, %v4643
    %v4645 = vsel %vm4514, %v4513, 0.0
    %v4646 = vadd.f32 %v4644, %v4645
    %v4647 = vrot.slane %v4646, 4
    %v4648 = vadd.f32 %v4646, %v4647
    %v4649 = vrot.slane %v4648, 2
    %v4650 = vadd.f32 %v4648, %v4649
    %v4651 = vrot.slane %v4650, 1
    %v4652 = vadd.f32 %v4650, %v4651
    %v4653 = vrcp.pop 256.0
    %v4654 = vmul.f32 %v4583, %v4653
    %v4655 = vmul.f32 %v4652, %v4653
    %v4656 = vpack.c.bf16 %v4654, %v4654
    %v4657 = vpack.c.bf16 %v4655, %v4655
    %v4658 = vld [vmem:[%s4] sm:$0xff]
    %v4659 = vld [vmem:[%s4 + $0x8] sm:$0xff]
    %v4660 = vld [vmem:[%s4 + $0x10] sm:$0xff]
    %v4661 = vld [vmem:[%s4 + $0x18] sm:$0xff]
    %v4662 = vld [vmem:[%s5] sm:$0x3]
    %v4664 = vlaneseq
    %v4665 = vshrl.u32 %v4664, 7
    %v4666 = vsub.s32 0, %v4665
    %v4667 = vrot.slane %v4662, %v4666
    %v4668 = vlaneseq
    %v4669 = vshrl.u32 %v4668, 7
    %v4670 = vsub.s32 1, %v4669
    %v4671 = vrot.slane %v4662, %v4670
    %v4676 = vunpack.c.l.b16 %v4656
    %v4677 = vunpack.c.l.b16 %v4657
    %vm4678 = vcmask 1041409
    %v4679 = vsel %vm4678, %v4677, %v4676
    %v4680 = vpack.c.b16 %v4679, %v4679
    %v4685 = vunpack.c.l.b16 %v4658
    %v4686 = vunpack.c.h.b16 %v4658
    %v4687 = vunpack.c.l.b16 %v4659
    %v4688 = vunpack.c.h.b16 %v4659
    %v4689 = vunpack.c.l.b16 %v4660
    %v4690 = vunpack.c.h.b16 %v4660
    %v4691 = vunpack.c.l.b16 %v4661
    %v4692 = vunpack.c.h.b16 %v4661
    %v4693 = vpack.c.b16 %v4687, %v4685
    %v4694 = vpack.c.b16 %v4688, %v4686
    %v4695 = vpack.c.b16 %v4691, %v4689
    %v4696 = vpack.c.b16 %v4692, %v4690
    %v4702 = vsel %vm4514, %v4680, 0
    %4704 = vmatprep.subr.bf16.mxu0 %v4694
    %4705 = vmatpush1.bf16.msra.mxu0 %v4693
    %4706 = vmatprep.subr.bf16.mxu0 %v4696
    %4707 = vmatpush1.bf16.msra.mxu0 %v4695
    %4708 = vmatprep.subr.bf16.mxu0 0
    %4709 = vmatpush1.bf16.msra.mxu0 0
    %4710 = vmatprep.subr.bf16.mxu0 0
    %4711 = vmatpush1.bf16.msra.mxu0 0
    %4712 = vmatprep.subr.bf16.mxu0 0
    %4713 = vmatpush1.bf16.msra.mxu0 0
    %4714 = vmatprep.subr.bf16.mxu0 0
    %4715 = vmatpush1.bf16.msra.mxu0 0
    %4716 = vmatprep.subr.bf16.mxu0 0
    %4717 = vmatpush1.bf16.msra.mxu0 0
    %4718 = vmatprep.subr.bf16.mxu0 0
    %4719 = vmatpush1.bf16.msra.mxu0 0
    %4720 = vmatprep.subr.bf16.mxu0 0
    %4721 = vmatpush1.bf16.msra.mxu0 0
    %4722 = vmatprep.subr.bf16.mxu0 0
    %4723 = vmatpush1.bf16.msra.mxu0 0
    %4724 = vmatprep.subr.bf16.mxu0 0
    %4725 = vmatpush1.bf16.msra.mxu0 0
    %4726 = vmatprep.subr.bf16.mxu0 0
    %4727 = vmatpush1.bf16.msra.mxu0 0
    %4728 = vmatprep.subr.bf16.mxu0 0
    %4729 = vmatpush1.bf16.msra.mxu0 0
    %4730 = vmatprep.subr.bf16.mxu0 0
    %4731 = vmatpush1.bf16.msra.mxu0 0
    %4732 = vmatprep.subr.bf16.mxu0 0
    %4733 = vmatpush1.bf16.msra.mxu0 0
    %4734 = vmatprep.subr.bf16.mxu0 0
    %4735 = vmatpush1.bf16.msra.mxu0 0
    %4736 = vmatprep.mubr.bf16.mxu0 0
    %4737 = vmatmul.mubr.bf16.gmra.mrb[0].mxu0 %v4702
    %v4738 = vpop.f32.mrb[0].mxu0
    %v4739 = vadd.f32 %v4667, %v4738
    %v4740 = vpop.f32.mrb[0].mxu0
    %v4741 = vadd.f32 %v4671, %v4740
    %v4742 = vpop.f32.mrb[0].mxu0
    %v4743 = vpop.f32.mrb[0].mxu0
    %4744 = vdwg.mxu0
    %v4745 = vmax.f32 %v4739, 0.0
    %v4746 = vmax.f32 %v4741, 0.0
    %v4747 = vpack.c.bf16 %v4745, %v4745
    %v4748 = vpack.c.bf16 %v4746, %v4746
    %v4749 = vld [vmem:[%s6] sm:$0xf]
    %v4750 = vld [vmem:[%s6 + $0x4] sm:$0xf]
    %v4751 = vld [vmem:[%s6 + $0x8] sm:$0xf]
    %v4752 = vld [vmem:[%s6 + $0xc] sm:$0xf]
    %v4753 = vld [vmem:[%s6 + $0x10] sm:$0xf]
    %v4754 = vld [vmem:[%s6 + $0x14] sm:$0xf]
    %v4755 = vld [vmem:[%s6 + $0x18] sm:$0xf]
    %v4756 = vld [vmem:[%s6 + $0x1c] sm:$0xf]
    %v4757 = vld [vmem:[%s6 + $0x20] sm:$0xf]
    %v4758 = vld [vmem:[%s6 + $0x24] sm:$0xf]
    %v4759 = vld [vmem:[%s6 + $0x28] sm:$0xf]
    %v4760 = vld [vmem:[%s6 + $0x2c] sm:$0xf]
    %v4761 = vld [vmem:[%s6 + $0x30] sm:$0xf]
    %v4762 = vld [vmem:[%s6 + $0x34] sm:$0xf]
    %v4763 = vld [vmem:[%s6 + $0x38] sm:$0xf]
    %v4764 = vld [vmem:[%s6 + $0x3c] sm:$0xf]
    %v4765 = vld [vmem:[%s6 + $0x40] sm:$0xf]
    %v4766 = vld [vmem:[%s6 + $0x44] sm:$0xf]
    %v4767 = vld [vmem:[%s6 + $0x48] sm:$0xf]
    %v4768 = vld [vmem:[%s6 + $0x4c] sm:$0xf]
    %v4769 = vld [vmem:[%s6 + $0x50] sm:$0xf]
    %v4770 = vld [vmem:[%s6 + $0x54] sm:$0xf]
    %v4771 = vld [vmem:[%s6 + $0x58] sm:$0xf]
    %v4772 = vld [vmem:[%s6 + $0x5c] sm:$0xf]
    %v4773 = vld [vmem:[%s6 + $0x60] sm:$0xf]
    %v4774 = vld [vmem:[%s6 + $0x64] sm:$0xf]
    %v4775 = vld [vmem:[%s6 + $0x68] sm:$0xf]
    %v4776 = vld [vmem:[%s6 + $0x6c] sm:$0xf]
    %v4777 = vld [vmem:[%s6 + $0x70] sm:$0xf]
    %v4778 = vld [vmem:[%s6 + $0x74] sm:$0xf]
    %v4779 = vld [vmem:[%s6 + $0x78] sm:$0xf]
    %v4780 = vld [vmem:[%s6 + $0x7c] sm:$0xf]
    %v4781 = vld [vmem:[%s7] sm:$0x1]
    %v4783 = vlaneseq
    %v4784 = vshrl.u32 %v4783, 7
    %v4785 = vsub.s32 0, %v4784
    %v4786 = vrot.slane %v4781, %v4785
    %v4820 = vunpack.c.l.b16 %v4749
    %v4821 = vunpack.c.l.b16 %v4750
    %v4822 = vunpack.c.l.b16 %v4751
    %v4823 = vunpack.c.l.b16 %v4752
    %v4824 = vunpack.c.l.b16 %v4753
    %v4825 = vunpack.c.l.b16 %v4754
    %v4826 = vunpack.c.l.b16 %v4755
    %v4827 = vunpack.c.l.b16 %v4756
    %v4828 = vunpack.c.l.b16 %v4757
    %v4829 = vunpack.c.l.b16 %v4758
    %v4830 = vunpack.c.l.b16 %v4759
    %v4831 = vunpack.c.l.b16 %v4760
    %v4832 = vunpack.c.l.b16 %v4761
    %v4833 = vunpack.c.l.b16 %v4762
    %v4834 = vunpack.c.l.b16 %v4763
    %v4835 = vunpack.c.l.b16 %v4764
    %v4836 = vunpack.c.l.b16 %v4765
    %v4837 = vunpack.c.l.b16 %v4766
    %v4838 = vunpack.c.l.b16 %v4767
    %v4839 = vunpack.c.l.b16 %v4768
    %v4840 = vunpack.c.l.b16 %v4769
    %v4841 = vunpack.c.l.b16 %v4770
    %v4842 = vunpack.c.l.b16 %v4771
    %v4843 = vunpack.c.l.b16 %v4772
    %v4844 = vunpack.c.l.b16 %v4773
    %v4845 = vunpack.c.l.b16 %v4774
    %v4846 = vunpack.c.l.b16 %v4775
    %v4847 = vunpack.c.l.b16 %v4776
    %v4848 = vunpack.c.l.b16 %v4777
    %v4849 = vunpack.c.l.b16 %v4778
    %v4850 = vunpack.c.l.b16 %v4779
    %v4851 = vunpack.c.l.b16 %v4780
    %v4852 = vpack.c.b16 %v4821, %v4820
    %v4853 = vpack.c.b16 %v4823, %v4822
    %v4854 = vpack.c.b16 %v4825, %v4824
    %v4855 = vpack.c.b16 %v4827, %v4826
    %v4856 = vpack.c.b16 %v4829, %v4828
    %v4857 = vpack.c.b16 %v4831, %v4830
    %v4858 = vpack.c.b16 %v4833, %v4832
    %v4859 = vpack.c.b16 %v4835, %v4834
    %v4860 = vpack.c.b16 %v4837, %v4836
    %v4861 = vpack.c.b16 %v4839, %v4838
    %v4862 = vpack.c.b16 %v4841, %v4840
    %v4863 = vpack.c.b16 %v4843, %v4842
    %v4864 = vpack.c.b16 %v4845, %v4844
    %v4865 = vpack.c.b16 %v4847, %v4846
    %v4866 = vpack.c.b16 %v4849, %v4848
    %v4867 = vpack.c.b16 %v4851, %v4850
    %4884 = vmatprep.subr.bf16.mxu0 0
    %4885 = vmatpush1.bf16.msra.mxu0 %v4852
    %4886 = vmatprep.subr.bf16.mxu0 0
    %4887 = vmatpush1.bf16.msra.mxu0 %v4853
    %4888 = vmatprep.subr.bf16.mxu0 0
    %4889 = vmatpush1.bf16.msra.mxu0 %v4854
    %4890 = vmatprep.subr.bf16.mxu0 0
    %4891 = vmatpush1.bf16.msra.mxu0 %v4855
    %4892 = vmatprep.subr.bf16.mxu0 0
    %4893 = vmatpush1.bf16.msra.mxu0 %v4856
    %4894 = vmatprep.subr.bf16.mxu0 0
    %4895 = vmatpush1.bf16.msra.mxu0 %v4857
    %4896 = vmatprep.subr.bf16.mxu0 0
    %4897 = vmatpush1.bf16.msra.mxu0 %v4858
    %4898 = vmatprep.subr.bf16.mxu0 0
    %4899 = vmatpush1.bf16.msra.mxu0 %v4859
    %4900 = vmatprep.subr.bf16.mxu0 0
    %4901 = vmatpush1.bf16.msra.mxu0 %v4860
    %4902 = vmatprep.subr.bf16.mxu0 0
    %4903 = vmatpush1.bf16.msra.mxu0 %v4861
    %4904 = vmatprep.subr.bf16.mxu0 0
    %4905 = vmatpush1.bf16.msra.mxu0 %v4862
    %4906 = vmatprep.subr.bf16.mxu0 0
    %4907 = vmatpush1.bf16.msra.mxu0 %v4863
    %4908 = vmatprep.subr.bf16.mxu0 0
    %4909 = vmatpush1.bf16.msra.mxu0 %v4864
    %4910 = vmatprep.subr.bf16.mxu0 0
    %4911 = vmatpush1.bf16.msra.mxu0 %v4865
    %4912 = vmatprep.subr.bf16.mxu0 0
    %4913 = vmatpush1.bf16.msra.mxu0 %v4866
    %4914 = vmatprep.subr.bf16.mxu0 0
    %4915 = vmatpush1.bf16.msra.mxu0 %v4867
    %4916 = vmatprep.mubr.bf16.mxu0 %v4748
    %4917 = vmatmul.mubr.bf16.gmra.mrb[0].mxu0 %v4747
    %v4918 = vpop.f32.mrb[0].mxu0
    %v4919 = vadd.f32 %v4786, %v4918
    %v4920 = vpop.f32.mrb[0].mxu0
    %v4921 = vpop.f32.mrb[0].mxu0
    %v4922 = vpop.f32.mrb[0].mxu0
    %4923 = vdwg.mxu0
    %vm4924 = vcmask 9216
    %4925 = vst.msk [vmem:[#allocation4] sm:$0x3] %vm4924, %v4919
    // Predicated region
    $region34: #{tpu_custom_call.1} parent=1 // pred_check
      _
    $region35: #{tpu_custom_call.1} parent=1 // pred_check_branch
      %4927 = sbr.rel (0) target = $region37
    $region36: #{tpu_custom_call.1} parent=1 // pred_region
      %s4929 = ssub.s32 32, 32
      %4930 = vsyncadd [#allocation5], %s4929
      %s4932 = sshll.u32 [#allocation4], 4
      %s4933 = int_to_ptr.vmem [resolvable:$true] %s4932
      %4935 = dma.vmem_to_hbm [thread:$0]  %s4933, 32, %s8, [#allocation5]
    $region37: #{tpu_custom_call.1} parent=1 // pred_fallthru
      _
    // Predicated region
    $region38: #{tpu_custom_call.1} parent=1 // pred_check
      _
    $region39: #{tpu_custom_call.1} parent=1 // pred_check_branch
      %4937 = sbr.rel (0) target = $region41
    $region40: #{tpu_custom_call.1} parent=1 // pred_region
      %4938 = dma.done [#allocation5], 32
    $region41: #{tpu_custom_call.1} parent=1 // pred_fallthru
      _
    %4939 = vsyncpa [#allocation5], 1

</llo_original>
